<compile_context>
chip_gen: v5e
topology: v5e:2x2
jax: 0.10.0
libtpu: 0.0.40
codegen_flags: <defaults>
</compile_context>

<pallas_src>
import functools

import jax
import jax.numpy as jnp
import numpy as np
from jax import lax
from jax.experimental import pallas as pl
from jax.experimental.pallas import tpu as pltpu


# ---------------------------------------------------------------------------
# Helpers
# ---------------------------------------------------------------------------
def _round_up(x, m):
    return (x + m - 1) // m * m


def _vmem_capacity_bytes():
    """Per-core VMEM capacity; conservative fallback = v7x's 64 MiB / TC."""
    try:
        return int(pltpu.get_tpu_info().vmem_capacity_bytes)
    except Exception:
        return 64 * 1024 * 1024


def _vmem_bytes(t_chunk, b_pad, d_pad, h_pad):
    """Estimate of the kernel's VMEM footprint for a given time chunk."""
    R = t_chunk * b_pad
    G = 4 * h_pad
    by = 0
    by += 2 * 2 * R * d_pad * 2          # 2 x blocks (fwd/bwd chunk), double-buffered, bf16
    by += 2 * 2 * R * h_pad * 4          # 2 out blocks, double-buffered, f32
    by += 2 * 2 * d_pad * G * 2          # W_ih fwd+bwd, double-buffered, bf16
    by += 2 * 2 * h_pad * G * 2          # W_hh fwd+bwd, double-buffered, bf16
    by += 2 * 2 * G * 4                  # biases
    by += 2 * 2 * 2 * b_pad * h_pad * 4  # h_n / c_n output blocks
    by += 2 * R * G * 4                  # gx scratches (f32)
    by += 4 * b_pad * h_pad * 4          # h/c carries (f32)
    return by


def _pick_time_chunk(T, b_pad, d_pad, h_pad, budget, max_chunk=32):
    """Largest time chunk (<= max_chunk, bounded by VMEM budget); T is padded
    up to NC * T_CHUNK, padding is always < T_CHUNK (masked in-kernel).
    max_chunk is also the unroll depth of the recurrence -> capped at 32 to
    bound vreg pressure."""
    max_chunk = max(1, min(max_chunk, T))
    for cand in range(max_chunk, 0, -1):
        nc = -(-T // cand)          # ceil
        tc = -(-T // nc)            # ceil; tc <= cand, (nc-1)*tc < T
        if _vmem_bytes(tc, b_pad, d_pad, h_pad) <= budget:
            return tc, nc
    return 1, T


def _pad_gate_weights(w, H, H_pad, rows_pad):
    """w: (rows, 4H) -> (rows_pad, 4*H_pad); gate k at columns [k*H_pad, k*H_pad+H)."""
    rows = w.shape[0]
    out = jnp.zeros((rows_pad, 4 * H_pad), jnp.float32)
    for k in range(4):
        out = out.at[:rows, k * H_pad:k * H_pad + H].set(w[:, k * H:(k + 1) * H])
    return out


def _pad_gate_bias(b, H, H_pad):
    """b: (1, 4H) -> (1, 4*H_pad); gate k at columns [k*H_pad, k*H_pad+H)."""
    out = jnp.zeros((1, 4 * H_pad), jnp.float32)
    for k in range(4):
        out = out.at[:, k * H_pad:k * H_pad + H].set(b[:, k * H:(k + 1) * H])
    return out


# ---------------------------------------------------------------------------
# Fused bidirectional LSTM kernel.
#   grid = (NC,)  (time chunks, serial).
#   Forward direction consumes x chunk t, backward consumes x chunk NC-1-t;
#   both recurrences advance t_chunk steps per grid step with their chains
#   interleaved.  All in-chunk row offsets are compile-time constants.
# ---------------------------------------------------------------------------
def _bilstm_kernel(xf_ref, xb_ref, wihf_ref, wihb_ref, whhf_ref, whhb_ref,
                   bf_ref, bb_ref,
                   outf_ref, outb_ref, hfin_ref, cfin_ref,
                   gxf_sc, gxb_sc, hf_sc, cf_sc, hb_sc, cb_sc,
                   *, t_chunk, b_pad, h_pad, nc, seq_len):
    t = pl.program_id(0)
    Bp, Hp = b_pad, h_pad

    @pl.when(t == 0)
    def _():
        hf_sc[...] = jnp.zeros_like(hf_sc)
        cf_sc[...] = jnp.zeros_like(cf_sc)
        hb_sc[...] = jnp.zeros_like(hb_sc)
        cb_sc[...] = jnp.zeros_like(cb_sc)

    # Hoisted per-chunk input projections: one MXU-shaped bf16 matmul each,
    # f32 accumulation + bias, into VMEM scratch.
    gxf_sc[...] = jnp.dot(xf_ref[...], wihf_ref[...],
                          preferred_element_type=jnp.float32) + bf_ref[...]
    gxb_sc[...] = jnp.dot(xb_ref[...], wihb_ref[...],
                          preferred_element_type=jnp.float32) + bb_ref[...]

    whh_f = whhf_ref[...]
    whh_b = whhb_ref[...]

    h_f = hf_sc[...]
    c_f = cf_sc[...]
    h_b = hb_sc[...]
    c_b = cb_sc[...]

    # Number of valid (non-padded) time steps in the LAST time chunk.
    tail = seq_len - (nc - 1) * t_chunk   # 1 <= tail <= t_chunk (static)

    def lstm_gates(gates, c):
        # PyTorch gate order [i, f, g, o]; each gate is lane-tile aligned.
        i = jax.nn.sigmoid(gates[:, 0 * Hp:1 * Hp])
        f = jax.nn.sigmoid(gates[:, 1 * Hp:2 * Hp])
        g = jnp.tanh(gates[:, 2 * Hp:3 * Hp])
        o = jax.nn.sigmoid(gates[:, 3 * Hp:4 * Hp])
        c_new = f * c + i * g
        h_new = o * jnp.tanh(c_new)
        return h_new, c_new

    # Statically unrolled recurrence; the two direction chains are independent
    # so the scheduler overlaps their MXU -> EUP -> VPU latencies.
    for s in range(t_chunk):
        row_f = s * Bp                      # static row offset (forward)
        loc_b = t_chunk - 1 - s             # backward walks its chunk in reverse
        row_b = loc_b * Bp                  # static row offset (backward)

        gates_f = gxf_sc[row_f:row_f + Bp, :] + jnp.dot(
            h_f.astype(jnp.bfloat16), whh_f, preferred_element_type=jnp.float32)
        gates_b = gxb_sc[row_b:row_b + Bp, :] + jnp.dot(
            h_b.astype(jnp.bfloat16), whh_b, preferred_element_type=jnp.float32)

        h_f_new, c_f_new = lstm_gates(gates_f, c_f)
        h_b_new, c_b_new = lstm_gates(gates_b, c_b)

        # --- padded-tail masking (only traced for the steps that can be padding) ---
        # Forward: step s of chunk t is padding iff t == nc-1 and s >= tail.
        if s >= tail:
            m = jnp.where(t < nc - 1, 1.0, 0.0)
            h_f = m * h_f_new + (1.0 - m) * h_f
            c_f = m * c_f_new + (1.0 - m) * c_f
        else:
            h_f, c_f = h_f_new, c_f_new
        # Backward: local index loc_b of chunk nc-1-t is padding iff t == 0 and loc_b >= tail.
        if loc_b >= tail:
            m = jnp.where(t > 0, 1.0, 0.0)
            h_b = m * h_b_new + (1.0 - m) * h_b
            c_b = m * c_b_new + (1.0 - m) * c_b
        else:
            h_b, c_b = h_b_new, c_b_new

        outf_ref[row_f:row_f + Bp, :] = h_f   # hidden state at true time index
        outb_ref[row_b:row_b + Bp, :] = h_b

    hf_sc[...] = h_f
    cf_sc[...] = c_f
    hb_sc[...] = h_b
    cb_sc[...] = c_b

    # Only the last grid step writes the final states (fwd rows, then bwd rows).
    @pl.when(t == nc - 1)
    def _():
        hfin_ref[0:Bp, :] = h_f
        hfin_ref[Bp:2 * Bp, :] = h_b
        cfin_ref[0:Bp, :] = c_f
        cfin_ref[Bp:2 * Bp, :] = c_b


# ---------------------------------------------------------------------------
# Encoder forward (matches the PyTorch module semantics).
# ---------------------------------------------------------------------------
def _encoder_forward_impl(x, params):
    """x: (B, T, D) batch-first float32, like the PyTorch module."""
    B, T, D = x.shape
    H = params["w_hh_f"].shape[0]

    B_pad = _round_up(B, 8)          # f32 sublane tile
    D_pad = _round_up(D, 128)        # lane tile
    H_pad = _round_up(H, 128)        # lane tile (per gate)
    G = 4 * H_pad

    # Per-generation VMEM budgeting: derive chunk size and vmem limit from the
    # detected per-core VMEM capacity (v5e/v6e: 128 MiB, v7x: 64 MiB).
    cap = _vmem_capacity_bytes()
    budget = int(0.8 * cap)
    budget = max(32 * 1024 * 1024, min(budget, 100 * 1024 * 1024))
    T_CHUNK, NC = _pick_time_chunk(T, B_pad, D_pad, H_pad, budget)
    T_pad = NC * T_CHUNK
    R = T_CHUNK * B_pad              # rows per chunk in the flattened 2-D view

    # Time-major, zero-padded, flattened to a lane/sublane-aligned 2-D slab; bf16 for the MXU.
    x_tbd = jnp.transpose(x, (1, 0, 2)).astype(jnp.float32)               # (T, B, D)
    x_pad = jnp.zeros((T_pad, B_pad, D_pad), jnp.float32).at[:T, :B, :D].set(x_tbd)
    x2d = x_pad.reshape(T_pad * B_pad, D_pad).astype(jnp.bfloat16)

    # Per-gate column padding (gate k at columns [k*H_pad, k*H_pad+H)); bf16 weights.
    wih_f = _pad_gate_weights(params["w_ih_f"], H, H_pad, D_pad).astype(jnp.bfloat16)
    wih_b = _pad_gate_weights(params["w_ih_b"], H, H_pad, D_pad).astype(jnp.bfloat16)
    whh_f = _pad_gate_weights(params["w_hh_f"], H, H_pad, H_pad).astype(jnp.bfloat16)
    whh_b = _pad_gate_weights(params["w_hh_b"], H, H_pad, H_pad).astype(jnp.bfloat16)
    b_f = _pad_gate_bias(params["b_f"], H, H_pad)                         # f32
    b_b = _pad_gate_bias(params["b_b"], H, H_pad)

    kernel = functools.partial(_bilstm_kernel, t_chunk=T_CHUNK, b_pad=B_pad,
                               h_pad=H_pad, nc=NC, seq_len=T)

    grid_spec = pltpu.PrefetchScalarGridSpec(
        num_scalar_prefetch=0,
        grid=(NC,),
        in_specs=[
            pl.BlockSpec((R, D_pad), lambda t: (t, 0)),              # x chunk (forward)
            pl.BlockSpec((R, D_pad), lambda t: (NC - 1 - t, 0)),     # x chunk (backward)
            pl.BlockSpec((D_pad, G), lambda t: (0, 0)),              # W_ih forward
            pl.BlockSpec((D_pad, G), lambda t: (0, 0)),              # W_ih backward
            pl.BlockSpec((H_pad, G), lambda t: (0, 0)),              # W_hh forward
            pl.BlockSpec((H_pad, G), lambda t: (0, 0)),              # W_hh backward
            pl.BlockSpec((1, G), lambda t: (0, 0)),                  # bias forward
            pl.BlockSpec((1, G), lambda t: (0, 0)),                  # bias backward
        ],
        out_specs=[
            pl.BlockSpec((R, H_pad), lambda t: (t, 0)),              # out forward
            pl.BlockSpec((R, H_pad), lambda t: (NC - 1 - t, 0)),     # out backward
            pl.BlockSpec((2 * B_pad, H_pad), lambda t: (0, 0)),      # h_n (fwd rows, bwd rows)
            pl.BlockSpec((2 * B_pad, H_pad), lambda t: (0, 0)),      # c_n
        ],
        scratch_shapes=[
            pltpu.VMEM((R, G), jnp.float32),          # gx forward (per-chunk input proj)
            pltpu.VMEM((R, G), jnp.float32),          # gx backward
            pltpu.VMEM((B_pad, H_pad), jnp.float32),  # h carry forward
            pltpu.VMEM((B_pad, H_pad), jnp.float32),  # c carry forward
            pltpu.VMEM((B_pad, H_pad), jnp.float32),  # h carry backward
            pltpu.VMEM((B_pad, H_pad), jnp.float32),  # c carry backward
        ],
    )

    out_f2d, out_b2d, hcat, ccat = pl.pallas_call(
        kernel,
        out_shape=(
            jax.ShapeDtypeStruct((T_pad * B_pad, H_pad), jnp.float32),
            jax.ShapeDtypeStruct((T_pad * B_pad, H_pad), jnp.float32),
            jax.ShapeDtypeStruct((2 * B_pad, H_pad), jnp.float32),
            jax.ShapeDtypeStruct((2 * B_pad, H_pad), jnp.float32),
        ),
        grid_spec=grid_spec,
        compiler_params=pltpu.CompilerParams(
            dimension_semantics=("arbitrary",),       # serial recurrence over time chunks
            vmem_limit_bytes=budget),
    )(x2d, x2d, wih_f, wih_b, whh_f, whh_b, b_f, b_b)

    out_f = out_f2d.reshape(T_pad, B_pad, H_pad)[:T, :B, :H]
    out_b = out_b2d.reshape(T_pad, B_pad, H_pad)[:T, :B, :H]
    output = jnp.transpose(jnp.concatenate([out_f, out_b], axis=-1), (1, 0, 2))  # (B,T,2H)
    state_h = jnp.concatenate([hcat[:B, :H], hcat[B_pad:B_pad + B, :H]], axis=-1)  # (B,2H)
    state_c = jnp.concatenate([ccat[:B, :H], ccat[B_pad:B_pad + B, :H]], axis=-1)  # (B,2H)
    return output, (state_h, state_c)


# jit the whole wrapper: weight padding, kernel and output slicing/concat fuse
# into a single XLA program (no per-call dispatch of 8 dynamic_update_slices).
encoder_forward = jax.jit(_encoder_forward_impl)


# ---------------------------------------------------------------------------
# Deterministic parameter init (PyTorch LSTM default: U(-1/sqrt(H), 1/sqrt(H)))
# ---------------------------------------------------------------------------
def init_params(key, input_size, hidden_size):
    k = 1.0 / np.sqrt(hidden_size)
    keys = jax.random.split(key, 8)

    def u(kk, shape):
        return jax.random.uniform(kk, shape, jnp.float32, minval=-k, maxval=k)

    # PyTorch stores W_ih as (4H, D), W_hh as (4H, H); we keep transposed copies.
    w_ih_f = u(keys[0], (4 * hidden_size, input_size)).T       # (D, 4H)
    w_hh_f = u(keys[1], (4 * hidden_size, hidden_size)).T      # (H, 4H)
    b_f = (u(keys[2], (4 * hidden_size,)) + u(keys[3], (4 * hidden_size,)))
    w_ih_b = u(keys[4], (4 * hidden_size, input_size)).T
    w_hh_b = u(keys[5], (4 * hidden_size, hidden_size)).T
    b_b = (u(keys[6], (4 * hidden_size,)) + u(keys[7], (4 * hidden_size,)))

    return dict(
        w_ih_f=w_ih_f, w_hh_f=w_hh_f, b_f=b_f.reshape(1, -1),
        w_ih_b=w_ih_b, w_hh_b=w_hh_b, b_b=b_b.reshape(1, -1),
    )


# ---------------------------------------------------------------------------
# Pure-JAX f32 reference (lax.scan) for a correctness check.
# ---------------------------------------------------------------------------
def _ref_lstm_dir(x_tbd, w_ih, w_hh, b):
    T, B, D = x_tbd.shape
    H = w_hh.shape[0]

    def step(carry, x_t):
        h, c = carry
        gates = x_t @ w_ih + h @ w_hh + b
        i = jax.nn.sigmoid(gates[:, 0 * H:1 * H])
        f = jax.nn.sigmoid(gates[:, 1 * H:2 * H])
        g = jnp.tanh(gates[:, 2 * H:3 * H])
        o = jax.nn.sigmoid(gates[:, 3 * H:4 * H])
        c = f * c + i * g
        h = o * jnp.tanh(c)
        return (h, c), h

    (h, c), outs = lax.scan(
        step, (jnp.zeros((B, H), jnp.float32), jnp.zeros((B, H), jnp.float32)),
        x_tbd)
    return outs, h, c


def _ref_encoder(x, params):
    x_tbd = jnp.transpose(x, (1, 0, 2))
    of, hf, cf = _ref_lstm_dir(x_tbd, params["w_ih_f"], params["w_hh_f"], params["b_f"])
    ob, hb, cb = _ref_lstm_dir(x_tbd[::-1], params["w_ih_b"], params["w_hh_b"], params["b_b"])
    ob = ob[::-1]
    output = jnp.transpose(jnp.concatenate([of, ob], -1), (1, 0, 2))
    return output, (jnp.concatenate([hf, hb], -1), jnp.concatenate([cf, cb], -1))


if __name__ == "__main__":
    B, T, D, H = 2, 8, 16, 32   # batch, seq, input_size, hidden_size

    key = jax.random.PRNGKey(0)
    k_x, k_p = jax.random.split(key)
    x = jax.random.normal(k_x, (B, T, D), jnp.float32)
    params = init_params(k_p, D, H)

    output, (state_h, state_c) = encoder_forward(x, params)
    jax.block_until_ready((output, state_h, state_c))

    assert output.shape == (B, T, 2 * H)
    assert state_h.shape == (B, 2 * H)
    assert state_c.shape == (B, 2 * H)

    # correctness check against the pure-JAX f32 reference
    # (tolerance loosened for the bf16 MXU inputs; accumulation stays f32)
    ref_out, (ref_h, ref_c) = _ref_encoder(x, params)
    np.testing.assert_allclose(np.asarray(output), np.asarray(ref_out),
                               rtol=2e-2, atol=2e-2)
    np.testing.assert_allclose(np.asarray(state_h), np.asarray(ref_h),
                               rtol=2e-2, atol=2e-2)
    np.testing.assert_allclose(np.asarray(state_c), np.asarray(ref_c),
                               rtol=2e-2, atol=2e-2)

    print("KERNEL_OK")
</pallas_src>

<mosaic_0001>
module attributes {stable_mosaic.version = 11 : i64} {
  func.func @_bilstm_kernel(%arg0: i32, %arg1: memref<64x128xbf16, #tpu.memory_space<vmem>>, %arg2: memref<64x128xbf16, #tpu.memory_space<vmem>>, %arg3: memref<128x512xbf16, #tpu.memory_space<vmem>>, %arg4: memref<128x512xbf16, #tpu.memory_space<vmem>>, %arg5: memref<128x512xbf16, #tpu.memory_space<vmem>>, %arg6: memref<128x512xbf16, #tpu.memory_space<vmem>>, %arg7: memref<1x512xf32, #tpu.memory_space<vmem>>, %arg8: memref<1x512xf32, #tpu.memory_space<vmem>>, %arg9: memref<64x128xf32, #tpu.memory_space<vmem>>, %arg10: memref<64x128xf32, #tpu.memory_space<vmem>>, %arg11: memref<16x128xf32, #tpu.memory_space<vmem>>, %arg12: memref<16x128xf32, #tpu.memory_space<vmem>>, %arg13: memref<64x512xf32, #tpu.memory_space<vmem>>, %arg14: memref<64x512xf32, #tpu.memory_space<vmem>>, %arg15: memref<8x128xf32, #tpu.memory_space<vmem>>, %arg16: memref<8x128xf32, #tpu.memory_space<vmem>>, %arg17: memref<8x128xf32, #tpu.memory_space<vmem>>, %arg18: memref<8x128xf32, #tpu.memory_space<vmem>>) attributes {dimension_semantics = [#tpu.dimension_semantics<arbitrary>], iteration_bounds = array<i64: 1>, scalar_prefetch = 0 : i64, scratch_operands = 6 : i64, tpu.core_type = #tpu.core_type<tc>, window_params = [{transform_indices = @transform_0, window_bounds = array<i64: 64, 128>}, {transform_indices = @transform_1, window_bounds = array<i64: 64, 128>}, {pipeline_mode = #tpu.pipeline_mode<synchronous>, transform_indices = @transform_2, window_bounds = array<i64: 128, 512>}, {pipeline_mode = #tpu.pipeline_mode<synchronous>, transform_indices = @transform_3, window_bounds = array<i64: 128, 512>}, {pipeline_mode = #tpu.pipeline_mode<synchronous>, transform_indices = @transform_4, window_bounds = array<i64: 128, 512>}, {pipeline_mode = #tpu.pipeline_mode<synchronous>, transform_indices = @transform_5, window_bounds = array<i64: 128, 512>}, {pipeline_mode = #tpu.pipeline_mode<synchronous>, transform_indices = @transform_6, window_bounds = array<i64: 1, 512>}, {pipeline_mode = #tpu.pipeline_mode<synchronous>, transform_indices = @transform_7, window_bounds = array<i64: 1, 512>}, {transform_indices = @transform_8, window_bounds = array<i64: 64, 128>}, {transform_indices = @transform_9, window_bounds = array<i64: 64, 128>}, {pipeline_mode = #tpu.pipeline_mode<synchronous>, transform_indices = @transform_10, window_bounds = array<i64: 16, 128>}, {pipeline_mode = #tpu.pipeline_mode<synchronous>, transform_indices = @transform_11, window_bounds = array<i64: 16, 128>}]} {
    %c0_i32 = arith.constant 0 : i32
    %0 = arith.cmpi eq, %arg0, %c0_i32 : i32
    %1 = arith.extui %0 : i1 to i32
    %c0_i32_0 = arith.constant 0 : i32
    %2 = arith.cmpi ne, %1, %c0_i32_0 : i32
    scf.if %2 {
      %cst_160 = arith.constant 0.000000e+00 : f32
      %510 = vector.broadcast %cst_160 : f32 to vector<8x128xf32>
      %c0_161 = arith.constant 0 : index
      %c0_162 = arith.constant 0 : index
      %511 = vector.load %arg15[%c0_161, %c0_162] : memref<8x128xf32, #tpu.memory_space<vmem>>, vector<8x128xf32>
      tpu.vector_store %arg15[%c0_161, %c0_162], %510 {strides = array<i32>} : memref<8x128xf32, #tpu.memory_space<vmem>>, vector<8x128xf32>,
      %cst_163 = arith.constant 0.000000e+00 : f32
      %512 = vector.broadcast %cst_163 : f32 to vector<8x128xf32>
      %c0_164 = arith.constant 0 : index
      %c0_165 = arith.constant 0 : index
      %513 = vector.load %arg16[%c0_164, %c0_165] : memref<8x128xf32, #tpu.memory_space<vmem>>, vector<8x128xf32>
      tpu.vector_store %arg16[%c0_164, %c0_165], %512 {strides = array<i32>} : memref<8x128xf32, #tpu.memory_space<vmem>>, vector<8x128xf32>,
      %cst_166 = arith.constant 0.000000e+00 : f32
      %514 = vector.broadcast %cst_166 : f32 to vector<8x128xf32>
      %c0_167 = arith.constant 0 : index
      %c0_168 = arith.constant 0 : index
      %515 = vector.load %arg17[%c0_167, %c0_168] : memref<8x128xf32, #tpu.memory_space<vmem>>, vector<8x128xf32>
      tpu.vector_store %arg17[%c0_167, %c0_168], %514 {strides = array<i32>} : memref<8x128xf32, #tpu.memory_space<vmem>>, vector<8x128xf32>,
      %cst_169 = arith.constant 0.000000e+00 : f32
      %516 = vector.broadcast %cst_169 : f32 to vector<8x128xf32>
      %c0_170 = arith.constant 0 : index
      %c0_171 = arith.constant 0 : index
      %517 = vector.load %arg18[%c0_170, %c0_171] : memref<8x128xf32, #tpu.memory_space<vmem>>, vector<8x128xf32>
      tpu.vector_store %arg18[%c0_170, %c0_171], %516 {strides = array<i32>} : memref<8x128xf32, #tpu.memory_space<vmem>>, vector<8x128xf32>,
    } else {
    }
    %c0 = arith.constant 0 : index
    %c0_1 = arith.constant 0 : index
    %3 = vector.load %arg1[%c0, %c0_1] : memref<64x128xbf16, #tpu.memory_space<vmem>>, vector<64x128xbf16>
    %c0_2 = arith.constant 0 : index
    %c0_3 = arith.constant 0 : index
    %4 = vector.load %arg3[%c0_2, %c0_3] : memref<128x512xbf16, #tpu.memory_space<vmem>>, vector<128x512xbf16>
    %cst = arith.constant dense<0.000000e+00> : vector<64x512xf32>
    %5 = tpu.matmul %3, %4, %cst {dimension_numbers = #tpu.dot_dimension_numbers<[1], [0], [0], [1], [0, 0, 1, 1], [], []>} : vector<64x128xbf16>, vector<128x512xbf16>, vector<64x512xf32> -> vector<64x512xf32>
    %c0_4 = arith.constant 0 : index
    %c0_5 = arith.constant 0 : index
    %6 = vector.load %arg7[%c0_4, %c0_5] : memref<1x512xf32, #tpu.memory_space<vmem>>, vector<1x512xf32>
    %7 = vector.broadcast %6 : vector<1x512xf32> to vector<64x512xf32>
    %8 = arith.addf %5, %7 : vector<64x512xf32>
    %c0_6 = arith.constant 0 : index
    %c0_7 = arith.constant 0 : index
    %9 = vector.load %arg13[%c0_6, %c0_7] : memref<64x512xf32, #tpu.memory_space<vmem>>, vector<64x512xf32>
    tpu.vector_store %arg13[%c0_6, %c0_7], %8 {strides = array<i32>} : memref<64x512xf32, #tpu.memory_space<vmem>>, vector<64x512xf32>,
    %c0_8 = arith.constant 0 : index
    %c0_9 = arith.constant 0 : index
    %10 = vector.load %arg2[%c0_8, %c0_9] : memref<64x128xbf16, #tpu.memory_space<vmem>>, vector<64x128xbf16>
    %c0_10 = arith.constant 0 : index
    %c0_11 = arith.constant 0 : index
    %11 = vector.load %arg4[%c0_10, %c0_11] : memref<128x512xbf16, #tpu.memory_space<vmem>>, vector<128x512xbf16>
    %cst_12 = arith.constant dense<0.000000e+00> : vector<64x512xf32>
    %12 = tpu.matmul %10, %11, %cst_12 {dimension_numbers = #tpu.dot_dimension_numbers<[1], [0], [0], [1], [0, 0, 1, 1], [], []>} : vector<64x128xbf16>, vector<128x512xbf16>, vector<64x512xf32> -> vector<64x512xf32>
    %c0_13 = arith.constant 0 : index
    %c0_14 = arith.constant 0 : index
    %13 = vector.load %arg8[%c0_13, %c0_14] : memref<1x512xf32, #tpu.memory_space<vmem>>, vector<1x512xf32>
    %14 = vector.broadcast %13 : vector<1x512xf32> to vector<64x512xf32>
    %15 = arith.addf %12, %14 : vector<64x512xf32>
    %c0_15 = arith.constant 0 : index
    %c0_16 = arith.constant 0 : index
    %16 = vector.load %arg14[%c0_15, %c0_16] : memref<64x512xf32, #tpu.memory_space<vmem>>, vector<64x512xf32>
    tpu.vector_store %arg14[%c0_15, %c0_16], %15 {strides = array<i32>} : memref<64x512xf32, #tpu.memory_space<vmem>>, vector<64x512xf32>,
    %c0_17 = arith.constant 0 : index
    %c0_18 = arith.constant 0 : index
    %17 = vector.load %arg5[%c0_17, %c0_18] : memref<128x512xbf16, #tpu.memory_space<vmem>>, vector<128x512xbf16>
    %c0_19 = arith.constant 0 : index
    %c0_20 = arith.constant 0 : index
    %18 = vector.load %arg6[%c0_19, %c0_20] : memref<128x512xbf16, #tpu.memory_space<vmem>>, vector<128x512xbf16>
    %c0_21 = arith.constant 0 : index
    %c0_22 = arith.constant 0 : index
    %19 = vector.load %arg15[%c0_21, %c0_22] : memref<8x128xf32, #tpu.memory_space<vmem>>, vector<8x128xf32>
    %c0_23 = arith.constant 0 : index
    %c0_24 = arith.constant 0 : index
    %20 = vector.load %arg16[%c0_23, %c0_24] : memref<8x128xf32, #tpu.memory_space<vmem>>, vector<8x128xf32>
    %c0_25 = arith.constant 0 : index
    %c0_26 = arith.constant 0 : index
    %21 = vector.load %arg17[%c0_25, %c0_26] : memref<8x128xf32, #tpu.memory_space<vmem>>, vector<8x128xf32>
    %c0_27 = arith.constant 0 : index
    %c0_28 = arith.constant 0 : index
    %22 = vector.load %arg18[%c0_27, %c0_28] : memref<8x128xf32, #tpu.memory_space<vmem>>, vector<8x128xf32>
    %c0_29 = arith.constant 0 : index
    %c0_30 = arith.constant 0 : index
    %23 = vector.load %arg13[%c0_29, %c0_30] : memref<64x512xf32, #tpu.memory_space<vmem>>, vector<8x512xf32>
    %24 = arith.truncf %19 : vector<8x128xf32> to vector<8x128xbf16>
    %cst_31 = arith.constant dense<0.000000e+00> : vector<8x512xf32>
    %25 = tpu.matmul %24, %17, %cst_31 {dimension_numbers = #tpu.dot_dimension_numbers<[1], [0], [0], [1], [0, 0, 1, 1], [], []>} : vector<8x128xbf16>, vector<128x512xbf16>, vector<8x512xf32> -> vector<8x512xf32>
    %26 = arith.addf %23, %25 : vector<8x512xf32>
    %c56 = arith.constant 56 : index
    %c0_32 = arith.constant 0 : index
    %27 = vector.load %arg14[%c56, %c0_32] : memref<64x512xf32, #tpu.memory_space<vmem>>, vector<8x512xf32>
    %28 = arith.truncf %21 : vector<8x128xf32> to vector<8x128xbf16>
    %cst_33 = arith.constant dense<0.000000e+00> : vector<8x512xf32>
    %29 = tpu.matmul %28, %18, %cst_33 {dimension_numbers = #tpu.dot_dimension_numbers<[1], [0], [0], [1], [0, 0, 1, 1], [], []>} : vector<8x128xbf16>, vector<128x512xbf16>, vector<8x512xf32> -> vector<8x512xf32>
    %30 = arith.addf %27, %29 : vector<8x512xf32>
    %31 = vector.extract_strided_slice %26 {offsets = [0, 0], sizes = [8, 128], strides = [1, 1]} : vector<8x512xf32> to vector<8x128xf32>
    %32 = arith.negf %31 : vector<8x128xf32>
    %33 = math.exp %32 : vector<8x128xf32>
    %cst_34 = arith.constant 1.000000e+00 : f32
    %34 = vector.broadcast %cst_34 : f32 to vector<8x128xf32>
    %35 = arith.addf %34, %33 : vector<8x128xf32>
    %36 = arith.divf %34, %35 : vector<8x128xf32>
    %37 = vector.extract_strided_slice %26 {offsets = [0, 128], sizes = [8, 128], strides = [1, 1]} : vector<8x512xf32> to vector<8x128xf32>
    %38 = arith.negf %37 : vector<8x128xf32>
    %39 = math.exp %38 : vector<8x128xf32>
    %cst_35 = arith.constant 1.000000e+00 : f32
    %40 = vector.broadcast %cst_35 : f32 to vector<8x128xf32>
    %41 = arith.addf %40, %39 : vector<8x128xf32>
    %42 = arith.divf %40, %41 : vector<8x128xf32>
    %43 = vector.extract_strided_slice %26 {offsets = [0, 256], sizes = [8, 128], strides = [1, 1]} : vector<8x512xf32> to vector<8x128xf32>
    %44 = math.tanh %43 : vector<8x128xf32>
    %45 = vector.extract_strided_slice %26 {offsets = [0, 384], sizes = [8, 128], strides = [1, 1]} : vector<8x512xf32> to vector<8x128xf32>
    %46 = arith.negf %45 : vector<8x128xf32>
    %47 = math.exp %46 : vector<8x128xf32>
    %cst_36 = arith.constant 1.000000e+00 : f32
    %48 = vector.broadcast %cst_36 : f32 to vector<8x128xf32>
    %49 = arith.addf %48, %47 : vector<8x128xf32>
    %50 = arith.divf %48, %49 : vector<8x128xf32>
    %51 = arith.mulf %42, %20 : vector<8x128xf32>
    %52 = arith.mulf %36, %44 : vector<8x128xf32>
    %53 = arith.addf %51, %52 : vector<8x128xf32>
    %54 = math.tanh %53 : vector<8x128xf32>
    %55 = arith.mulf %50, %54 : vector<8x128xf32>
    %56 = vector.extract_strided_slice %30 {offsets = [0, 0], sizes = [8, 128], strides = [1, 1]} : vector<8x512xf32> to vector<8x128xf32>
    %57 = arith.negf %56 : vector<8x128xf32>
    %58 = math.exp %57 : vector<8x128xf32>
    %cst_37 = arith.constant 1.000000e+00 : f32
    %59 = vector.broadcast %cst_37 : f32 to vector<8x128xf32>
    %60 = arith.addf %59, %58 : vector<8x128xf32>
    %61 = arith.divf %59, %60 : vector<8x128xf32>
    %62 = vector.extract_strided_slice %30 {offsets = [0, 128], sizes = [8, 128], strides = [1, 1]} : vector<8x512xf32> to vector<8x128xf32>
    %63 = arith.negf %62 : vector<8x128xf32>
    %64 = math.exp %63 : vector<8x128xf32>
    %cst_38 = arith.constant 1.000000e+00 : f32
    %65 = vector.broadcast %cst_38 : f32 to vector<8x128xf32>
    %66 = arith.addf %65, %64 : vector<8x128xf32>
    %67 = arith.divf %65, %66 : vector<8x128xf32>
    %68 = vector.extract_strided_slice %30 {offsets = [0, 256], sizes = [8, 128], strides = [1, 1]} : vector<8x512xf32> to vector<8x128xf32>
    %69 = math.tanh %68 : vector<8x128xf32>
    %70 = vector.extract_strided_slice %30 {offsets = [0, 384], sizes = [8, 128], strides = [1, 1]} : vector<8x512xf32> to vector<8x128xf32>
    %71 = arith.negf %70 : vector<8x128xf32>
    %72 = math.exp %71 : vector<8x128xf32>
    %cst_39 = arith.constant 1.000000e+00 : f32
    %73 = vector.broadcast %cst_39 : f32 to vector<8x128xf32>
    %74 = arith.addf %73, %72 : vector<8x128xf32>
    %75 = arith.divf %73, %74 : vector<8x128xf32>
    %76 = arith.mulf %67, %22 : vector<8x128xf32>
    %77 = arith.mulf %61, %69 : vector<8x128xf32>
    %78 = arith.addf %76, %77 : vector<8x128xf32>
    %79 = math.tanh %78 : vector<8x128xf32>
    %80 = arith.mulf %75, %79 : vector<8x128xf32>
    %c0_40 = arith.constant 0 : index
    %c0_41 = arith.constant 0 : index
    %81 = vector.load %arg9[%c0_40, %c0_41] : memref<64x128xf32, #tpu.memory_space<vmem>>, vector<8x128xf32>
    tpu.vector_store %arg9[%c0_40, %c0_41], %55 {strides = array<i32>} : memref<64x128xf32, #tpu.memory_space<vmem>>, vector<8x128xf32>,
    %c56_42 = arith.constant 56 : index
    %c0_43 = arith.constant 0 : index
    %82 = vector.load %arg10[%c56_42, %c0_43] : memref<64x128xf32, #tpu.memory_space<vmem>>, vector<8x128xf32>
    tpu.vector_store %arg10[%c56_42, %c0_43], %80 {strides = array<i32>} : memref<64x128xf32, #tpu.memory_space<vmem>>, vector<8x128xf32>,
    %c8 = arith.constant 8 : index
    %c0_44 = arith.constant 0 : index
    %83 = vector.load %arg13[%c8, %c0_44] : memref<64x512xf32, #tpu.memory_space<vmem>>, vector<8x512xf32>
    %84 = arith.truncf %55 : vector<8x128xf32> to vector<8x128xbf16>
    %cst_45 = arith.constant dense<0.000000e+00> : vector<8x512xf32>
    %85 = tpu.matmul %84, %17, %cst_45 {dimension_numbers = #tpu.dot_dimension_numbers<[1], [0], [0], [1], [0, 0, 1, 1], [], []>} : vector<8x128xbf16>, vector<128x512xbf16>, vector<8x512xf32> -> vector<8x512xf32>
    %86 = arith.addf %83, %85 : vector<8x512xf32>
    %c48 = arith.constant 48 : index
    %c0_46 = arith.constant 0 : index
    %87 = vector.load %arg14[%c48, %c0_46] : memref<64x512xf32, #tpu.memory_space<vmem>>, vector<8x512xf32>
    %88 = arith.truncf %80 : vector<8x128xf32> to vector<8x128xbf16>
    %cst_47 = arith.constant dense<0.000000e+00> : vector<8x512xf32>
    %89 = tpu.matmul %88, %18, %cst_47 {dimension_numbers = #tpu.dot_dimension_numbers<[1], [0], [0], [1], [0, 0, 1, 1], [], []>} : vector<8x128xbf16>, vector<128x512xbf16>, vector<8x512xf32> -> vector<8x512xf32>
    %90 = arith.addf %87, %89 : vector<8x512xf32>
    %91 = vector.extract_strided_slice %86 {offsets = [0, 0], sizes = [8, 128], strides = [1, 1]} : vector<8x512xf32> to vector<8x128xf32>
    %92 = arith.negf %91 : vector<8x128xf32>
    %93 = math.exp %92 : vector<8x128xf32>
    %cst_48 = arith.constant 1.000000e+00 : f32
    %94 = vector.broadcast %cst_48 : f32 to vector<8x128xf32>
    %95 = arith.addf %94, %93 : vector<8x128xf32>
    %96 = arith.divf %94, %95 : vector<8x128xf32>
    %97 = vector.extract_strided_slice %86 {offsets = [0, 128], sizes = [8, 128], strides = [1, 1]} : vector<8x512xf32> to vector<8x128xf32>
    %98 = arith.negf %97 : vector<8x128xf32>
    %99 = math.exp %98 : vector<8x128xf32>
    %cst_49 = arith.constant 1.000000e+00 : f32
    %100 = vector.broadcast %cst_49 : f32 to vector<8x128xf32>
    %101 = arith.addf %100, %99 : vector<8x128xf32>
    %102 = arith.divf %100, %101 : vector<8x128xf32>
    %103 = vector.extract_strided_slice %86 {offsets = [0, 256], sizes = [8, 128], strides = [1, 1]} : vector<8x512xf32> to vector<8x128xf32>
    %104 = math.tanh %103 : vector<8x128xf32>
    %105 = vector.extract_strided_slice %86 {offsets = [0, 384], sizes = [8, 128], strides = [1, 1]} : vector<8x512xf32> to vector<8x128xf32>
    %106 = arith.negf %105 : vector<8x128xf32>
    %107 = math.exp %106 : vector<8x128xf32>
    %cst_50 = arith.constant 1.000000e+00 : f32
    %108 = vector.broadcast %cst_50 : f32 to vector<8x128xf32>
    %109 = arith.addf %108, %107 : vector<8x128xf32>
    %110 = arith.divf %108, %109 : vector<8x128xf32>
    %111 = arith.mulf %102, %53 : vector<8x128xf32>
    %112 = arith.mulf %96, %104 : vector<8x128xf32>
    %113 = arith.addf %111, %112 : vector<8x128xf32>
    %114 = math.tanh %113 : vector<8x128xf32>
    %115 = arith.mulf %110, %114 : vector<8x128xf32>
    %116 = vector.extract_strided_slice %90 {offsets = [0, 0], sizes = [8, 128], strides = [1, 1]} : vector<8x512xf32> to vector<8x128xf32>
    %117 = arith.negf %116 : vector<8x128xf32>
    %118 = math.exp %117 : vector<8x128xf32>
    %cst_51 = arith.constant 1.000000e+00 : f32
    %119 = vector.broadcast %cst_51 : f32 to vector<8x128xf32>
    %120 = arith.addf %119, %118 : vector<8x128xf32>
    %121 = arith.divf %119, %120 : vector<8x128xf32>
    %122 = vector.extract_strided_slice %90 {offsets = [0, 128], sizes = [8, 128], strides = [1, 1]} : vector<8x512xf32> to vector<8x128xf32>
    %123 = arith.negf %122 : vector<8x128xf32>
    %124 = math.exp %123 : vector<8x128xf32>
    %cst_52 = arith.constant 1.000000e+00 : f32
    %125 = vector.broadcast %cst_52 : f32 to vector<8x128xf32>
    %126 = arith.addf %125, %124 : vector<8x128xf32>
    %127 = arith.divf %125, %126 : vector<8x128xf32>
    %128 = vector.extract_strided_slice %90 {offsets = [0, 256], sizes = [8, 128], strides = [1, 1]} : vector<8x512xf32> to vector<8x128xf32>
    %129 = math.tanh %128 : vector<8x128xf32>
    %130 = vector.extract_strided_slice %90 {offsets = [0, 384], sizes = [8, 128], strides = [1, 1]} : vector<8x512xf32> to vector<8x128xf32>
    %131 = arith.negf %130 : vector<8x128xf32>
    %132 = math.exp %131 : vector<8x128xf32>
    %cst_53 = arith.constant 1.000000e+00 : f32
    %133 = vector.broadcast %cst_53 : f32 to vector<8x128xf32>
    %134 = arith.addf %133, %132 : vector<8x128xf32>
    %135 = arith.divf %133, %134 : vector<8x128xf32>
    %136 = arith.mulf %127, %78 : vector<8x128xf32>
    %137 = arith.mulf %121, %129 : vector<8x128xf32>
    %138 = arith.addf %136, %137 : vector<8x128xf32>
    %139 = math.tanh %138 : vector<8x128xf32>
    %140 = arith.mulf %135, %139 : vector<8x128xf32>
    %c8_54 = arith.constant 8 : index
    %c0_55 = arith.constant 0 : index
    %141 = vector.load %arg9[%c8_54, %c0_55] : memref<64x128xf32, #tpu.memory_space<vmem>>, vector<8x128xf32>
    tpu.vector_store %arg9[%c8_54, %c0_55], %115 {strides = array<i32>} : memref<64x128xf32, #tpu.memory_space<vmem>>, vector<8x128xf32>,
    %c48_56 = arith.constant 48 : index
    %c0_57 = arith.constant 0 : index
    %142 = vector.load %arg10[%c48_56, %c0_57] : memref<64x128xf32, #tpu.memory_space<vmem>>, vector<8x128xf32>
    tpu.vector_store %arg10[%c48_56, %c0_57], %140 {strides = array<i32>} : memref<64x128xf32, #tpu.memory_space<vmem>>, vector<8x128xf32>,
    %c16 = arith.constant 16 : index
    %c0_58 = arith.constant 0 : index
    %143 = vector.load %arg13[%c16, %c0_58] : memref<64x512xf32, #tpu.memory_space<vmem>>, vector<8x512xf32>
    %144 = arith.truncf %115 : vector<8x128xf32> to vector<8x128xbf16>
    %cst_59 = arith.constant dense<0.000000e+00> : vector<8x512xf32>
    %145 = tpu.matmul %144, %17, %cst_59 {dimension_numbers = #tpu.dot_dimension_numbers<[1], [0], [0], [1], [0, 0, 1, 1], [], []>} : vector<8x128xbf16>, vector<128x512xbf16>, vector<8x512xf32> -> vector<8x512xf32>
    %146 = arith.addf %143, %145 : vector<8x512xf32>
    %c40 = arith.constant 40 : index
    %c0_60 = arith.constant 0 : index
    %147 = vector.load %arg14[%c40, %c0_60] : memref<64x512xf32, #tpu.memory_space<vmem>>, vector<8x512xf32>
    %148 = arith.truncf %140 : vector<8x128xf32> to vector<8x128xbf16>
    %cst_61 = arith.constant dense<0.000000e+00> : vector<8x512xf32>
    %149 = tpu.matmul %148, %18, %cst_61 {dimension_numbers = #tpu.dot_dimension_numbers<[1], [0], [0], [1], [0, 0, 1, 1], [], []>} : vector<8x128xbf16>, vector<128x512xbf16>, vector<8x512xf32> -> vector<8x512xf32>
    %150 = arith.addf %147, %149 : vector<8x512xf32>
    %151 = vector.extract_strided_slice %146 {offsets = [0, 0], sizes = [8, 128], strides = [1, 1]} : vector<8x512xf32> to vector<8x128xf32>
    %152 = arith.negf %151 : vector<8x128xf32>
    %153 = math.exp %152 : vector<8x128xf32>
    %cst_62 = arith.constant 1.000000e+00 : f32
    %154 = vector.broadcast %cst_62 : f32 to vector<8x128xf32>
    %155 = arith.addf %154, %153 : vector<8x128xf32>
    %156 = arith.divf %154, %155 : vector<8x128xf32>
    %157 = vector.extract_strided_slice %146 {offsets = [0, 128], sizes = [8, 128], strides = [1, 1]} : vector<8x512xf32> to vector<8x128xf32>
    %158 = arith.negf %157 : vector<8x128xf32>
    %159 = math.exp %158 : vector<8x128xf32>
    %cst_63 = arith.constant 1.000000e+00 : f32
    %160 = vector.broadcast %cst_63 : f32 to vector<8x128xf32>
    %161 = arith.addf %160, %159 : vector<8x128xf32>
    %162 = arith.divf %160, %161 : vector<8x128xf32>
    %163 = vector.extract_strided_slice %146 {offsets = [0, 256], sizes = [8, 128], strides = [1, 1]} : vector<8x512xf32> to vector<8x128xf32>
    %164 = math.tanh %163 : vector<8x128xf32>
    %165 = vector.extract_strided_slice %146 {offsets = [0, 384], sizes = [8, 128], strides = [1, 1]} : vector<8x512xf32> to vector<8x128xf32>
    %166 = arith.negf %165 : vector<8x128xf32>
    %167 = math.exp %166 : vector<8x128xf32>
    %cst_64 = arith.constant 1.000000e+00 : f32
    %168 = vector.broadcast %cst_64 : f32 to vector<8x128xf32>
    %169 = arith.addf %168, %167 : vector<8x128xf32>
    %170 = arith.divf %168, %169 : vector<8x128xf32>
    %171 = arith.mulf %162, %113 : vector<8x128xf32>
    %172 = arith.mulf %156, %164 : vector<8x128xf32>
    %173 = arith.addf %171, %172 : vector<8x128xf32>
    %174 = math.tanh %173 : vector<8x128xf32>
    %175 = arith.mulf %170, %174 : vector<8x128xf32>
    %176 = vector.extract_strided_slice %150 {offsets = [0, 0], sizes = [8, 128], strides = [1, 1]} : vector<8x512xf32> to vector<8x128xf32>
    %177 = arith.negf %176 : vector<8x128xf32>
    %178 = math.exp %177 : vector<8x128xf32>
    %cst_65 = arith.constant 1.000000e+00 : f32
    %179 = vector.broadcast %cst_65 : f32 to vector<8x128xf32>
    %180 = arith.addf %179, %178 : vector<8x128xf32>
    %181 = arith.divf %179, %180 : vector<8x128xf32>
    %182 = vector.extract_strided_slice %150 {offsets = [0, 128], sizes = [8, 128], strides = [1, 1]} : vector<8x512xf32> to vector<8x128xf32>
    %183 = arith.negf %182 : vector<8x128xf32>
    %184 = math.exp %183 : vector<8x128xf32>
    %cst_66 = arith.constant 1.000000e+00 : f32
    %185 = vector.broadcast %cst_66 : f32 to vector<8x128xf32>
    %186 = arith.addf %185, %184 : vector<8x128xf32>
    %187 = arith.divf %185, %186 : vector<8x128xf32>
    %188 = vector.extract_strided_slice %150 {offsets = [0, 256], sizes = [8, 128], strides = [1, 1]} : vector<8x512xf32> to vector<8x128xf32>
    %189 = math.tanh %188 : vector<8x128xf32>
    %190 = vector.extract_strided_slice %150 {offsets = [0, 384], sizes = [8, 128], strides = [1, 1]} : vector<8x512xf32> to vector<8x128xf32>
    %191 = arith.negf %190 : vector<8x128xf32>
    %192 = math.exp %191 : vector<8x128xf32>
    %cst_67 = arith.constant 1.000000e+00 : f32
    %193 = vector.broadcast %cst_67 : f32 to vector<8x128xf32>
    %194 = arith.addf %193, %192 : vector<8x128xf32>
    %195 = arith.divf %193, %194 : vector<8x128xf32>
    %196 = arith.mulf %187, %138 : vector<8x128xf32>
    %197 = arith.mulf %181, %189 : vector<8x128xf32>
    %198 = arith.addf %196, %197 : vector<8x128xf32>
    %199 = math.tanh %198 : vector<8x128xf32>
    %200 = arith.mulf %195, %199 : vector<8x128xf32>
    %c16_68 = arith.constant 16 : index
    %c0_69 = arith.constant 0 : index
    %201 = vector.load %arg9[%c16_68, %c0_69] : memref<64x128xf32, #tpu.memory_space<vmem>>, vector<8x128xf32>
    tpu.vector_store %arg9[%c16_68, %c0_69], %175 {strides = array<i32>} : memref<64x128xf32, #tpu.memory_space<vmem>>, vector<8x128xf32>,
    %c40_70 = arith.constant 40 : index
    %c0_71 = arith.constant 0 : index
    %202 = vector.load %arg10[%c40_70, %c0_71] : memref<64x128xf32, #tpu.memory_space<vmem>>, vector<8x128xf32>
    tpu.vector_store %arg10[%c40_70, %c0_71], %200 {strides = array<i32>} : memref<64x128xf32, #tpu.memory_space<vmem>>, vector<8x128xf32>,
    %c24 = arith.constant 24 : index
    %c0_72 = arith.constant 0 : index
    %203 = vector.load %arg13[%c24, %c0_72] : memref<64x512xf32, #tpu.memory_space<vmem>>, vector<8x512xf32>
    %204 = arith.truncf %175 : vector<8x128xf32> to vector<8x128xbf16>
    %cst_73 = arith.constant dense<0.000000e+00> : vector<8x512xf32>
    %205 = tpu.matmul %204, %17, %cst_73 {dimension_numbers = #tpu.dot_dimension_numbers<[1], [0], [0], [1], [0, 0, 1, 1], [], []>} : vector<8x128xbf16>, vector<128x512xbf16>, vector<8x512xf32> -> vector<8x512xf32>
    %206 = arith.addf %203, %205 : vector<8x512xf32>
    %c32 = arith.constant 32 : index
    %c0_74 = arith.constant 0 : index
    %207 = vector.load %arg14[%c32, %c0_74] : memref<64x512xf32, #tpu.memory_space<vmem>>, vector<8x512xf32>
    %208 = arith.truncf %200 : vector<8x128xf32> to vector<8x128xbf16>
    %cst_75 = arith.constant dense<0.000000e+00> : vector<8x512xf32>
    %209 = tpu.matmul %208, %18, %cst_75 {dimension_numbers = #tpu.dot_dimension_numbers<[1], [0], [0], [1], [0, 0, 1, 1], [], []>} : vector<8x128xbf16>, vector<128x512xbf16>, vector<8x512xf32> -> vector<8x512xf32>
    %210 = arith.addf %207, %209 : vector<8x512xf32>
    %211 = vector.extract_strided_slice %206 {offsets = [0, 0], sizes = [8, 128], strides = [1, 1]} : vector<8x512xf32> to vector<8x128xf32>
    %212 = arith.negf %211 : vector<8x128xf32>
    %213 = math.exp %212 : vector<8x128xf32>
    %cst_76 = arith.constant 1.000000e+00 : f32
    %214 = vector.broadcast %cst_76 : f32 to vector<8x128xf32>
    %215 = arith.addf %214, %213 : vector<8x128xf32>
    %216 = arith.divf %214, %215 : vector<8x128xf32>
    %217 = vector.extract_strided_slice %206 {offsets = [0, 128], sizes = [8, 128], strides = [1, 1]} : vector<8x512xf32> to vector<8x128xf32>
    %218 = arith.negf %217 : vector<8x128xf32>
    %219 = math.exp %218 : vector<8x128xf32>
    %cst_77 = arith.constant 1.000000e+00 : f32
    %220 = vector.broadcast %cst_77 : f32 to vector<8x128xf32>
    %221 = arith.addf %220, %219 : vector<8x128xf32>
    %222 = arith.divf %220, %221 : vector<8x128xf32>
    %223 = vector.extract_strided_slice %206 {offsets = [0, 256], sizes = [8, 128], strides = [1, 1]} : vector<8x512xf32> to vector<8x128xf32>
    %224 = math.tanh %223 : vector<8x128xf32>
    %225 = vector.extract_strided_slice %206 {offsets = [0, 384], sizes = [8, 128], strides = [1, 1]} : vector<8x512xf32> to vector<8x128xf32>
    %226 = arith.negf %225 : vector<8x128xf32>
    %227 = math.exp %226 : vector<8x128xf32>
    %cst_78 = arith.constant 1.000000e+00 : f32
    %228 = vector.broadcast %cst_78 : f32 to vector<8x128xf32>
    %229 = arith.addf %228, %227 : vector<8x128xf32>
    %230 = arith.divf %228, %229 : vector<8x128xf32>
    %231 = arith.mulf %222, %173 : vector<8x128xf32>
    %232 = arith.mulf %216, %224 : vector<8x128xf32>
    %233 = arith.addf %231, %232 : vector<8x128xf32>
    %234 = math.tanh %233 : vector<8x128xf32>
    %235 = arith.mulf %230, %234 : vector<8x128xf32>
    %236 = vector.extract_strided_slice %210 {offsets = [0, 0], sizes = [8, 128], strides = [1, 1]} : vector<8x512xf32> to vector<8x128xf32>
    %237 = arith.negf %236 : vector<8x128xf32>
    %238 = math.exp %237 : vector<8x128xf32>
    %cst_79 = arith.constant 1.000000e+00 : f32
    %239 = vector.broadcast %cst_79 : f32 to vector<8x128xf32>
    %240 = arith.addf %239, %238 : vector<8x128xf32>
    %241 = arith.divf %239, %240 : vector<8x128xf32>
    %242 = vector.extract_strided_slice %210 {offsets = [0, 128], sizes = [8, 128], strides = [1, 1]} : vector<8x512xf32> to vector<8x128xf32>
    %243 = arith.negf %242 : vector<8x128xf32>
    %244 = math.exp %243 : vector<8x128xf32>
    %cst_80 = arith.constant 1.000000e+00 : f32
    %245 = vector.broadcast %cst_80 : f32 to vector<8x128xf32>
    %246 = arith.addf %245, %244 : vector<8x128xf32>
    %247 = arith.divf %245, %246 : vector<8x128xf32>
    %248 = vector.extract_strided_slice %210 {offsets = [0, 256], sizes = [8, 128], strides = [1, 1]} : vector<8x512xf32> to vector<8x128xf32>
    %249 = math.tanh %248 : vector<8x128xf32>
    %250 = vector.extract_strided_slice %210 {offsets = [0, 384], sizes = [8, 128], strides = [1, 1]} : vector<8x512xf32> to vector<8x128xf32>
    %251 = arith.negf %250 : vector<8x128xf32>
    %252 = math.exp %251 : vector<8x128xf32>
    %cst_81 = arith.constant 1.000000e+00 : f32
    %253 = vector.broadcast %cst_81 : f32 to vector<8x128xf32>
    %254 = arith.addf %253, %252 : vector<8x128xf32>
    %255 = arith.divf %253, %254 : vector<8x128xf32>
    %256 = arith.mulf %247, %198 : vector<8x128xf32>
    %257 = arith.mulf %241, %249 : vector<8x128xf32>
    %258 = arith.addf %256, %257 : vector<8x128xf32>
    %259 = math.tanh %258 : vector<8x128xf32>
    %260 = arith.mulf %255, %259 : vector<8x128xf32>
    %c24_82 = arith.constant 24 : index
    %c0_83 = arith.constant 0 : index
    %261 = vector.load %arg9[%c24_82, %c0_83] : memref<64x128xf32, #tpu.memory_space<vmem>>, vector<8x128xf32>
    tpu.vector_store %arg9[%c24_82, %c0_83], %235 {strides = array<i32>} : memref<64x128xf32, #tpu.memory_space<vmem>>, vector<8x128xf32>,
    %c32_84 = arith.constant 32 : index
    %c0_85 = arith.constant 0 : index
    %262 = vector.load %arg10[%c32_84, %c0_85] : memref<64x128xf32, #tpu.memory_space<vmem>>, vector<8x128xf32>
    tpu.vector_store %arg10[%c32_84, %c0_85], %260 {strides = array<i32>} : memref<64x128xf32, #tpu.memory_space<vmem>>, vector<8x128xf32>,
    %c32_86 = arith.constant 32 : index
    %c0_87 = arith.constant 0 : index
    %263 = vector.load %arg13[%c32_86, %c0_87] : memref<64x512xf32, #tpu.memory_space<vmem>>, vector<8x512xf32>
    %264 = arith.truncf %235 : vector<8x128xf32> to vector<8x128xbf16>
    %cst_88 = arith.constant dense<0.000000e+00> : vector<8x512xf32>
    %265 = tpu.matmul %264, %17, %cst_88 {dimension_numbers = #tpu.dot_dimension_numbers<[1], [0], [0], [1], [0, 0, 1, 1], [], []>} : vector<8x128xbf16>, vector<128x512xbf16>, vector<8x512xf32> -> vector<8x512xf32>
    %266 = arith.addf %263, %265 : vector<8x512xf32>
    %c24_89 = arith.constant 24 : index
    %c0_90 = arith.constant 0 : index
    %267 = vector.load %arg14[%c24_89, %c0_90] : memref<64x512xf32, #tpu.memory_space<vmem>>, vector<8x512xf32>
    %268 = arith.truncf %260 : vector<8x128xf32> to vector<8x128xbf16>
    %cst_91 = arith.constant dense<0.000000e+00> : vector<8x512xf32>
    %269 = tpu.matmul %268, %18, %cst_91 {dimension_numbers = #tpu.dot_dimension_numbers<[1], [0], [0], [1], [0, 0, 1, 1], [], []>} : vector<8x128xbf16>, vector<128x512xbf16>, vector<8x512xf32> -> vector<8x512xf32>
    %270 = arith.addf %267, %269 : vector<8x512xf32>
    %271 = vector.extract_strided_slice %266 {offsets = [0, 0], sizes = [8, 128], strides = [1, 1]} : vector<8x512xf32> to vector<8x128xf32>
    %272 = arith.negf %271 : vector<8x128xf32>
    %273 = math.exp %272 : vector<8x128xf32>
    %cst_92 = arith.constant 1.000000e+00 : f32
    %274 = vector.broadcast %cst_92 : f32 to vector<8x128xf32>
    %275 = arith.addf %274, %273 : vector<8x128xf32>
    %276 = arith.divf %274, %275 : vector<8x128xf32>
    %277 = vector.extract_strided_slice %266 {offsets = [0, 128], sizes = [8, 128], strides = [1, 1]} : vector<8x512xf32> to vector<8x128xf32>
    %278 = arith.negf %277 : vector<8x128xf32>
    %279 = math.exp %278 : vector<8x128xf32>
    %cst_93 = arith.constant 1.000000e+00 : f32
    %280 = vector.broadcast %cst_93 : f32 to vector<8x128xf32>
    %281 = arith.addf %280, %279 : vector<8x128xf32>
    %282 = arith.divf %280, %281 : vector<8x128xf32>
    %283 = vector.extract_strided_slice %266 {offsets = [0, 256], sizes = [8, 128], strides = [1, 1]} : vector<8x512xf32> to vector<8x128xf32>
    %284 = math.tanh %283 : vector<8x128xf32>
    %285 = vector.extract_strided_slice %266 {offsets = [0, 384], sizes = [8, 128], strides = [1, 1]} : vector<8x512xf32> to vector<8x128xf32>
    %286 = arith.negf %285 : vector<8x128xf32>
    %287 = math.exp %286 : vector<8x128xf32>
    %cst_94 = arith.constant 1.000000e+00 : f32
    %288 = vector.broadcast %cst_94 : f32 to vector<8x128xf32>
    %289 = arith.addf %288, %287 : vector<8x128xf32>
    %290 = arith.divf %288, %289 : vector<8x128xf32>
    %291 = arith.mulf %282, %233 : vector<8x128xf32>
    %292 = arith.mulf %276, %284 : vector<8x128xf32>
    %293 = arith.addf %291, %292 : vector<8x128xf32>
    %294 = math.tanh %293 : vector<8x128xf32>
    %295 = arith.mulf %290, %294 : vector<8x128xf32>
    %296 = vector.extract_strided_slice %270 {offsets = [0, 0], sizes = [8, 128], strides = [1, 1]} : vector<8x512xf32> to vector<8x128xf32>
    %297 = arith.negf %296 : vector<8x128xf32>
    %298 = math.exp %297 : vector<8x128xf32>
    %cst_95 = arith.constant 1.000000e+00 : f32
    %299 = vector.broadcast %cst_95 : f32 to vector<8x128xf32>
    %300 = arith.addf %299, %298 : vector<8x128xf32>
    %301 = arith.divf %299, %300 : vector<8x128xf32>
    %302 = vector.extract_strided_slice %270 {offsets = [0, 128], sizes = [8, 128], strides = [1, 1]} : vector<8x512xf32> to vector<8x128xf32>
    %303 = arith.negf %302 : vector<8x128xf32>
    %304 = math.exp %303 : vector<8x128xf32>
    %cst_96 = arith.constant 1.000000e+00 : f32
    %305 = vector.broadcast %cst_96 : f32 to vector<8x128xf32>
    %306 = arith.addf %305, %304 : vector<8x128xf32>
    %307 = arith.divf %305, %306 : vector<8x128xf32>
    %308 = vector.extract_strided_slice %270 {offsets = [0, 256], sizes = [8, 128], strides = [1, 1]} : vector<8x512xf32> to vector<8x128xf32>
    %309 = math.tanh %308 : vector<8x128xf32>
    %310 = vector.extract_strided_slice %270 {offsets = [0, 384], sizes = [8, 128], strides = [1, 1]} : vector<8x512xf32> to vector<8x128xf32>
    %311 = arith.negf %310 : vector<8x128xf32>
    %312 = math.exp %311 : vector<8x128xf32>
    %cst_97 = arith.constant 1.000000e+00 : f32
    %313 = vector.broadcast %cst_97 : f32 to vector<8x128xf32>
    %314 = arith.addf %313, %312 : vector<8x128xf32>
    %315 = arith.divf %313, %314 : vector<8x128xf32>
    %316 = arith.mulf %307, %258 : vector<8x128xf32>
    %317 = arith.mulf %301, %309 : vector<8x128xf32>
    %318 = arith.addf %316, %317 : vector<8x128xf32>
    %319 = math.tanh %318 : vector<8x128xf32>
    %320 = arith.mulf %315, %319 : vector<8x128xf32>
    %c32_98 = arith.constant 32 : index
    %c0_99 = arith.constant 0 : index
    %321 = vector.load %arg9[%c32_98, %c0_99] : memref<64x128xf32, #tpu.memory_space<vmem>>, vector<8x128xf32>
    tpu.vector_store %arg9[%c32_98, %c0_99], %295 {strides = array<i32>} : memref<64x128xf32, #tpu.memory_space<vmem>>, vector<8x128xf32>,
    %c24_100 = arith.constant 24 : index
    %c0_101 = arith.constant 0 : index
    %322 = vector.load %arg10[%c24_100, %c0_101] : memref<64x128xf32, #tpu.memory_space<vmem>>, vector<8x128xf32>
    tpu.vector_store %arg10[%c24_100, %c0_101], %320 {strides = array<i32>} : memref<64x128xf32, #tpu.memory_space<vmem>>, vector<8x128xf32>,
    %c40_102 = arith.constant 40 : index
    %c0_103 = arith.constant 0 : index
    %323 = vector.load %arg13[%c40_102, %c0_103] : memref<64x512xf32, #tpu.memory_space<vmem>>, vector<8x512xf32>
    %324 = arith.truncf %295 : vector<8x128xf32> to vector<8x128xbf16>
    %cst_104 = arith.constant dense<0.000000e+00> : vector<8x512xf32>
    %325 = tpu.matmul %324, %17, %cst_104 {dimension_numbers = #tpu.dot_dimension_numbers<[1], [0], [0], [1], [0, 0, 1, 1], [], []>} : vector<8x128xbf16>, vector<128x512xbf16>, vector<8x512xf32> -> vector<8x512xf32>
    %326 = arith.addf %323, %325 : vector<8x512xf32>
    %c16_105 = arith.constant 16 : index
    %c0_106 = arith.constant 0 : index
    %327 = vector.load %arg14[%c16_105, %c0_106] : memref<64x512xf32, #tpu.memory_space<vmem>>, vector<8x512xf32>
    %328 = arith.truncf %320 : vector<8x128xf32> to vector<8x128xbf16>
    %cst_107 = arith.constant dense<0.000000e+00> : vector<8x512xf32>
    %329 = tpu.matmul %328, %18, %cst_107 {dimension_numbers = #tpu.dot_dimension_numbers<[1], [0], [0], [1], [0, 0, 1, 1], [], []>} : vector<8x128xbf16>, vector<128x512xbf16>, vector<8x512xf32> -> vector<8x512xf32>
    %330 = arith.addf %327, %329 : vector<8x512xf32>
    %331 = vector.extract_strided_slice %326 {offsets = [0, 0], sizes = [8, 128], strides = [1, 1]} : vector<8x512xf32> to vector<8x128xf32>
    %332 = arith.negf %331 : vector<8x128xf32>
    %333 = math.exp %332 : vector<8x128xf32>
    %cst_108 = arith.constant 1.000000e+00 : f32
    %334 = vector.broadcast %cst_108 : f32 to vector<8x128xf32>
    %335 = arith.addf %334, %333 : vector<8x128xf32>
    %336 = arith.divf %334, %335 : vector<8x128xf32>
    %337 = vector.extract_strided_slice %326 {offsets = [0, 128], sizes = [8, 128], strides = [1, 1]} : vector<8x512xf32> to vector<8x128xf32>
    %338 = arith.negf %337 : vector<8x128xf32>
    %339 = math.exp %338 : vector<8x128xf32>
    %cst_109 = arith.constant 1.000000e+00 : f32
    %340 = vector.broadcast %cst_109 : f32 to vector<8x128xf32>
    %341 = arith.addf %340, %339 : vector<8x128xf32>
    %342 = arith.divf %340, %341 : vector<8x128xf32>
    %343 = vector.extract_strided_slice %326 {offsets = [0, 256], sizes = [8, 128], strides = [1, 1]} : vector<8x512xf32> to vector<8x128xf32>
    %344 = math.tanh %343 : vector<8x128xf32>
    %345 = vector.extract_strided_slice %326 {offsets = [0, 384], sizes = [8, 128], strides = [1, 1]} : vector<8x512xf32> to vector<8x128xf32>
    %346 = arith.negf %345 : vector<8x128xf32>
    %347 = math.exp %346 : vector<8x128xf32>
    %cst_110 = arith.constant 1.000000e+00 : f32
    %348 = vector.broadcast %cst_110 : f32 to vector<8x128xf32>
    %349 = arith.addf %348, %347 : vector<8x128xf32>
    %350 = arith.divf %348, %349 : vector<8x128xf32>
    %351 = arith.mulf %342, %293 : vector<8x128xf32>
    %352 = arith.mulf %336, %344 : vector<8x128xf32>
    %353 = arith.addf %351, %352 : vector<8x128xf32>
    %354 = math.tanh %353 : vector<8x128xf32>
    %355 = arith.mulf %350, %354 : vector<8x128xf32>
    %356 = vector.extract_strided_slice %330 {offsets = [0, 0], sizes = [8, 128], strides = [1, 1]} : vector<8x512xf32> to vector<8x128xf32>
    %357 = arith.negf %356 : vector<8x128xf32>
    %358 = math.exp %357 : vector<8x128xf32>
    %cst_111 = arith.constant 1.000000e+00 : f32
    %359 = vector.broadcast %cst_111 : f32 to vector<8x128xf32>
    %360 = arith.addf %359, %358 : vector<8x128xf32>
    %361 = arith.divf %359, %360 : vector<8x128xf32>
    %362 = vector.extract_strided_slice %330 {offsets = [0, 128], sizes = [8, 128], strides = [1, 1]} : vector<8x512xf32> to vector<8x128xf32>
    %363 = arith.negf %362 : vector<8x128xf32>
    %364 = math.exp %363 : vector<8x128xf32>
    %cst_112 = arith.constant 1.000000e+00 : f32
    %365 = vector.broadcast %cst_112 : f32 to vector<8x128xf32>
    %366 = arith.addf %365, %364 : vector<8x128xf32>
    %367 = arith.divf %365, %366 : vector<8x128xf32>
    %368 = vector.extract_strided_slice %330 {offsets = [0, 256], sizes = [8, 128], strides = [1, 1]} : vector<8x512xf32> to vector<8x128xf32>
    %369 = math.tanh %368 : vector<8x128xf32>
    %370 = vector.extract_strided_slice %330 {offsets = [0, 384], sizes = [8, 128], strides = [1, 1]} : vector<8x512xf32> to vector<8x128xf32>
    %371 = arith.negf %370 : vector<8x128xf32>
    %372 = math.exp %371 : vector<8x128xf32>
    %cst_113 = arith.constant 1.000000e+00 : f32
    %373 = vector.broadcast %cst_113 : f32 to vector<8x128xf32>
    %374 = arith.addf %373, %372 : vector<8x128xf32>
    %375 = arith.divf %373, %374 : vector<8x128xf32>
    %376 = arith.mulf %367, %318 : vector<8x128xf32>
    %377 = arith.mulf %361, %369 : vector<8x128xf32>
    %378 = arith.addf %376, %377 : vector<8x128xf32>
    %379 = math.tanh %378 : vector<8x128xf32>
    %380 = arith.mulf %375, %379 : vector<8x128xf32>
    %c40_114 = arith.constant 40 : index
    %c0_115 = arith.constant 0 : index
    %381 = vector.load %arg9[%c40_114, %c0_115] : memref<64x128xf32, #tpu.memory_space<vmem>>, vector<8x128xf32>
    tpu.vector_store %arg9[%c40_114, %c0_115], %355 {strides = array<i32>} : memref<64x128xf32, #tpu.memory_space<vmem>>, vector<8x128xf32>,
    %c16_116 = arith.constant 16 : index
    %c0_117 = arith.constant 0 : index
    %382 = vector.load %arg10[%c16_116, %c0_117] : memref<64x128xf32, #tpu.memory_space<vmem>>, vector<8x128xf32>
    tpu.vector_store %arg10[%c16_116, %c0_117], %380 {strides = array<i32>} : memref<64x128xf32, #tpu.memory_space<vmem>>, vector<8x128xf32>,
    %c48_118 = arith.constant 48 : index
    %c0_119 = arith.constant 0 : index
    %383 = vector.load %arg13[%c48_118, %c0_119] : memref<64x512xf32, #tpu.memory_space<vmem>>, vector<8x512xf32>
    %384 = arith.truncf %355 : vector<8x128xf32> to vector<8x128xbf16>
    %cst_120 = arith.constant dense<0.000000e+00> : vector<8x512xf32>
    %385 = tpu.matmul %384, %17, %cst_120 {dimension_numbers = #tpu.dot_dimension_numbers<[1], [0], [0], [1], [0, 0, 1, 1], [], []>} : vector<8x128xbf16>, vector<128x512xbf16>, vector<8x512xf32> -> vector<8x512xf32>
    %386 = arith.addf %383, %385 : vector<8x512xf32>
    %c8_121 = arith.constant 8 : index
    %c0_122 = arith.constant 0 : index
    %387 = vector.load %arg14[%c8_121, %c0_122] : memref<64x512xf32, #tpu.memory_space<vmem>>, vector<8x512xf32>
    %388 = arith.truncf %380 : vector<8x128xf32> to vector<8x128xbf16>
    %cst_123 = arith.constant dense<0.000000e+00> : vector<8x512xf32>
    %389 = tpu.matmul %388, %18, %cst_123 {dimension_numbers = #tpu.dot_dimension_numbers<[1], [0], [0], [1], [0, 0, 1, 1], [], []>} : vector<8x128xbf16>, vector<128x512xbf16>, vector<8x512xf32> -> vector<8x512xf32>
    %390 = arith.addf %387, %389 : vector<8x512xf32>
    %391 = vector.extract_strided_slice %386 {offsets = [0, 0], sizes = [8, 128], strides = [1, 1]} : vector<8x512xf32> to vector<8x128xf32>
    %392 = arith.negf %391 : vector<8x128xf32>
    %393 = math.exp %392 : vector<8x128xf32>
    %cst_124 = arith.constant 1.000000e+00 : f32
    %394 = vector.broadcast %cst_124 : f32 to vector<8x128xf32>
    %395 = arith.addf %394, %393 : vector<8x128xf32>
    %396 = arith.divf %394, %395 : vector<8x128xf32>
    %397 = vector.extract_strided_slice %386 {offsets = [0, 128], sizes = [8, 128], strides = [1, 1]} : vector<8x512xf32> to vector<8x128xf32>
    %398 = arith.negf %397 : vector<8x128xf32>
    %399 = math.exp %398 : vector<8x128xf32>
    %cst_125 = arith.constant 1.000000e+00 : f32
    %400 = vector.broadcast %cst_125 : f32 to vector<8x128xf32>
    %401 = arith.addf %400, %399 : vector<8x128xf32>
    %402 = arith.divf %400, %401 : vector<8x128xf32>
    %403 = vector.extract_strided_slice %386 {offsets = [0, 256], sizes = [8, 128], strides = [1, 1]} : vector<8x512xf32> to vector<8x128xf32>
    %404 = math.tanh %403 : vector<8x128xf32>
    %405 = vector.extract_strided_slice %386 {offsets = [0, 384], sizes = [8, 128], strides = [1, 1]} : vector<8x512xf32> to vector<8x128xf32>
    %406 = arith.negf %405 : vector<8x128xf32>
    %407 = math.exp %406 : vector<8x128xf32>
    %cst_126 = arith.constant 1.000000e+00 : f32
    %408 = vector.broadcast %cst_126 : f32 to vector<8x128xf32>
    %409 = arith.addf %408, %407 : vector<8x128xf32>
    %410 = arith.divf %408, %409 : vector<8x128xf32>
    %411 = arith.mulf %402, %353 : vector<8x128xf32>
    %412 = arith.mulf %396, %404 : vector<8x128xf32>
    %413 = arith.addf %411, %412 : vector<8x128xf32>
    %414 = math.tanh %413 : vector<8x128xf32>
    %415 = arith.mulf %410, %414 : vector<8x128xf32>
    %416 = vector.extract_strided_slice %390 {offsets = [0, 0], sizes = [8, 128], strides = [1, 1]} : vector<8x512xf32> to vector<8x128xf32>
    %417 = arith.negf %416 : vector<8x128xf32>
    %418 = math.exp %417 : vector<8x128xf32>
    %cst_127 = arith.constant 1.000000e+00 : f32
    %419 = vector.broadcast %cst_127 : f32 to vector<8x128xf32>
    %420 = arith.addf %419, %418 : vector<8x128xf32>
    %421 = arith.divf %419, %420 : vector<8x128xf32>
    %422 = vector.extract_strided_slice %390 {offsets = [0, 128], sizes = [8, 128], strides = [1, 1]} : vector<8x512xf32> to vector<8x128xf32>
    %423 = arith.negf %422 : vector<8x128xf32>
    %424 = math.exp %423 : vector<8x128xf32>
    %cst_128 = arith.constant 1.000000e+00 : f32
    %425 = vector.broadcast %cst_128 : f32 to vector<8x128xf32>
    %426 = arith.addf %425, %424 : vector<8x128xf32>
    %427 = arith.divf %425, %426 : vector<8x128xf32>
    %428 = vector.extract_strided_slice %390 {offsets = [0, 256], sizes = [8, 128], strides = [1, 1]} : vector<8x512xf32> to vector<8x128xf32>
    %429 = math.tanh %428 : vector<8x128xf32>
    %430 = vector.extract_strided_slice %390 {offsets = [0, 384], sizes = [8, 128], strides = [1, 1]} : vector<8x512xf32> to vector<8x128xf32>
    %431 = arith.negf %430 : vector<8x128xf32>
    %432 = math.exp %431 : vector<8x128xf32>
    %cst_129 = arith.constant 1.000000e+00 : f32
    %433 = vector.broadcast %cst_129 : f32 to vector<8x128xf32>
    %434 = arith.addf %433, %432 : vector<8x128xf32>
    %435 = arith.divf %433, %434 : vector<8x128xf32>
    %436 = arith.mulf %427, %378 : vector<8x128xf32>
    %437 = arith.mulf %421, %429 : vector<8x128xf32>
    %438 = arith.addf %436, %437 : vector<8x128xf32>
    %439 = math.tanh %438 : vector<8x128xf32>
    %440 = arith.mulf %435, %439 : vector<8x128xf32>
    %c48_130 = arith.constant 48 : index
    %c0_131 = arith.constant 0 : index
    %441 = vector.load %arg9[%c48_130, %c0_131] : memref<64x128xf32, #tpu.memory_space<vmem>>, vector<8x128xf32>
    tpu.vector_store %arg9[%c48_130, %c0_131], %415 {strides = array<i32>} : memref<64x128xf32, #tpu.memory_space<vmem>>, vector<8x128xf32>,
    %c8_132 = arith.constant 8 : index
    %c0_133 = arith.constant 0 : index
    %442 = vector.load %arg10[%c8_132, %c0_133] : memref<64x128xf32, #tpu.memory_space<vmem>>, vector<8x128xf32>
    tpu.vector_store %arg10[%c8_132, %c0_133], %440 {strides = array<i32>} : memref<64x128xf32, #tpu.memory_space<vmem>>, vector<8x128xf32>,
    %c56_134 = arith.constant 56 : index
    %c0_135 = arith.constant 0 : index
    %443 = vector.load %arg13[%c56_134, %c0_135] : memref<64x512xf32, #tpu.memory_space<vmem>>, vector<8x512xf32>
    %444 = arith.truncf %415 : vector<8x128xf32> to vector<8x128xbf16>
    %cst_136 = arith.constant dense<0.000000e+00> : vector<8x512xf32>
    %445 = tpu.matmul %444, %17, %cst_136 {dimension_numbers = #tpu.dot_dimension_numbers<[1], [0], [0], [1], [0, 0, 1, 1], [], []>} : vector<8x128xbf16>, vector<128x512xbf16>, vector<8x512xf32> -> vector<8x512xf32>
    %446 = arith.addf %443, %445 : vector<8x512xf32>
    %c0_137 = arith.constant 0 : index
    %c0_138 = arith.constant 0 : index
    %447 = vector.load %arg14[%c0_137, %c0_138] : memref<64x512xf32, #tpu.memory_space<vmem>>, vector<8x512xf32>
    %448 = arith.truncf %440 : vector<8x128xf32> to vector<8x128xbf16>
    %cst_139 = arith.constant dense<0.000000e+00> : vector<8x512xf32>
    %449 = tpu.matmul %448, %18, %cst_139 {dimension_numbers = #tpu.dot_dimension_numbers<[1], [0], [0], [1], [0, 0, 1, 1], [], []>} : vector<8x128xbf16>, vector<128x512xbf16>, vector<8x512xf32> -> vector<8x512xf32>
    %450 = arith.addf %447, %449 : vector<8x512xf32>
    %451 = vector.extract_strided_slice %446 {offsets = [0, 0], sizes = [8, 128], strides = [1, 1]} : vector<8x512xf32> to vector<8x128xf32>
    %452 = arith.negf %451 : vector<8x128xf32>
    %453 = math.exp %452 : vector<8x128xf32>
    %cst_140 = arith.constant 1.000000e+00 : f32
    %454 = vector.broadcast %cst_140 : f32 to vector<8x128xf32>
    %455 = arith.addf %454, %453 : vector<8x128xf32>
    %456 = arith.divf %454, %455 : vector<8x128xf32>
    %457 = vector.extract_strided_slice %446 {offsets = [0, 128], sizes = [8, 128], strides = [1, 1]} : vector<8x512xf32> to vector<8x128xf32>
    %458 = arith.negf %457 : vector<8x128xf32>
    %459 = math.exp %458 : vector<8x128xf32>
    %cst_141 = arith.constant 1.000000e+00 : f32
    %460 = vector.broadcast %cst_141 : f32 to vector<8x128xf32>
    %461 = arith.addf %460, %459 : vector<8x128xf32>
    %462 = arith.divf %460, %461 : vector<8x128xf32>
    %463 = vector.extract_strided_slice %446 {offsets = [0, 256], sizes = [8, 128], strides = [1, 1]} : vector<8x512xf32> to vector<8x128xf32>
    %464 = math.tanh %463 : vector<8x128xf32>
    %465 = vector.extract_strided_slice %446 {offsets = [0, 384], sizes = [8, 128], strides = [1, 1]} : vector<8x512xf32> to vector<8x128xf32>
    %466 = arith.negf %465 : vector<8x128xf32>
    %467 = math.exp %466 : vector<8x128xf32>
    %cst_142 = arith.constant 1.000000e+00 : f32
    %468 = vector.broadcast %cst_142 : f32 to vector<8x128xf32>
    %469 = arith.addf %468, %467 : vector<8x128xf32>
    %470 = arith.divf %468, %469 : vector<8x128xf32>
    %471 = arith.mulf %462, %413 : vector<8x128xf32>
    %472 = arith.mulf %456, %464 : vector<8x128xf32>
    %473 = arith.addf %471, %472 : vector<8x128xf32>
    %474 = math.tanh %473 : vector<8x128xf32>
    %475 = arith.mulf %470, %474 : vector<8x128xf32>
    %476 = vector.extract_strided_slice %450 {offsets = [0, 0], sizes = [8, 128], strides = [1, 1]} : vector<8x512xf32> to vector<8x128xf32>
    %477 = arith.negf %476 : vector<8x128xf32>
    %478 = math.exp %477 : vector<8x128xf32>
    %cst_143 = arith.constant 1.000000e+00 : f32
    %479 = vector.broadcast %cst_143 : f32 to vector<8x128xf32>
    %480 = arith.addf %479, %478 : vector<8x128xf32>
    %481 = arith.divf %479, %480 : vector<8x128xf32>
    %482 = vector.extract_strided_slice %450 {offsets = [0, 128], sizes = [8, 128], strides = [1, 1]} : vector<8x512xf32> to vector<8x128xf32>
    %483 = arith.negf %482 : vector<8x128xf32>
    %484 = math.exp %483 : vector<8x128xf32>
    %cst_144 = arith.constant 1.000000e+00 : f32
    %485 = vector.broadcast %cst_144 : f32 to vector<8x128xf32>
    %486 = arith.addf %485, %484 : vector<8x128xf32>
    %487 = arith.divf %485, %486 : vector<8x128xf32>
    %488 = vector.extract_strided_slice %450 {offsets = [0, 256], sizes = [8, 128], strides = [1, 1]} : vector<8x512xf32> to vector<8x128xf32>
    %489 = math.tanh %488 : vector<8x128xf32>
    %490 = vector.extract_strided_slice %450 {offsets = [0, 384], sizes = [8, 128], strides = [1, 1]} : vector<8x512xf32> to vector<8x128xf32>
    %491 = arith.negf %490 : vector<8x128xf32>
    %492 = math.exp %491 : vector<8x128xf32>
    %cst_145 = arith.constant 1.000000e+00 : f32
    %493 = vector.broadcast %cst_145 : f32 to vector<8x128xf32>
    %494 = arith.addf %493, %492 : vector<8x128xf32>
    %495 = arith.divf %493, %494 : vector<8x128xf32>
    %496 = arith.mulf %487, %438 : vector<8x128xf32>
    %497 = arith.mulf %481, %489 : vector<8x128xf32>
    %498 = arith.addf %496, %497 : vector<8x128xf32>
    %499 = math.tanh %498 : vector<8x128xf32>
    %500 = arith.mulf %495, %499 : vector<8x128xf32>
    %c56_146 = arith.constant 56 : index
    %c0_147 = arith.constant 0 : index
    %501 = vector.load %arg9[%c56_146, %c0_147] : memref<64x128xf32, #tpu.memory_space<vmem>>, vector<8x128xf32>
    tpu.vector_store %arg9[%c56_146, %c0_147], %475 {strides = array<i32>} : memref<64x128xf32, #tpu.memory_space<vmem>>, vector<8x128xf32>,
    %c0_148 = arith.constant 0 : index
    %c0_149 = arith.constant 0 : index
    %502 = vector.load %arg10[%c0_148, %c0_149] : memref<64x128xf32, #tpu.memory_space<vmem>>, vector<8x128xf32>
    tpu.vector_store %arg10[%c0_148, %c0_149], %500 {strides = array<i32>} : memref<64x128xf32, #tpu.memory_space<vmem>>, vector<8x128xf32>,
    %c0_150 = arith.constant 0 : index
    %c0_151 = arith.constant 0 : index
    %503 = vector.load %arg15[%c0_150, %c0_151] : memref<8x128xf32, #tpu.memory_space<vmem>>, vector<8x128xf32>
    tpu.vector_store %arg15[%c0_150, %c0_151], %475 {strides = array<i32>} : memref<8x128xf32, #tpu.memory_space<vmem>>, vector<8x128xf32>,
    %c0_152 = arith.constant 0 : index
    %c0_153 = arith.constant 0 : index
    %504 = vector.load %arg16[%c0_152, %c0_153] : memref<8x128xf32, #tpu.memory_space<vmem>>, vector<8x128xf32>
    tpu.vector_store %arg16[%c0_152, %c0_153], %473 {strides = array<i32>} : memref<8x128xf32, #tpu.memory_space<vmem>>, vector<8x128xf32>,
    %c0_154 = arith.constant 0 : index
    %c0_155 = arith.constant 0 : index
    %505 = vector.load %arg17[%c0_154, %c0_155] : memref<8x128xf32, #tpu.memory_space<vmem>>, vector<8x128xf32>
    tpu.vector_store %arg17[%c0_154, %c0_155], %500 {strides = array<i32>} : memref<8x128xf32, #tpu.memory_space<vmem>>, vector<8x128xf32>,
    %c0_156 = arith.constant 0 : index
    %c0_157 = arith.constant 0 : index
    %506 = vector.load %arg18[%c0_156, %c0_157] : memref<8x128xf32, #tpu.memory_space<vmem>>, vector<8x128xf32>
    tpu.vector_store %arg18[%c0_156, %c0_157], %498 {strides = array<i32>} : memref<8x128xf32, #tpu.memory_space<vmem>>, vector<8x128xf32>,
    %c0_i32_158 = arith.constant 0 : i32
    %507 = arith.cmpi eq, %arg0, %c0_i32_158 : i32
    %508 = arith.extui %507 : i1 to i32
    %c0_i32_159 = arith.constant 0 : i32
    %509 = arith.cmpi ne, %508, %c0_i32_159 : i32
    scf.if %509 {
      %c0_160 = arith.constant 0 : index
      %c0_161 = arith.constant 0 : index
      %510 = vector.load %arg11[%c0_160, %c0_161] : memref<16x128xf32, #tpu.memory_space<vmem>>, vector<8x128xf32>
      tpu.vector_store %arg11[%c0_160, %c0_161], %475 {strides = array<i32>} : memref<16x128xf32, #tpu.memory_space<vmem>>, vector<8x128xf32>,
      %c8_162 = arith.constant 8 : index
      %c0_163 = arith.constant 0 : index
      %511 = vector.load %arg11[%c8_162, %c0_163] : memref<16x128xf32, #tpu.memory_space<vmem>>, vector<8x128xf32>
      tpu.vector_store %arg11[%c8_162, %c0_163], %500 {strides = array<i32>} : memref<16x128xf32, #tpu.memory_space<vmem>>, vector<8x128xf32>,
      %c0_164 = arith.constant 0 : index
      %c0_165 = arith.constant 0 : index
      %512 = vector.load %arg12[%c0_164, %c0_165] : memref<16x128xf32, #tpu.memory_space<vmem>>, vector<8x128xf32>
      tpu.vector_store %arg12[%c0_164, %c0_165], %473 {strides = array<i32>} : memref<16x128xf32, #tpu.memory_space<vmem>>, vector<8x128xf32>,
      %c8_166 = arith.constant 8 : index
      %c0_167 = arith.constant 0 : index
      %513 = vector.load %arg12[%c8_166, %c0_167] : memref<16x128xf32, #tpu.memory_space<vmem>>, vector<8x128xf32>
      tpu.vector_store %arg12[%c8_166, %c0_167], %498 {strides = array<i32>} : memref<16x128xf32, #tpu.memory_space<vmem>>, vector<8x128xf32>,
    } else {
    }
    return
  }
  func.func @transform_0(%arg0: i32) -> (i32, i32) {
    %c0_i32 = arith.constant 0 : i32
    %c0_i32_0 = arith.constant 0 : i32
    return %arg0, %c0_i32 : i32, i32
  }
  func.func @transform_1(%arg0: i32) -> (i32, i32) {
    %c0_i32 = arith.constant 0 : i32
    %0 = arith.subi %c0_i32, %arg0 : i32
    %c0_i32_0 = arith.constant 0 : i32
    %c0_i32_1 = arith.constant 0 : i32
    return %0, %c0_i32_0 : i32, i32
  }
  func.func @transform_2(%arg0: i32) -> (i32, i32) {
    %c0_i32 = arith.constant 0 : i32
    %c0_i32_0 = arith.constant 0 : i32
    %c0_i32_1 = arith.constant 0 : i32
    return %c0_i32, %c0_i32_0 : i32, i32
  }
  func.func @transform_3(%arg0: i32) -> (i32, i32) {
    %c0_i32 = arith.constant 0 : i32
    %c0_i32_0 = arith.constant 0 : i32
    %c0_i32_1 = arith.constant 0 : i32
    return %c0_i32, %c0_i32_0 : i32, i32
  }
  func.func @transform_4(%arg0: i32) -> (i32, i32) {
    %c0_i32 = arith.constant 0 : i32
    %c0_i32_0 = arith.constant 0 : i32
    %c0_i32_1 = arith.constant 0 : i32
    return %c0_i32, %c0_i32_0 : i32, i32
  }
  func.func @transform_5(%arg0: i32) -> (i32, i32) {
    %c0_i32 = arith.constant 0 : i32
    %c0_i32_0 = arith.constant 0 : i32
    %c0_i32_1 = arith.constant 0 : i32
    return %c0_i32, %c0_i32_0 : i32, i32
  }
  func.func @transform_6(%arg0: i32) -> (i32, i32) {
    %c0_i32 = arith.constant 0 : i32
    %c0_i32_0 = arith.constant 0 : i32
    %c0_i32_1 = arith.constant 0 : i32
    return %c0_i32, %c0_i32_0 : i32, i32
  }
  func.func @transform_7(%arg0: i32) -> (i32, i32) {
    %c0_i32 = arith.constant 0 : i32
    %c0_i32_0 = arith.constant 0 : i32
    %c0_i32_1 = arith.constant 0 : i32
    return %c0_i32, %c0_i32_0 : i32, i32
  }
  func.func @transform_8(%arg0: i32) -> (i32, i32) {
    %c0_i32 = arith.constant 0 : i32
    %c0_i32_0 = arith.constant 0 : i32
    return %arg0, %c0_i32 : i32, i32
  }
  func.func @transform_9(%arg0: i32) -> (i32, i32) {
    %c0_i32 = arith.constant 0 : i32
    %0 = arith.subi %c0_i32, %arg0 : i32
    %c0_i32_0 = arith.constant 0 : i32
    %c0_i32_1 = arith.constant 0 : i32
    return %0, %c0_i32_0 : i32, i32
  }
  func.func @transform_10(%arg0: i32) -> (i32, i32) {
    %c0_i32 = arith.constant 0 : i32
    %c0_i32_0 = arith.constant 0 : i32
    %c0_i32_1 = arith.constant 0 : i32
    return %c0_i32, %c0_i32_0 : i32, i32
  }
  func.func @transform_11(%arg0: i32) -> (i32, i32) {
    %c0_i32 = arith.constant 0 : i32
    %c0_i32_0 = arith.constant 0 : i32
    %c0_i32_1 = arith.constant 0 : i32
    return %c0_i32, %c0_i32_0 : i32, i32
  }
}

</mosaic_0001>

<llo_original>
// kernel: _encoder_forward_impl.1
$region0: #{_encoder_forward_impl.1}
  #allocation0 [shape = 'u32[]', space=smem, size = 0x4, offset = 0x4, fixed_abs, tag = 'smem constant byte address 0x4 - core index']
  #allocation1 [shape = 'u32[72,128]{1,0:T(1,128)}', space=vmem, size = 0x9000, scoped, tag = 'internal scratch']
  #allocation2 [shape = 'f32[64,512]{1,0:T(8,128)}', space=vmem, size = 0x20000, scoped, tag = 'scratch operand']
  #allocation3 [shape = 'f32[64,512]{1,0:T(8,128)}', space=vmem, size = 0x20000, scoped, tag = 'scratch operand']
  #allocation4 [shape = 'f32[8,128]{1,0:T(8,128)}', space=vmem, size = 0x1000, scoped, tag = 'scratch operand']
  #allocation5 [shape = 'f32[8,128]{1,0:T(8,128)}', space=vmem, size = 0x1000, scoped, tag = 'scratch operand']
  #allocation6 [shape = 'f32[8,128]{1,0:T(8,128)}', space=vmem, size = 0x1000, scoped, tag = 'scratch operand']
  #allocation7 [shape = 'f32[8,128]{1,0:T(8,128)}', space=vmem, size = 0x1000, scoped, tag = 'scratch operand']
  %s0 = inlined_call_operand.vmem [shape: bf16[64,128], index: 0, kind: input, shape index: {}, may-alias: {0,1}]
  %s1 = inlined_call_operand.vmem [shape: bf16[64,128], index: 1, kind: input, shape index: {}, may-alias: {0,1}]
  %s2 = inlined_call_operand.vmem [shape: bf16[128,512], index: 2, kind: input, shape index: {}]
  %s3 = inlined_call_operand.vmem [shape: bf16[128,512], index: 3, kind: input, shape index: {}]
  %s4 = inlined_call_operand.vmem [shape: bf16[128,512], index: 4, kind: input, shape index: {}]
  %s5 = inlined_call_operand.vmem [shape: bf16[128,512], index: 5, kind: input, shape index: {}]
  %s6 = inlined_call_operand.vmem [shape: f32[1,512], index: 6, kind: input, shape index: {}]
  %s7 = inlined_call_operand.vmem [shape: f32[1,512], index: 7, kind: input, shape index: {}]
  %s8 = inlined_call_operand.vmem [shape: f32[64,128], index: 8, kind: output, shape index: {0}]
  %s9 = inlined_call_operand.vmem [shape: f32[64,128], index: 9, kind: output, shape index: {1}]
  %s10 = inlined_call_operand.vmem [shape: f32[16,128], index: 10, kind: output, shape index: {2}]
  %s11 = inlined_call_operand.vmem [shape: f32[16,128], index: 11, kind: output, shape index: {3}]
  %12 = xla_tuple %s8, %s9, %s10, %s11
  %s13 = sld [smem:[#allocation0]]
  $region74: #{_encoder_forward_impl.1} parent=0
    _
  %s15 = ssub.s32 1, %s13
  %s16 = scalar_select 0, %s15, %s13
  // Predicated region
  $region2: #{_encoder_forward_impl.1} parent=0 // pred_check
    _
  $region3: #{_encoder_forward_impl.1} parent=0 // pred_check_branch
    %18 = sbr.rel (0) target = $region5
  $region4: #{_encoder_forward_impl.1} parent=0 // pred_region
    _
  $region5: #{_encoder_forward_impl.1} parent=0 // pred_fallthru
    _
  // Predicated region
  $region6: #{_encoder_forward_impl.1} parent=0 // pred_check
    _
  $region7: #{_encoder_forward_impl.1} parent=0 // pred_check_branch
    %20 = sbr.rel (0) target = $region9
  $region8: #{_encoder_forward_impl.1} parent=0 // pred_region
    %s21 = ssub.s32 0, 0
    %s22 = smul.u32 8, %s21
    %p23 = scmp.lt.s32.totalorder %s22, 7
    %s24 = scalar_select %p23, %s22, 7
    %s25 = smul.addr %s24, 4
    %s26 = scalar_lea.vmem %s1, %s25
    %s27 = ssub.s32 0, 0
    %s28 = smul.u32 8, %s27
  $region9: #{_encoder_forward_impl.1} parent=0 // pred_fallthru
    _
  // Predicated region
  $region10: #{_encoder_forward_impl.1} parent=0 // pred_check
    _
  $region11: #{_encoder_forward_impl.1} parent=0 // pred_check_branch
    %30 = sbr.rel (0) target = $region13
  $region12: #{_encoder_forward_impl.1} parent=0 // pred_region
    _
  $region13: #{_encoder_forward_impl.1} parent=0 // pred_fallthru
    _
  // Predicated region
  $region14: #{_encoder_forward_impl.1} parent=0 // pred_check
    _
  $region15: #{_encoder_forward_impl.1} parent=0 // pred_check_branch
    %32 = sbr.rel (0) target = $region17
  $region16: #{_encoder_forward_impl.1} parent=0 // pred_region
    _
  $region17: #{_encoder_forward_impl.1} parent=0 // pred_fallthru
    _
  // Predicated region
  $region18: #{_encoder_forward_impl.1} parent=0 // pred_check
    _
  $region19: #{_encoder_forward_impl.1} parent=0 // pred_check_branch
    %34 = sbr.rel (0) target = $region21
  $region20: #{_encoder_forward_impl.1} parent=0 // pred_region
    _
  $region21: #{_encoder_forward_impl.1} parent=0 // pred_fallthru
    _
  // Predicated region
  $region22: #{_encoder_forward_impl.1} parent=0 // pred_check
    _
  $region23: #{_encoder_forward_impl.1} parent=0 // pred_check_branch
    %36 = sbr.rel (0) target = $region25
  $region24: #{_encoder_forward_impl.1} parent=0 // pred_region
    _
  $region25: #{_encoder_forward_impl.1} parent=0 // pred_fallthru
    _
  // Predicated region
  $region26: #{_encoder_forward_impl.1} parent=0 // pred_check
    _
  $region27: #{_encoder_forward_impl.1} parent=0 // pred_check_branch
    %38 = sbr.rel (0) target = $region29
  $region28: #{_encoder_forward_impl.1} parent=0 // pred_region
    _
  $region29: #{_encoder_forward_impl.1} parent=0 // pred_fallthru
    _
  // Predicated region
  $region30: #{_encoder_forward_impl.1} parent=0 // pred_check
    _
  $region31: #{_encoder_forward_impl.1} parent=0 // pred_check_branch
    %40 = sbr.rel (0) target = $region33
  $region32: #{_encoder_forward_impl.1} parent=0 // pred_region
    _
  $region33: #{_encoder_forward_impl.1} parent=0 // pred_fallthru
    _
  %s41 = ssub.s32 0, 0
  %s42 = smul.u32 8, %s41
  %p43 = scmp.lt.s32.totalorder %s42, 7
  %s44 = scalar_select %p43, %s42, 7
  %s45 = smul.addr %s44, 4
  %s46 = scalar_lea.vmem %s1, %s45
  %s47 = ssub.s32 0, 0
  %s48 = smul.u32 8, %s47
  %p49 = scmp.lt.s32.totalorder %s48, 7
  %s50 = scalar_select %p49, %s48, 7
  %s51 = smul.addr %s50, 8
  %s52 = scalar_lea.vmem %s9, %s51
  %s53 = ssub.s32 0, 0
  %s54 = smul.u32 8, %s53
  %p55 = scmp.lt.s32.totalorder %s54, 7
  %s56 = scalar_select %p55, %s54, 7
  %s57 = smul.addr %s56, 4
  %s58 = scalar_lea.vmem %s1, %s57
  %s59 = ssub.s32 0, 0
  %s60 = smul.u32 8, %s59
  %s61 = ssub.s32 0, 0
  %s62 = smul.u32 8, %s61
  %p63 = scmp.lt.s32.totalorder %s62, 7
  %s64 = scalar_select %p63, %s62, 7
  %s65 = smul.addr %s64, 8
  %s66 = scalar_lea.vmem %s9, %s65
  %s67 = ssub.s32 0, 0
  %s68 = smul.u32 8, %s67
  %p69 = scmp.eq.s32.totalorder 0, 0
  // Predicated region
  $region34: #{_encoder_forward_impl.1} parent=0 // pred_check
    %p70 = pneg %p69
  $region35: #{_encoder_forward_impl.1} parent=0 // pred_check_branch
    %72 = sbr.rel (%p70) target = $region37
  $region36: #{_encoder_forward_impl.1} parent=0 // pred_region
    %73 = vst [vmem:[#allocation4] sm:$0xff] 0.0
    %74 = vst [vmem:[#allocation5] sm:$0xff] 0.0
    %75 = vst [vmem:[#allocation6] sm:$0xff] 0.0
    %76 = vst [vmem:[#allocation7] sm:$0xff] 0.0
  $region37: #{_encoder_forward_impl.1} parent=0 // pred_fallthru
    _
  %v77 = vld [vmem:[%s0] sm:$0xf]
  %v78 = vld [vmem:[%s0 + $0x4] sm:$0xf]
  %v79 = vld [vmem:[%s0 + $0x8] sm:$0xf]
  %v80 = vld [vmem:[%s0 + $0xc] sm:$0xf]
  %v81 = vld [vmem:[%s0 + $0x10] sm:$0xf]
  %v82 = vld [vmem:[%s0 + $0x14] sm:$0xf]
  %v83 = vld [vmem:[%s0 + $0x18] sm:$0xf]
  %v84 = vld [vmem:[%s0 + $0x1c] sm:$0xf]
  %v85 = vld [vmem:[%s2] sm:$0xff]
  %v86 = vld [vmem:[%s2 + $0x8] sm:$0xff]
  %v87 = vld [vmem:[%s2 + $0x10] sm:$0xff]
  %v88 = vld [vmem:[%s2 + $0x18] sm:$0xff]
  %v89 = vld [vmem:[%s2 + $0x20] sm:$0xff]
  %v90 = vld [vmem:[%s2 + $0x28] sm:$0xff]
  %v91 = vld [vmem:[%s2 + $0x30] sm:$0xff]
  %v92 = vld [vmem:[%s2 + $0x38] sm:$0xff]
  %v93 = vld [vmem:[%s2 + $0x40] sm:$0xff]
  %v94 = vld [vmem:[%s2 + $0x48] sm:$0xff]
  %v95 = vld [vmem:[%s2 + $0x50] sm:$0xff]
  %v96 = vld [vmem:[%s2 + $0x58] sm:$0xff]
  %v97 = vld [vmem:[%s2 + $0x60] sm:$0xff]
  %v98 = vld [vmem:[%s2 + $0x68] sm:$0xff]
  %v99 = vld [vmem:[%s2 + $0x70] sm:$0xff]
  %v100 = vld [vmem:[%s2 + $0x78] sm:$0xff]
  %v101 = vld [vmem:[%s2 + $0x80] sm:$0xff]
  %v102 = vld [vmem:[%s2 + $0x88] sm:$0xff]
  %v103 = vld [vmem:[%s2 + $0x90] sm:$0xff]
  %v104 = vld [vmem:[%s2 + $0x98] sm:$0xff]
  %v105 = vld [vmem:[%s2 + $0xa0] sm:$0xff]
  %v106 = vld [vmem:[%s2 + $0xa8] sm:$0xff]
  %v107 = vld [vmem:[%s2 + $0xb0] sm:$0xff]
  %v108 = vld [vmem:[%s2 + $0xb8] sm:$0xff]
  %v109 = vld [vmem:[%s2 + $0xc0] sm:$0xff]
  %v110 = vld [vmem:[%s2 + $0xc8] sm:$0xff]
  %v111 = vld [vmem:[%s2 + $0xd0] sm:$0xff]
  %v112 = vld [vmem:[%s2 + $0xd8] sm:$0xff]
  %v113 = vld [vmem:[%s2 + $0xe0] sm:$0xff]
  %v114 = vld [vmem:[%s2 + $0xe8] sm:$0xff]
  %v115 = vld [vmem:[%s2 + $0xf0] sm:$0xff]
  %v116 = vld [vmem:[%s2 + $0xf8] sm:$0xff]
  %v117 = vld [vmem:[%s6] sm:$0xf]
  %v119 = vperm.slane %v117, 0
  %v120 = vperm.slane %v117, 1
  %v121 = vperm.slane %v117, 2
  %v122 = vperm.slane %v117, 3
  %v135 = vunpack.c.l.b16 %v77
  %v136 = vunpack.c.l.b16 %v78
  %v137 = vunpack.c.l.b16 %v79
  %v138 = vunpack.c.l.b16 %v80
  %v139 = vunpack.c.l.b16 %v81
  %v140 = vunpack.c.l.b16 %v82
  %v141 = vunpack.c.l.b16 %v83
  %v142 = vunpack.c.l.b16 %v84
  %v143 = vpack.c.b16 %v136, %v135
  %v144 = vpack.c.b16 %v138, %v137
  %v145 = vpack.c.b16 %v140, %v139
  %v146 = vpack.c.b16 %v142, %v141
  %v183 = vunpack.c.l.b16 %v85
  %v184 = vunpack.c.h.b16 %v85
  %v185 = vunpack.c.l.b16 %v86
  %v186 = vunpack.c.h.b16 %v86
  %v187 = vunpack.c.l.b16 %v87
  %v188 = vunpack.c.h.b16 %v87
  %v189 = vunpack.c.l.b16 %v88
  %v190 = vunpack.c.h.b16 %v88
  %v191 = vunpack.c.l.b16 %v89
  %v192 = vunpack.c.h.b16 %v89
  %v193 = vunpack.c.l.b16 %v90
  %v194 = vunpack.c.h.b16 %v90
  %v195 = vunpack.c.l.b16 %v91
  %v196 = vunpack.c.h.b16 %v91
  %v197 = vunpack.c.l.b16 %v92
  %v198 = vunpack.c.h.b16 %v92
  %v199 = vunpack.c.l.b16 %v93
  %v200 = vunpack.c.h.b16 %v93
  %v201 = vunpack.c.l.b16 %v94
  %v202 = vunpack.c.h.b16 %v94
  %v203 = vunpack.c.l.b16 %v95
  %v204 = vunpack.c.h.b16 %v95
  %v205 = vunpack.c.l.b16 %v96
  %v206 = vunpack.c.h.b16 %v96
  %v207 = vunpack.c.l.b16 %v97
  %v208 = vunpack.c.h.b16 %v97
  %v209 = vunpack.c.l.b16 %v98
  %v210 = vunpack.c.h.b16 %v98
  %v211 = vunpack.c.l.b16 %v99
  %v212 = vunpack.c.h.b16 %v99
  %v213 = vunpack.c.l.b16 %v100
  %v214 = vunpack.c.h.b16 %v100
  %v215 = vunpack.c.l.b16 %v101
  %v216 = vunpack.c.h.b16 %v101
  %v217 = vunpack.c.l.b16 %v102
  %v218 = vunpack.c.h.b16 %v102
  %v219 = vunpack.c.l.b16 %v103
  %v220 = vunpack.c.h.b16 %v103
  %v221 = vunpack.c.l.b16 %v104
  %v222 = vunpack.c.h.b16 %v104
  %v223 = vunpack.c.l.b16 %v105
  %v224 = vunpack.c.h.b16 %v105
  %v225 = vunpack.c.l.b16 %v106
  %v226 = vunpack.c.h.b16 %v106
  %v227 = vunpack.c.l.b16 %v107
  %v228 = vunpack.c.h.b16 %v107
  %v229 = vunpack.c.l.b16 %v108
  %v230 = vunpack.c.h.b16 %v108
  %v231 = vunpack.c.l.b16 %v109
  %v232 = vunpack.c.h.b16 %v109
  %v233 = vunpack.c.l.b16 %v110
  %v234 = vunpack.c.h.b16 %v110
  %v235 = vunpack.c.l.b16 %v111
  %v236 = vunpack.c.h.b16 %v111
  %v237 = vunpack.c.l.b16 %v112
  %v238 = vunpack.c.h.b16 %v112
  %v239 = vunpack.c.l.b16 %v113
  %v240 = vunpack.c.h.b16 %v113
  %v241 = vunpack.c.l.b16 %v114
  %v242 = vunpack.c.h.b16 %v114
  %v243 = vunpack.c.l.b16 %v115
  %v244 = vunpack.c.h.b16 %v115
  %v245 = vunpack.c.l.b16 %v116
  %v246 = vunpack.c.h.b16 %v116
  %v247 = vpack.c.b16 %v187, %v183
  %v248 = vpack.c.b16 %v188, %v184
  %v249 = vpack.c.b16 %v189, %v185
  %v250 = vpack.c.b16 %v190, %v186
  %v251 = vpack.c.b16 %v195, %v191
  %v252 = vpack.c.b16 %v196, %v192
  %v253 = vpack.c.b16 %v197, %v193
  %v254 = vpack.c.b16 %v198, %v194
  %v255 = vpack.c.b16 %v203, %v199
  %v256 = vpack.c.b16 %v204, %v200
  %v257 = vpack.c.b16 %v205, %v201
  %v258 = vpack.c.b16 %v206, %v202
  %v259 = vpack.c.b16 %v211, %v207
  %v260 = vpack.c.b16 %v212, %v208
  %v261 = vpack.c.b16 %v213, %v209
  %v262 = vpack.c.b16 %v214, %v210
  %v263 = vpack.c.b16 %v219, %v215
  %v264 = vpack.c.b16 %v220, %v216
  %v265 = vpack.c.b16 %v221, %v217
  %v266 = vpack.c.b16 %v222, %v218
  %v267 = vpack.c.b16 %v227, %v223
  %v268 = vpack.c.b16 %v228, %v224
  %v269 = vpack.c.b16 %v229, %v225
  %v270 = vpack.c.b16 %v230, %v226
  %v271 = vpack.c.b16 %v235, %v231
  %v272 = vpack.c.b16 %v236, %v232
  %v273 = vpack.c.b16 %v237, %v233
  %v274 = vpack.c.b16 %v238, %v234
  %v275 = vpack.c.b16 %v243, %v239
  %v276 = vpack.c.b16 %v244, %v240
  %v277 = vpack.c.b16 %v245, %v241
  %v278 = vpack.c.b16 %v246, %v242
  %311 = vmatpush.bf16.msra.mxu0 %v275
  %312 = vmatpush.bf16.msra.mxu0 %v271
  %313 = vmatpush.bf16.msra.mxu0 %v267
  %314 = vmatpush.bf16.msra.mxu0 %v263
  %315 = vmatpush.bf16.msra.mxu0 %v259
  %316 = vmatpush.bf16.msra.mxu0 %v255
  %317 = vmatpush.bf16.msra.mxu0 %v251
  %318 = vmatpush.bf16.msra.mxu0 %v247
  %319 = vmatmul.bf16.gmra.mxu0 %v143
  %v320 = vpop.f32.mrf.mxu0
  %v321 = vadd.f32 %v119, %v320
  %v322 = vpop.f32.mrf.mxu0
  %v323 = vadd.f32 %v119, %v322
  %324 = vmatmul.bf16.gmra.mxu0 %v144
  %v325 = vpop.f32.mrf.mxu0
  %v326 = vadd.f32 %v119, %v325
  %v327 = vpop.f32.mrf.mxu0
  %v328 = vadd.f32 %v119, %v327
  %329 = vmatmul.bf16.gmra.mxu0 %v145
  %v330 = vpop.f32.mrf.mxu0
  %v331 = vadd.f32 %v119, %v330
  %v332 = vpop.f32.mrf.mxu0
  %v333 = vadd.f32 %v119, %v332
  %334 = vmatmul.bf16.gmra.mxu0 %v146
  %v335 = vpop.f32.mrf.mxu0
  %v336 = vadd.f32 %v119, %v335
  %v337 = vpop.f32.mrf.mxu0
  %v338 = vadd.f32 %v119, %v337
  %339 = vdwg.mxu0
  %340 = vmatpush.bf16.msra.mxu0 %v276
  %341 = vmatpush.bf16.msra.mxu0 %v272
  %342 = vmatpush.bf16.msra.mxu0 %v268
  %343 = vmatpush.bf16.msra.mxu0 %v264
  %344 = vmatpush.bf16.msra.mxu0 %v260
  %345 = vmatpush.bf16.msra.mxu0 %v256
  %346 = vmatpush.bf16.msra.mxu0 %v252
  %347 = vmatpush.bf16.msra.mxu0 %v248
  %348 = vmatmul.bf16.gmra.mxu0 %v143
  %v349 = vpop.f32.mrf.mxu0
  %v350 = vadd.f32 %v120, %v349
  %v351 = vpop.f32.mrf.mxu0
  %v352 = vadd.f32 %v120, %v351
  %353 = vmatmul.bf16.gmra.mxu0 %v144
  %v354 = vpop.f32.mrf.mxu0
  %v355 = vadd.f32 %v120, %v354
  %v356 = vpop.f32.mrf.mxu0
  %v357 = vadd.f32 %v120, %v356
  %358 = vmatmul.bf16.gmra.mxu0 %v145
  %v359 = vpop.f32.mrf.mxu0
  %v360 = vadd.f32 %v120, %v359
  %v361 = vpop.f32.mrf.mxu0
  %v362 = vadd.f32 %v120, %v361
  %363 = vmatmul.bf16.gmra.mxu0 %v146
  %v364 = vpop.f32.mrf.mxu0
  %v365 = vadd.f32 %v120, %v364
  %v366 = vpop.f32.mrf.mxu0
  %v367 = vadd.f32 %v120, %v366
  %368 = vdwg.mxu0
  %369 = vmatpush.bf16.msra.mxu0 %v277
  %370 = vmatpush.bf16.msra.mxu0 %v273
  %371 = vmatpush.bf16.msra.mxu0 %v269
  %372 = vmatpush.bf16.msra.mxu0 %v265
  %373 = vmatpush.bf16.msra.mxu0 %v261
  %374 = vmatpush.bf16.msra.mxu0 %v257
  %375 = vmatpush.bf16.msra.mxu0 %v253
  %376 = vmatpush.bf16.msra.mxu0 %v249
  %377 = vmatmul.bf16.gmra.mxu0 %v143
  %v378 = vpop.f32.mrf.mxu0
  %v379 = vadd.f32 %v121, %v378
  %v380 = vpop.f32.mrf.mxu0
  %v381 = vadd.f32 %v121, %v380
  %382 = vmatmul.bf16.gmra.mxu0 %v144
  %v383 = vpop.f32.mrf.mxu0
  %v384 = vadd.f32 %v121, %v383
  %v385 = vpop.f32.mrf.mxu0
  %v386 = vadd.f32 %v121, %v385
  %387 = vmatmul.bf16.gmra.mxu0 %v145
  %v388 = vpop.f32.mrf.mxu0
  %v389 = vadd.f32 %v121, %v388
  %v390 = vpop.f32.mrf.mxu0
  %v391 = vadd.f32 %v121, %v390
  %392 = vmatmul.bf16.gmra.mxu0 %v146
  %v393 = vpop.f32.mrf.mxu0
  %v394 = vadd.f32 %v121, %v393
  %v395 = vpop.f32.mrf.mxu0
  %v396 = vadd.f32 %v121, %v395
  %397 = vdwg.mxu0
  %398 = vmatpush.bf16.msra.mxu0 %v278
  %399 = vmatpush.bf16.msra.mxu0 %v274
  %400 = vmatpush.bf16.msra.mxu0 %v270
  %401 = vmatpush.bf16.msra.mxu0 %v266
  %402 = vmatpush.bf16.msra.mxu0 %v262
  %403 = vmatpush.bf16.msra.mxu0 %v258
  %404 = vmatpush.bf16.msra.mxu0 %v254
  %405 = vmatpush.bf16.msra.mxu0 %v250
  %406 = vmatmul.bf16.gmra.mxu0 %v143
  %v407 = vpop.f32.mrf.mxu0
  %v408 = vadd.f32 %v122, %v407
  %v409 = vpop.f32.mrf.mxu0
  %v410 = vadd.f32 %v122, %v409
  %411 = vmatmul.bf16.gmra.mxu0 %v144
  %v412 = vpop.f32.mrf.mxu0
  %v413 = vadd.f32 %v122, %v412
  %v414 = vpop.f32.mrf.mxu0
  %v415 = vadd.f32 %v122, %v414
  %416 = vmatmul.bf16.gmra.mxu0 %v145
  %v417 = vpop.f32.mrf.mxu0
  %v418 = vadd.f32 %v122, %v417
  %v419 = vpop.f32.mrf.mxu0
  %v420 = vadd.f32 %v122, %v419
  %421 = vmatmul.bf16.gmra.mxu0 %v146
  %v422 = vpop.f32.mrf.mxu0
  %v423 = vadd.f32 %v122, %v422
  %v424 = vpop.f32.mrf.mxu0
  %v425 = vadd.f32 %v122, %v424
  %426 = vdwg.mxu0
  %427 = vst [vmem:[#allocation2] sm:$0xff] %v321
  %428 = vst [vmem:[#allocation2 + $0x8] sm:$0xff] %v350
  %429 = vst [vmem:[#allocation2 + $0x10] sm:$0xff] %v379
  %430 = vst [vmem:[#allocation2 + $0x18] sm:$0xff] %v408
  %431 = vst [vmem:[#allocation2 + $0x20] sm:$0xff] %v323
  %432 = vst [vmem:[#allocation2 + $0x28] sm:$0xff] %v352
  %433 = vst [vmem:[#allocation2 + $0x30] sm:$0xff] %v381
  %434 = vst [vmem:[#allocation2 + $0x38] sm:$0xff] %v410
  %435 = vst [vmem:[#allocation2 + $0x40] sm:$0xff] %v326
  %436 = vst [vmem:[#allocation2 + $0x48] sm:$0xff] %v355
  %437 = vst [vmem:[#allocation2 + $0x50] sm:$0xff] %v384
  %438 = vst [vmem:[#allocation2 + $0x58] sm:$0xff] %v413
  %439 = vst [vmem:[#allocation2 + $0x60] sm:$0xff] %v328
  %440 = vst [vmem:[#allocation2 + $0x68] sm:$0xff] %v357
  %441 = vst [vmem:[#allocation2 + $0x70] sm:$0xff] %v386
  %442 = vst [vmem:[#allocation2 + $0x78] sm:$0xff] %v415
  %443 = vst [vmem:[#allocation2 + $0x80] sm:$0xff] %v331
  %444 = vst [vmem:[#allocation2 + $0x88] sm:$0xff] %v360
  %445 = vst [vmem:[#allocation2 + $0x90] sm:$0xff] %v389
  %446 = vst [vmem:[#allocation2 + $0x98] sm:$0xff] %v418
  %447 = vst [vmem:[#allocation2 + $0xa0] sm:$0xff] %v333
  %448 = vst [vmem:[#allocation2 + $0xa8] sm:$0xff] %v362
  %449 = vst [vmem:[#allocation2 + $0xb0] sm:$0xff] %v391
  %450 = vst [vmem:[#allocation2 + $0xb8] sm:$0xff] %v420
  %451 = vst [vmem:[#allocation2 + $0xc0] sm:$0xff] %v336
  %452 = vst [vmem:[#allocation2 + $0xc8] sm:$0xff] %v365
  %453 = vst [vmem:[#allocation2 + $0xd0] sm:$0xff] %v394
  %454 = vst [vmem:[#allocation2 + $0xd8] sm:$0xff] %v423
  %455 = vst [vmem:[#allocation2 + $0xe0] sm:$0xff] %v338
  %456 = vst [vmem:[#allocation2 + $0xe8] sm:$0xff] %v367
  %457 = vst [vmem:[#allocation2 + $0xf0] sm:$0xff] %v396
  %458 = vst [vmem:[#allocation2 + $0xf8] sm:$0xff] %v425
  %v459 = vld [vmem:[%s58] sm:$0xf]
  %v460 = vld [vmem:[%s58 + $0x4] sm:$0xf]
  %v461 = vld [vmem:[%s58 + $0x8] sm:$0xf]
  %v462 = vld [vmem:[%s58 + $0xc] sm:$0xf]
  %v463 = vld [vmem:[%s58 + $0x10] sm:$0xf]
  %v464 = vld [vmem:[%s58 + $0x14] sm:$0xf]
  %v465 = vld [vmem:[%s58 + $0x18] sm:$0xf]
  %v466 = vld [vmem:[%s58 + $0x1c] sm:$0xf]
  %v467 = vld [vmem:[%s3] sm:$0xff]
  %v468 = vld [vmem:[%s3 + $0x8] sm:$0xff]
  %v469 = vld [vmem:[%s3 + $0x10] sm:$0xff]
  %v470 = vld [vmem:[%s3 + $0x18] sm:$0xff]
  %v471 = vld [vmem:[%s3 + $0x20] sm:$0xff]
  %v472 = vld [vmem:[%s3 + $0x28] sm:$0xff]
  %v473 = vld [vmem:[%s3 + $0x30] sm:$0xff]
  %v474 = vld [vmem:[%s3 + $0x38] sm:$0xff]
  %v475 = vld [vmem:[%s3 + $0x40] sm:$0xff]
  %v476 = vld [vmem:[%s3 + $0x48] sm:$0xff]
  %v477 = vld [vmem:[%s3 + $0x50] sm:$0xff]
  %v478 = vld [vmem:[%s3 + $0x58] sm:$0xff]
  %v479 = vld [vmem:[%s3 + $0x60] sm:$0xff]
  %v480 = vld [vmem:[%s3 + $0x68] sm:$0xff]
  %v481 = vld [vmem:[%s3 + $0x70] sm:$0xff]
  %v482 = vld [vmem:[%s3 + $0x78] sm:$0xff]
  %v483 = vld [vmem:[%s3 + $0x80] sm:$0xff]
  %v484 = vld [vmem:[%s3 + $0x88] sm:$0xff]
  %v485 = vld [vmem:[%s3 + $0x90] sm:$0xff]
  %v486 = vld [vmem:[%s3 + $0x98] sm:$0xff]
  %v487 = vld [vmem:[%s3 + $0xa0] sm:$0xff]
  %v488 = vld [vmem:[%s3 + $0xa8] sm:$0xff]
  %v489 = vld [vmem:[%s3 + $0xb0] sm:$0xff]
  %v490 = vld [vmem:[%s3 + $0xb8] sm:$0xff]
  %v491 = vld [vmem:[%s3 + $0xc0] sm:$0xff]
  %v492 = vld [vmem:[%s3 + $0xc8] sm:$0xff]
  %v493 = vld [vmem:[%s3 + $0xd0] sm:$0xff]
  %v494 = vld [vmem:[%s3 + $0xd8] sm:$0xff]
  %v495 = vld [vmem:[%s3 + $0xe0] sm:$0xff]
  %v496 = vld [vmem:[%s3 + $0xe8] sm:$0xff]
  %v497 = vld [vmem:[%s3 + $0xf0] sm:$0xff]
  %v498 = vld [vmem:[%s3 + $0xf8] sm:$0xff]
  %v499 = vld [vmem:[%s7] sm:$0xf]
  %v501 = vperm.slane %v499, 0
  %v502 = vperm.slane %v499, 1
  %v503 = vperm.slane %v499, 2
  %v504 = vperm.slane %v499, 3
  %v517 = vunpack.c.l.b16 %v459
  %v518 = vunpack.c.l.b16 %v460
  %v519 = vunpack.c.l.b16 %v461
  %v520 = vunpack.c.l.b16 %v462
  %v521 = vunpack.c.l.b16 %v463
  %v522 = vunpack.c.l.b16 %v464
  %v523 = vunpack.c.l.b16 %v465
  %v524 = vunpack.c.l.b16 %v466
  %v525 = vpack.c.b16 %v518, %v517
  %v526 = vpack.c.b16 %v520, %v519
  %v527 = vpack.c.b16 %v522, %v521
  %v528 = vpack.c.b16 %v524, %v523
  %v565 = vunpack.c.l.b16 %v467
  %v566 = vunpack.c.h.b16 %v467
  %v567 = vunpack.c.l.b16 %v468
  %v568 = vunpack.c.h.b16 %v468
  %v569 = vunpack.c.l.b16 %v469
  %v570 = vunpack.c.h.b16 %v469
  %v571 = vunpack.c.l.b16 %v470
  %v572 = vunpack.c.h.b16 %v470
  %v573 = vunpack.c.l.b16 %v471
  %v574 = vunpack.c.h.b16 %v471
  %v575 = vunpack.c.l.b16 %v472
  %v576 = vunpack.c.h.b16 %v472
  %v577 = vunpack.c.l.b16 %v473
  %v578 = vunpack.c.h.b16 %v473
  %v579 = vunpack.c.l.b16 %v474
  %v580 = vunpack.c.h.b16 %v474
  %v581 = vunpack.c.l.b16 %v475
  %v582 = vunpack.c.h.b16 %v475
  %v583 = vunpack.c.l.b16 %v476
  %v584 = vunpack.c.h.b16 %v476
  %v585 = vunpack.c.l.b16 %v477
  %v586 = vunpack.c.h.b16 %v477
  %v587 = vunpack.c.l.b16 %v478
  %v588 = vunpack.c.h.b16 %v478
  %v589 = vunpack.c.l.b16 %v479
  %v590 = vunpack.c.h.b16 %v479
  %v591 = vunpack.c.l.b16 %v480
  %v592 = vunpack.c.h.b16 %v480
  %v593 = vunpack.c.l.b16 %v481
  %v594 = vunpack.c.h.b16 %v481
  %v595 = vunpack.c.l.b16 %v482
  %v596 = vunpack.c.h.b16 %v482
  %v597 = vunpack.c.l.b16 %v483
  %v598 = vunpack.c.h.b16 %v483
  %v599 = vunpack.c.l.b16 %v484
  %v600 = vunpack.c.h.b16 %v484
  %v601 = vunpack.c.l.b16 %v485
  %v602 = vunpack.c.h.b16 %v485
  %v603 = vunpack.c.l.b16 %v486
  %v604 = vunpack.c.h.b16 %v486
  %v605 = vunpack.c.l.b16 %v487
  %v606 = vunpack.c.h.b16 %v487
  %v607 = vunpack.c.l.b16 %v488
  %v608 = vunpack.c.h.b16 %v488
  %v609 = vunpack.c.l.b16 %v489
  %v610 = vunpack.c.h.b16 %v489
  %v611 = vunpack.c.l.b16 %v490
  %v612 = vunpack.c.h.b16 %v490
  %v613 = vunpack.c.l.b16 %v491
  %v614 = vunpack.c.h.b16 %v491
  %v615 = vunpack.c.l.b16 %v492
  %v616 = vunpack.c.h.b16 %v492
  %v617 = vunpack.c.l.b16 %v493
  %v618 = vunpack.c.h.b16 %v493
  %v619 = vunpack.c.l.b16 %v494
  %v620 = vunpack.c.h.b16 %v494
  %v621 = vunpack.c.l.b16 %v495
  %v622 = vunpack.c.h.b16 %v495
  %v623 = vunpack.c.l.b16 %v496
  %v624 = vunpack.c.h.b16 %v496
  %v625 = vunpack.c.l.b16 %v497
  %v626 = vunpack.c.h.b16 %v497
  %v627 = vunpack.c.l.b16 %v498
  %v628 = vunpack.c.h.b16 %v498
  %v629 = vpack.c.b16 %v569, %v565
  %v630 = vpack.c.b16 %v570, %v566
  %v631 = vpack.c.b16 %v571, %v567
  %v632 = vpack.c.b16 %v572, %v568
  %v633 = vpack.c.b16 %v577, %v573
  %v634 = vpack.c.b16 %v578, %v574
  %v635 = vpack.c.b16 %v579, %v575
  %v636 = vpack.c.b16 %v580, %v576
  %v637 = vpack.c.b16 %v585, %v581
  %v638 = vpack.c.b16 %v586, %v582
  %v639 = vpack.c.b16 %v587, %v583
  %v640 = vpack.c.b16 %v588, %v584
  %v641 = vpack.c.b16 %v593, %v589
  %v642 = vpack.c.b16 %v594, %v590
  %v643 = vpack.c.b16 %v595, %v591
  %v644 = vpack.c.b16 %v596, %v592
  %v645 = vpack.c.b16 %v601, %v597
  %v646 = vpack.c.b16 %v602, %v598
  %v647 = vpack.c.b16 %v603, %v599
  %v648 = vpack.c.b16 %v604, %v600
  %v649 = vpack.c.b16 %v609, %v605
  %v650 = vpack.c.b16 %v610, %v606
  %v651 = vpack.c.b16 %v611, %v607
  %v652 = vpack.c.b16 %v612, %v608
  %v653 = vpack.c.b16 %v617, %v613
  %v654 = vpack.c.b16 %v618, %v614
  %v655 = vpack.c.b16 %v619, %v615
  %v656 = vpack.c.b16 %v620, %v616
  %v657 = vpack.c.b16 %v625, %v621
  %v658 = vpack.c.b16 %v626, %v622
  %v659 = vpack.c.b16 %v627, %v623
  %v660 = vpack.c.b16 %v628, %v624
  %693 = vmatpush.bf16.msra.mxu0 %v657
  %694 = vmatpush.bf16.msra.mxu0 %v653
  %695 = vmatpush.bf16.msra.mxu0 %v649
  %696 = vmatpush.bf16.msra.mxu0 %v645
  %697 = vmatpush.bf16.msra.mxu0 %v641
  %698 = vmatpush.bf16.msra.mxu0 %v637
  %699 = vmatpush.bf16.msra.mxu0 %v633
  %700 = vmatpush.bf16.msra.mxu0 %v629
  %701 = vmatmul.bf16.gmra.mxu0 %v525
  %v702 = vpop.f32.mrf.mxu0
  %v703 = vadd.f32 %v501, %v702
  %v704 = vpop.f32.mrf.mxu0
  %v705 = vadd.f32 %v501, %v704
  %706 = vmatmul.bf16.gmra.mxu0 %v526
  %v707 = vpop.f32.mrf.mxu0
  %v708 = vadd.f32 %v501, %v707
  %v709 = vpop.f32.mrf.mxu0
  %v710 = vadd.f32 %v501, %v709
  %711 = vmatmul.bf16.gmra.mxu0 %v527
  %v712 = vpop.f32.mrf.mxu0
  %v713 = vadd.f32 %v501, %v712
  %v714 = vpop.f32.mrf.mxu0
  %v715 = vadd.f32 %v501, %v714
  %716 = vmatmul.bf16.gmra.mxu0 %v528
  %v717 = vpop.f32.mrf.mxu0
  %v718 = vadd.f32 %v501, %v717
  %v719 = vpop.f32.mrf.mxu0
  %v720 = vadd.f32 %v501, %v719
  %721 = vdwg.mxu0
  %722 = vmatpush.bf16.msra.mxu0 %v658
  %723 = vmatpush.bf16.msra.mxu0 %v654
  %724 = vmatpush.bf16.msra.mxu0 %v650
  %725 = vmatpush.bf16.msra.mxu0 %v646
  %726 = vmatpush.bf16.msra.mxu0 %v642
  %727 = vmatpush.bf16.msra.mxu0 %v638
  %728 = vmatpush.bf16.msra.mxu0 %v634
  %729 = vmatpush.bf16.msra.mxu0 %v630
  %730 = vmatmul.bf16.gmra.mxu0 %v525
  %v731 = vpop.f32.mrf.mxu0
  %v732 = vadd.f32 %v502, %v731
  %v733 = vpop.f32.mrf.mxu0
  %v734 = vadd.f32 %v502, %v733
  %735 = vmatmul.bf16.gmra.mxu0 %v526
  %v736 = vpop.f32.mrf.mxu0
  %v737 = vadd.f32 %v502, %v736
  %v738 = vpop.f32.mrf.mxu0
  %v739 = vadd.f32 %v502, %v738
  %740 = vmatmul.bf16.gmra.mxu0 %v527
  %v741 = vpop.f32.mrf.mxu0
  %v742 = vadd.f32 %v502, %v741
  %v743 = vpop.f32.mrf.mxu0
  %v744 = vadd.f32 %v502, %v743
  %745 = vmatmul.bf16.gmra.mxu0 %v528
  %v746 = vpop.f32.mrf.mxu0
  %v747 = vadd.f32 %v502, %v746
  %v748 = vpop.f32.mrf.mxu0
  %v749 = vadd.f32 %v502, %v748
  %750 = vdwg.mxu0
  %751 = vmatpush.bf16.msra.mxu0 %v659
  %752 = vmatpush.bf16.msra.mxu0 %v655
  %753 = vmatpush.bf16.msra.mxu0 %v651
  %754 = vmatpush.bf16.msra.mxu0 %v647
  %755 = vmatpush.bf16.msra.mxu0 %v643
  %756 = vmatpush.bf16.msra.mxu0 %v639
  %757 = vmatpush.bf16.msra.mxu0 %v635
  %758 = vmatpush.bf16.msra.mxu0 %v631
  %759 = vmatmul.bf16.gmra.mxu0 %v525
  %v760 = vpop.f32.mrf.mxu0
  %v761 = vadd.f32 %v503, %v760
  %v762 = vpop.f32.mrf.mxu0
  %v763 = vadd.f32 %v503, %v762
  %764 = vmatmul.bf16.gmra.mxu0 %v526
  %v765 = vpop.f32.mrf.mxu0
  %v766 = vadd.f32 %v503, %v765
  %v767 = vpop.f32.mrf.mxu0
  %v768 = vadd.f32 %v503, %v767
  %769 = vmatmul.bf16.gmra.mxu0 %v527
  %v770 = vpop.f32.mrf.mxu0
  %v771 = vadd.f32 %v503, %v770
  %v772 = vpop.f32.mrf.mxu0
  %v773 = vadd.f32 %v503, %v772
  %774 = vmatmul.bf16.gmra.mxu0 %v528
  %v775 = vpop.f32.mrf.mxu0
  %v776 = vadd.f32 %v503, %v775
  %v777 = vpop.f32.mrf.mxu0
  %v778 = vadd.f32 %v503, %v777
  %779 = vdwg.mxu0
  %780 = vmatpush.bf16.msra.mxu0 %v660
  %781 = vmatpush.bf16.msra.mxu0 %v656
  %782 = vmatpush.bf16.msra.mxu0 %v652
  %783 = vmatpush.bf16.msra.mxu0 %v648
  %784 = vmatpush.bf16.msra.mxu0 %v644
  %785 = vmatpush.bf16.msra.mxu0 %v640
  %786 = vmatpush.bf16.msra.mxu0 %v636
  %787 = vmatpush.bf16.msra.mxu0 %v632
  %788 = vmatmul.bf16.gmra.mxu0 %v525
  %v789 = vpop.f32.mrf.mxu0
  %v790 = vadd.f32 %v504, %v789
  %v791 = vpop.f32.mrf.mxu0
  %v792 = vadd.f32 %v504, %v791
  %793 = vmatmul.bf16.gmra.mxu0 %v526
  %v794 = vpop.f32.mrf.mxu0
  %v795 = vadd.f32 %v504, %v794
  %v796 = vpop.f32.mrf.mxu0
  %v797 = vadd.f32 %v504, %v796
  %798 = vmatmul.bf16.gmra.mxu0 %v527
  %v799 = vpop.f32.mrf.mxu0
  %v800 = vadd.f32 %v504, %v799
  %v801 = vpop.f32.mrf.mxu0
  %v802 = vadd.f32 %v504, %v801
  %803 = vmatmul.bf16.gmra.mxu0 %v528
  %v804 = vpop.f32.mrf.mxu0
  %v805 = vadd.f32 %v504, %v804
  %v806 = vpop.f32.mrf.mxu0
  %v807 = vadd.f32 %v504, %v806
  %808 = vdwg.mxu0
  %809 = vst [vmem:[#allocation3] sm:$0xff] %v703
  %810 = vst [vmem:[#allocation3 + $0x8] sm:$0xff] %v732
  %811 = vst [vmem:[#allocation3 + $0x10] sm:$0xff] %v761
  %812 = vst [vmem:[#allocation3 + $0x18] sm:$0xff] %v790
  %813 = vst [vmem:[#allocation3 + $0x20] sm:$0xff] %v705
  %814 = vst [vmem:[#allocation3 + $0x28] sm:$0xff] %v734
  %815 = vst [vmem:[#allocation3 + $0x30] sm:$0xff] %v763
  %816 = vst [vmem:[#allocation3 + $0x38] sm:$0xff] %v792
  %817 = vst [vmem:[#allocation3 + $0x40] sm:$0xff] %v708
  %818 = vst [vmem:[#allocation3 + $0x48] sm:$0xff] %v737
  %819 = vst [vmem:[#allocation3 + $0x50] sm:$0xff] %v766
  %820 = vst [vmem:[#allocation3 + $0x58] sm:$0xff] %v795
  %821 = vst [vmem:[#allocation3 + $0x60] sm:$0xff] %v710
  %822 = vst [vmem:[#allocation3 + $0x68] sm:$0xff] %v739
  %823 = vst [vmem:[#allocation3 + $0x70] sm:$0xff] %v768
  %824 = vst [vmem:[#allocation3 + $0x78] sm:$0xff] %v797
  %825 = vst [vmem:[#allocation3 + $0x80] sm:$0xff] %v713
  %826 = vst [vmem:[#allocation3 + $0x88] sm:$0xff] %v742
  %827 = vst [vmem:[#allocation3 + $0x90] sm:$0xff] %v771
  %828 = vst [vmem:[#allocation3 + $0x98] sm:$0xff] %v800
  %829 = vst [vmem:[#allocation3 + $0xa0] sm:$0xff] %v715
  %830 = vst [vmem:[#allocation3 + $0xa8] sm:$0xff] %v744
  %831 = vst [vmem:[#allocation3 + $0xb0] sm:$0xff] %v773
  %832 = vst [vmem:[#allocation3 + $0xb8] sm:$0xff] %v802
  %833 = vst [vmem:[#allocation3 + $0xc0] sm:$0xff] %v718
  %834 = vst [vmem:[#allocation3 + $0xc8] sm:$0xff] %v747
  %835 = vst [vmem:[#allocation3 + $0xd0] sm:$0xff] %v776
  %836 = vst [vmem:[#allocation3 + $0xd8] sm:$0xff] %v805
  %837 = vst [vmem:[#allocation3 + $0xe0] sm:$0xff] %v720
  %838 = vst [vmem:[#allocation3 + $0xe8] sm:$0xff] %v749
  %839 = vst [vmem:[#allocation3 + $0xf0] sm:$0xff] %v778
  %840 = vst [vmem:[#allocation3 + $0xf8] sm:$0xff] %v807
  %v841 = vld [vmem:[%s4] sm:$0xff]
  %v842 = vld [vmem:[%s4 + $0x8] sm:$0xff]
  %v843 = vld [vmem:[%s4 + $0x10] sm:$0xff]
  %v844 = vld [vmem:[%s4 + $0x18] sm:$0xff]
  %v845 = vld [vmem:[%s4 + $0x20] sm:$0xff]
  %v846 = vld [vmem:[%s4 + $0x28] sm:$0xff]
  %v847 = vld [vmem:[%s4 + $0x30] sm:$0xff]
  %v848 = vld [vmem:[%s4 + $0x38] sm:$0xff]
  %v849 = vld [vmem:[%s4 + $0x40] sm:$0xff]
  %v850 = vld [vmem:[%s4 + $0x48] sm:$0xff]
  %v851 = vld [vmem:[%s4 + $0x50] sm:$0xff]
  %v852 = vld [vmem:[%s4 + $0x58] sm:$0xff]
  %v853 = vld [vmem:[%s4 + $0x60] sm:$0xff]
  %v854 = vld [vmem:[%s4 + $0x68] sm:$0xff]
  %v855 = vld [vmem:[%s4 + $0x70] sm:$0xff]
  %v856 = vld [vmem:[%s4 + $0x78] sm:$0xff]
  %v857 = vld [vmem:[%s4 + $0x80] sm:$0xff]
  %v858 = vld [vmem:[%s4 + $0x88] sm:$0xff]
  %v859 = vld [vmem:[%s4 + $0x90] sm:$0xff]
  %v860 = vld [vmem:[%s4 + $0x98] sm:$0xff]
  %v861 = vld [vmem:[%s4 + $0xa0] sm:$0xff]
  %v862 = vld [vmem:[%s4 + $0xa8] sm:$0xff]
  %v863 = vld [vmem:[%s4 + $0xb0] sm:$0xff]
  %v864 = vld [vmem:[%s4 + $0xb8] sm:$0xff]
  %v865 = vld [vmem:[%s4 + $0xc0] sm:$0xff]
  %v866 = vld [vmem:[%s4 + $0xc8] sm:$0xff]
  %v867 = vld [vmem:[%s4 + $0xd0] sm:$0xff]
  %v868 = vld [vmem:[%s4 + $0xd8] sm:$0xff]
  %v869 = vld [vmem:[%s4 + $0xe0] sm:$0xff]
  %v870 = vld [vmem:[%s4 + $0xe8] sm:$0xff]
  %v871 = vld [vmem:[%s4 + $0xf0] sm:$0xff]
  %v872 = vld [vmem:[%s4 + $0xf8] sm:$0xff]
  %v873 = vld [vmem:[%s5] sm:$0xff]
  %v874 = vld [vmem:[%s5 + $0x8] sm:$0xff]
  %v875 = vld [vmem:[%s5 + $0x10] sm:$0xff]
  %v876 = vld [vmem:[%s5 + $0x18] sm:$0xff]
  %v877 = vld [vmem:[%s5 + $0x20] sm:$0xff]
  %v878 = vld [vmem:[%s5 + $0x28] sm:$0xff]
  %v879 = vld [vmem:[%s5 + $0x30] sm:$0xff]
  %v880 = vld [vmem:[%s5 + $0x38] sm:$0xff]
  %v881 = vld [vmem:[%s5 + $0x40] sm:$0xff]
  %v882 = vld [vmem:[%s5 + $0x48] sm:$0xff]
  %v883 = vld [vmem:[%s5 + $0x50] sm:$0xff]
  %v884 = vld [vmem:[%s5 + $0x58] sm:$0xff]
  %v885 = vld [vmem:[%s5 + $0x60] sm:$0xff]
  %v886 = vld [vmem:[%s5 + $0x68] sm:$0xff]
  %v887 = vld [vmem:[%s5 + $0x70] sm:$0xff]
  %v888 = vld [vmem:[%s5 + $0x78] sm:$0xff]
  %v889 = vld [vmem:[%s5 + $0x80] sm:$0xff]
  %v890 = vld [vmem:[%s5 + $0x88] sm:$0xff]
  %v891 = vld [vmem:[%s5 + $0x90] sm:$0xff]
  %v892 = vld [vmem:[%s5 + $0x98] sm:$0xff]
  %v893 = vld [vmem:[%s5 + $0xa0] sm:$0xff]
  %v894 = vld [vmem:[%s5 + $0xa8] sm:$0xff]
  %v895 = vld [vmem:[%s5 + $0xb0] sm:$0xff]
  %v896 = vld [vmem:[%s5 + $0xb8] sm:$0xff]
  %v897 = vld [vmem:[%s5 + $0xc0] sm:$0xff]
  %v898 = vld [vmem:[%s5 + $0xc8] sm:$0xff]
  %v899 = vld [vmem:[%s5 + $0xd0] sm:$0xff]
  %v900 = vld [vmem:[%s5 + $0xd8] sm:$0xff]
  %v901 = vld [vmem:[%s5 + $0xe0] sm:$0xff]
  %v902 = vld [vmem:[%s5 + $0xe8] sm:$0xff]
  %v903 = vld [vmem:[%s5 + $0xf0] sm:$0xff]
  %v904 = vld [vmem:[%s5 + $0xf8] sm:$0xff]
  %v905 = vld [vmem:[#allocation4] sm:$0xff]
  %v906 = vld [vmem:[#allocation5] sm:$0xff]
  %v907 = vld [vmem:[#allocation6] sm:$0xff]
  %v908 = vld [vmem:[#allocation7] sm:$0xff]
  %v909 = vld [vmem:[#allocation2] sm:$0xff]
  %v910 = vld [vmem:[#allocation2 + $0x8] sm:$0xff]
  %v911 = vld [vmem:[#allocation2 + $0x10] sm:$0xff]
  %v912 = vld [vmem:[#allocation2 + $0x18] sm:$0xff]
  %v913 = vpack.c.bf16 %v905, %v905
  %v946 = vunpack.c.l.b16 %v841
  %v947 = vunpack.c.h.b16 %v841
  %v948 = vunpack.c.l.b16 %v842
  %v949 = vunpack.c.h.b16 %v842
  %v950 = vunpack.c.l.b16 %v843
  %v951 = vunpack.c.h.b16 %v843
  %v952 = vunpack.c.l.b16 %v844
  %v953 = vunpack.c.h.b16 %v844
  %v954 = vunpack.c.l.b16 %v845
  %v955 = vunpack.c.h.b16 %v845
  %v956 = vunpack.c.l.b16 %v846
  %v957 = vunpack.c.h.b16 %v846
  %v958 = vunpack.c.l.b16 %v847
  %v959 = vunpack.c.h.b16 %v847
  %v960 = vunpack.c.l.b16 %v848
  %v961 = vunpack.c.h.b16 %v848
  %v962 = vunpack.c.l.b16 %v849
  %v963 = vunpack.c.h.b16 %v849
  %v964 = vunpack.c.l.b16 %v850
  %v965 = vunpack.c.h.b16 %v850
  %v966 = vunpack.c.l.b16 %v851
  %v967 = vunpack.c.h.b16 %v851
  %v968 = vunpack.c.l.b16 %v852
  %v969 = vunpack.c.h.b16 %v852
  %v970 = vunpack.c.l.b16 %v853
  %v971 = vunpack.c.h.b16 %v853
  %v972 = vunpack.c.l.b16 %v854
  %v973 = vunpack.c.h.b16 %v854
  %v974 = vunpack.c.l.b16 %v855
  %v975 = vunpack.c.h.b16 %v855
  %v976 = vunpack.c.l.b16 %v856
  %v977 = vunpack.c.h.b16 %v856
  %v978 = vunpack.c.l.b16 %v857
  %v979 = vunpack.c.h.b16 %v857
  %v980 = vunpack.c.l.b16 %v858
  %v981 = vunpack.c.h.b16 %v858
  %v982 = vunpack.c.l.b16 %v859
  %v983 = vunpack.c.h.b16 %v859
  %v984 = vunpack.c.l.b16 %v860
  %v985 = vunpack.c.h.b16 %v860
  %v986 = vunpack.c.l.b16 %v861
  %v987 = vunpack.c.h.b16 %v861
  %v988 = vunpack.c.l.b16 %v862
  %v989 = vunpack.c.h.b16 %v862
  %v990 = vunpack.c.l.b16 %v863
  %v991 = vunpack.c.h.b16 %v863
  %v992 = vunpack.c.l.b16 %v864
  %v993 = vunpack.c.h.b16 %v864
  %v994 = vunpack.c.l.b16 %v865
  %v995 = vunpack.c.h.b16 %v865
  %v996 = vunpack.c.l.b16 %v866
  %v997 = vunpack.c.h.b16 %v866
  %v998 = vunpack.c.l.b16 %v867
  %v999 = vunpack.c.h.b16 %v867
  %v1000 = vunpack.c.l.b16 %v868
  %v1001 = vunpack.c.h.b16 %v868
  %v1002 = vunpack.c.l.b16 %v869
  %v1003 = vunpack.c.h.b16 %v869
  %v1004 = vunpack.c.l.b16 %v870
  %v1005 = vunpack.c.h.b16 %v870
  %v1006 = vunpack.c.l.b16 %v871
  %v1007 = vunpack.c.h.b16 %v871
  %v1008 = vunpack.c.l.b16 %v872
  %v1009 = vunpack.c.h.b16 %v872
  %v1010 = vpack.c.b16 %v950, %v946
  %v1011 = vpack.c.b16 %v951, %v947
  %v1012 = vpack.c.b16 %v952, %v948
  %v1013 = vpack.c.b16 %v953, %v949
  %v1014 = vpack.c.b16 %v958, %v954
  %v1015 = vpack.c.b16 %v959, %v955
  %v1016 = vpack.c.b16 %v960, %v956
  %v1017 = vpack.c.b16 %v961, %v957
  %v1018 = vpack.c.b16 %v966, %v962
  %v1019 = vpack.c.b16 %v967, %v963
  %v1020 = vpack.c.b16 %v968, %v964
  %v1021 = vpack.c.b16 %v969, %v965
  %v1022 = vpack.c.b16 %v974, %v970
  %v1023 = vpack.c.b16 %v975, %v971
  %v1024 = vpack.c.b16 %v976, %v972
  %v1025 = vpack.c.b16 %v977, %v973
  %v1026 = vpack.c.b16 %v982, %v978
  %v1027 = vpack.c.b16 %v983, %v979
  %v1028 = vpack.c.b16 %v984, %v980
  %v1029 = vpack.c.b16 %v985, %v981
  %v1030 = vpack.c.b16 %v990, %v986
  %v1031 = vpack.c.b16 %v991, %v987
  %v1032 = vpack.c.b16 %v992, %v988
  %v1033 = vpack.c.b16 %v993, %v989
  %v1034 = vpack.c.b16 %v998, %v994
  %v1035 = vpack.c.b16 %v999, %v995
  %v1036 = vpack.c.b16 %v1000, %v996
  %v1037 = vpack.c.b16 %v1001, %v997
  %v1038 = vpack.c.b16 %v1006, %v1002
  %v1039 = vpack.c.b16 %v1007, %v1003
  %v1040 = vpack.c.b16 %v1008, %v1004
  %v1041 = vpack.c.b16 %v1009, %v1005
  %1074 = vmatpush.bf16.msra.mxu0 %v1038
  %1075 = vmatpush.bf16.msra.mxu0 %v1034
  %1076 = vmatpush.bf16.msra.mxu0 %v1030
  %1077 = vmatpush.bf16.msra.mxu0 %v1026
  %1078 = vmatpush.bf16.msra.mxu0 %v1022
  %1079 = vmatpush.bf16.msra.mxu0 %v1018
  %1080 = vmatpush.bf16.msra.mxu0 %v1014
  %1081 = vmatpush.bf16.msra.mxu0 %v1010
  %1082 = vmatmul.bf16.gmra.mxu0 %v913
  %v1083 = vpop.f32.mrf.mxu0
  %v1084 = vadd.f32 0.0, %v1083
  %v1085 = vpop.f32.mrf.mxu0
  %1086 = vdwg.mxu0
  %1087 = vmatpush.bf16.msra.mxu0 %v1039
  %1088 = vmatpush.bf16.msra.mxu0 %v1035
  %1089 = vmatpush.bf16.msra.mxu0 %v1031
  %1090 = vmatpush.bf16.msra.mxu0 %v1027
  %1091 = vmatpush.bf16.msra.mxu0 %v1023
  %1092 = vmatpush.bf16.msra.mxu0 %v1019
  %1093 = vmatpush.bf16.msra.mxu0 %v1015
  %1094 = vmatpush.bf16.msra.mxu0 %v1011
  %1095 = vmatmul.bf16.gmra.mxu0 %v913
  %v1096 = vpop.f32.mrf.mxu0
  %v1097 = vadd.f32 0.0, %v1096
  %v1098 = vpop.f32.mrf.mxu0
  %1099 = vdwg.mxu0
  %1100 = vmatpush.bf16.msra.mxu0 %v1040
  %1101 = vmatpush.bf16.msra.mxu0 %v1036
  %1102 = vmatpush.bf16.msra.mxu0 %v1032
  %1103 = vmatpush.bf16.msra.mxu0 %v1028
  %1104 = vmatpush.bf16.msra.mxu0 %v1024
  %1105 = vmatpush.bf16.msra.mxu0 %v1020
  %1106 = vmatpush.bf16.msra.mxu0 %v1016
  %1107 = vmatpush.bf16.msra.mxu0 %v1012
  %1108 = vmatmul.bf16.gmra.mxu0 %v913
  %v1109 = vpop.f32.mrf.mxu0
  %v1110 = vadd.f32 0.0, %v1109
  %v1111 = vpop.f32.mrf.mxu0
  %1112 = vdwg.mxu0
  %1113 = vmatpush.bf16.msra.mxu0 %v1041
  %1114 = vmatpush.bf16.msra.mxu0 %v1037
  %1115 = vmatpush.bf16.msra.mxu0 %v1033
  %1116 = vmatpush.bf16.msra.mxu0 %v1029
  %1117 = vmatpush.bf16.msra.mxu0 %v1025
  %1118 = vmatpush.bf16.msra.mxu0 %v1021
  %1119 = vmatpush.bf16.msra.mxu0 %v1017
  %1120 = vmatpush.bf16.msra.mxu0 %v1013
  %1121 = vmatmul.bf16.gmra.mxu0 %v913
  %v1122 = vpop.f32.mrf.mxu0
  %v1123 = vadd.f32 0.0, %v1122
  %v1124 = vpop.f32.mrf.mxu0
  %1125 = vdwg.mxu0
  %v1126 = vadd.f32 %v909, %v1084
  %v1127 = vadd.f32 %v910, %v1097
  %v1128 = vadd.f32 %v911, %v1110
  %v1129 = vadd.f32 %v912, %v1123
  %v1130 = vld [vmem:[#allocation3 + $0xe0] sm:$0xff]
  %v1131 = vld [vmem:[#allocation3 + $0xe8] sm:$0xff]
  %v1132 = vld [vmem:[#allocation3 + $0xf0] sm:$0xff]
  %v1133 = vld [vmem:[#allocation3 + $0xf8] sm:$0xff]
  %v1134 = vpack.c.bf16 %v907, %v907
  %v1167 = vunpack.c.l.b16 %v873
  %v1168 = vunpack.c.h.b16 %v873
  %v1169 = vunpack.c.l.b16 %v874
  %v1170 = vunpack.c.h.b16 %v874
  %v1171 = vunpack.c.l.b16 %v875
  %v1172 = vunpack.c.h.b16 %v875
  %v1173 = vunpack.c.l.b16 %v876
  %v1174 = vunpack.c.h.b16 %v876
  %v1175 = vunpack.c.l.b16 %v877
  %v1176 = vunpack.c.h.b16 %v877
  %v1177 = vunpack.c.l.b16 %v878
  %v1178 = vunpack.c.h.b16 %v878
  %v1179 = vunpack.c.l.b16 %v879
  %v1180 = vunpack.c.h.b16 %v879
  %v1181 = vunpack.c.l.b16 %v880
  %v1182 = vunpack.c.h.b16 %v880
  %v1183 = vunpack.c.l.b16 %v881
  %v1184 = vunpack.c.h.b16 %v881
  %v1185 = vunpack.c.l.b16 %v882
  %v1186 = vunpack.c.h.b16 %v882
  %v1187 = vunpack.c.l.b16 %v883
  %v1188 = vunpack.c.h.b16 %v883
  %v1189 = vunpack.c.l.b16 %v884
  %v1190 = vunpack.c.h.b16 %v884
  %v1191 = vunpack.c.l.b16 %v885
  %v1192 = vunpack.c.h.b16 %v885
  %v1193 = vunpack.c.l.b16 %v886
  %v1194 = vunpack.c.h.b16 %v886
  %v1195 = vunpack.c.l.b16 %v887
  %v1196 = vunpack.c.h.b16 %v887
  %v1197 = vunpack.c.l.b16 %v888
  %v1198 = vunpack.c.h.b16 %v888
  %v1199 = vunpack.c.l.b16 %v889
  %v1200 = vunpack.c.h.b16 %v889
  %v1201 = vunpack.c.l.b16 %v890
  %v1202 = vunpack.c.h.b16 %v890
  %v1203 = vunpack.c.l.b16 %v891
  %v1204 = vunpack.c.h.b16 %v891
  %v1205 = vunpack.c.l.b16 %v892
  %v1206 = vunpack.c.h.b16 %v892
  %v1207 = vunpack.c.l.b16 %v893
  %v1208 = vunpack.c.h.b16 %v893
  %v1209 = vunpack.c.l.b16 %v894
  %v1210 = vunpack.c.h.b16 %v894
  %v1211 = vunpack.c.l.b16 %v895
  %v1212 = vunpack.c.h.b16 %v895
  %v1213 = vunpack.c.l.b16 %v896
  %v1214 = vunpack.c.h.b16 %v896
  %v1215 = vunpack.c.l.b16 %v897
  %v1216 = vunpack.c.h.b16 %v897
  %v1217 = vunpack.c.l.b16 %v898
  %v1218 = vunpack.c.h.b16 %v898
  %v1219 = vunpack.c.l.b16 %v899
  %v1220 = vunpack.c.h.b16 %v899
  %v1221 = vunpack.c.l.b16 %v900
  %v1222 = vunpack.c.h.b16 %v900
  %v1223 = vunpack.c.l.b16 %v901
  %v1224 = vunpack.c.h.b16 %v901
  %v1225 = vunpack.c.l.b16 %v902
  %v1226 = vunpack.c.h.b16 %v902
  %v1227 = vunpack.c.l.b16 %v903
  %v1228 = vunpack.c.h.b16 %v903
  %v1229 = vunpack.c.l.b16 %v904
  %v1230 = vunpack.c.h.b16 %v904
  %v1231 = vpack.c.b16 %v1171, %v1167
  %v1232 = vpack.c.b16 %v1172, %v1168
  %v1233 = vpack.c.b16 %v1173, %v1169
  %v1234 = vpack.c.b16 %v1174, %v1170
  %v1235 = vpack.c.b16 %v1179, %v1175
  %v1236 = vpack.c.b16 %v1180, %v1176
  %v1237 = vpack.c.b16 %v1181, %v1177
  %v1238 = vpack.c.b16 %v1182, %v1178
  %v1239 = vpack.c.b16 %v1187, %v1183
  %v1240 = vpack.c.b16 %v1188, %v1184
  %v1241 = vpack.c.b16 %v1189, %v1185
  %v1242 = vpack.c.b16 %v1190, %v1186
  %v1243 = vpack.c.b16 %v1195, %v1191
  %v1244 = vpack.c.b16 %v1196, %v1192
  %v1245 = vpack.c.b16 %v1197, %v1193
  %v1246 = vpack.c.b16 %v1198, %v1194
  %v1247 = vpack.c.b16 %v1203, %v1199
  %v1248 = vpack.c.b16 %v1204, %v1200
  %v1249 = vpack.c.b16 %v1205, %v1201
  %v1250 = vpack.c.b16 %v1206, %v1202
  %v1251 = vpack.c.b16 %v1211, %v1207
  %v1252 = vpack.c.b16 %v1212, %v1208
  %v1253 = vpack.c.b16 %v1213, %v1209
  %v1254 = vpack.c.b16 %v1214, %v1210
  %v1255 = vpack.c.b16 %v1219, %v1215
  %v1256 = vpack.c.b16 %v1220, %v1216
  %v1257 = vpack.c.b16 %v1221, %v1217
  %v1258 = vpack.c.b16 %v1222, %v1218
  %v1259 = vpack.c.b16 %v1227, %v1223
  %v1260 = vpack.c.b16 %v1228, %v1224
  %v1261 = vpack.c.b16 %v1229, %v1225
  %v1262 = vpack.c.b16 %v1230, %v1226
  %1295 = vmatpush.bf16.msra.mxu0 %v1259
  %1296 = vmatpush.bf16.msra.mxu0 %v1255
  %1297 = vmatpush.bf16.msra.mxu0 %v1251
  %1298 = vmatpush.bf16.msra.mxu0 %v1247
  %1299 = vmatpush.bf16.msra.mxu0 %v1243
  %1300 = vmatpush.bf16.msra.mxu0 %v1239
  %1301 = vmatpush.bf16.msra.mxu0 %v1235
  %1302 = vmatpush.bf16.msra.mxu0 %v1231
  %1303 = vmatmul.bf16.gmra.mxu0 %v1134
  %v1304 = vpop.f32.mrf.mxu0
  %v1305 = vadd.f32 0.0, %v1304
  %v1306 = vpop.f32.mrf.mxu0
  %1307 = vdwg.mxu0
  %1308 = vmatpush.bf16.msra.mxu0 %v1260
  %1309 = vmatpush.bf16.msra.mxu0 %v1256
  %1310 = vmatpush.bf16.msra.mxu0 %v1252
  %1311 = vmatpush.bf16.msra.mxu0 %v1248
  %1312 = vmatpush.bf16.msra.mxu0 %v1244
  %1313 = vmatpush.bf16.msra.mxu0 %v1240
  %1314 = vmatpush.bf16.msra.mxu0 %v1236
  %1315 = vmatpush.bf16.msra.mxu0 %v1232
  %1316 = vmatmul.bf16.gmra.mxu0 %v1134
  %v1317 = vpop.f32.mrf.mxu0
  %v1318 = vadd.f32 0.0, %v1317
  %v1319 = vpop.f32.mrf.mxu0
  %1320 = vdwg.mxu0
  %1321 = vmatpush.bf16.msra.mxu0 %v1261
  %1322 = vmatpush.bf16.msra.mxu0 %v1257
  %1323 = vmatpush.bf16.msra.mxu0 %v1253
  %1324 = vmatpush.bf16.msra.mxu0 %v1249
  %1325 = vmatpush.bf16.msra.mxu0 %v1245
  %1326 = vmatpush.bf16.msra.mxu0 %v1241
  %1327 = vmatpush.bf16.msra.mxu0 %v1237
  %1328 = vmatpush.bf16.msra.mxu0 %v1233
  %1329 = vmatmul.bf16.gmra.mxu0 %v1134
  %v1330 = vpop.f32.mrf.mxu0
  %v1331 = vadd.f32 0.0, %v1330
  %v1332 = vpop.f32.mrf.mxu0
  %1333 = vdwg.mxu0
  %1334 = vmatpush.bf16.msra.mxu0 %v1262
  %1335 = vmatpush.bf16.msra.mxu0 %v1258
  %1336 = vmatpush.bf16.msra.mxu0 %v1254
  %1337 = vmatpush.bf16.msra.mxu0 %v1250
  %1338 = vmatpush.bf16.msra.mxu0 %v1246
  %1339 = vmatpush.bf16.msra.mxu0 %v1242
  %1340 = vmatpush.bf16.msra.mxu0 %v1238
  %1341 = vmatpush.bf16.msra.mxu0 %v1234
  %1342 = vmatmul.bf16.gmra.mxu0 %v1134
  %v1343 = vpop.f32.mrf.mxu0
  %v1344 = vadd.f32 0.0, %v1343
  %v1345 = vpop.f32.mrf.mxu0
  %1346 = vdwg.mxu0
  %v1347 = vadd.f32 %v1130, %v1305
  %v1348 = vadd.f32 %v1131, %v1318
  %v1349 = vadd.f32 %v1132, %v1331
  %v1350 = vadd.f32 %v1133, %v1344
  %v1351 = vxor.u32 %v1126, 2147483648
  %v1352 = vmul.f32 %v1351, 1.442695
  %v1353 = vpow.pop %v1352
  %v1354 = vadd.f32 %v1353, 1.0
  %v1355 = vrcp.pop %v1354
  %v1356 = vmul.f32 %v1354, %v1355
  %v1357 = vsub.f32 1.0, %v1356
  %v1358 = vmul.f32 %v1355, %v1357
  %v1359 = vadd.f32 %v1355, %v1358
  %vm1360 = vweird.f32 %v1354
  %vm1361 = vweird.f32 %v1355
  %vm1362 = vmor %vm1360, %vm1361
  %v1363 = vsel %vm1362, %v1355, %v1359
  %v1364 = vand.u32 2147483647, %v1354
  %vm1365 = vcmp.eq.f32.partialorder %v1364, 8.507059e+37
  %v1366 = vand.u32 %v1354, 2147483648
  %v1367 = vor.u32 1.1754944e-38, %v1366
  %v1368 = vsel %vm1365, %v1367, %v1363
  %v1369 = vmul.f32 1.0, %v1368
  %v1370 = vxor.u32 %v1127, 2147483648
  %v1371 = vmul.f32 %v1370, 1.442695
  %v1372 = vpow.pop %v1371
  %v1373 = vadd.f32 %v1372, 1.0
  %v1374 = vrcp.pop %v1373
  %v1375 = vmul.f32 %v1373, %v1374
  %v1376 = vsub.f32 1.0, %v1375
  %v1377 = vmul.f32 %v1374, %v1376
  %v1378 = vadd.f32 %v1374, %v1377
  %vm1379 = vweird.f32 %v1373
  %vm1380 = vweird.f32 %v1374
  %vm1381 = vmor %vm1379, %vm1380
  %v1382 = vsel %vm1381, %v1374, %v1378
  %v1383 = vand.u32 2147483647, %v1373
  %vm1384 = vcmp.eq.f32.partialorder %v1383, 8.507059e+37
  %v1385 = vand.u32 %v1373, 2147483648
  %v1386 = vor.u32 1.1754944e-38, %v1385
  %v1387 = vsel %vm1384, %v1386, %v1382
  %v1388 = vmul.f32 1.0, %v1387
  %v1389 = vtanh.pop %v1128
  %v1390 = vxor.u32 %v1129, 2147483648
  %v1391 = vmul.f32 %v1390, 1.442695
  %v1392 = vpow.pop %v1391
  %v1393 = vadd.f32 %v1392, 1.0
  %v1394 = vrcp.pop %v1393
  %v1395 = vmul.f32 %v1393, %v1394
  %v1396 = vsub.f32 1.0, %v1395
  %v1397 = vmul.f32 %v1394, %v1396
  %v1398 = vadd.f32 %v1394, %v1397
  %vm1399 = vweird.f32 %v1393
  %vm1400 = vweird.f32 %v1394
  %vm1401 = vmor %vm1399, %vm1400
  %v1402 = vsel %vm1401, %v1394, %v1398
  %v1403 = vand.u32 2147483647, %v1393
  %vm1404 = vcmp.eq.f32.partialorder %v1403, 8.507059e+37
  %v1405 = vand.u32 %v1393, 2147483648
  %v1406 = vor.u32 1.1754944e-38, %v1405
  %v1407 = vsel %vm1404, %v1406, %v1402
  %v1408 = vmul.f32 1.0, %v1407
  %v1409 = vmul.f32 %v1388, %v906
  %v1410 = vmul.f32 %v1369, %v1389
  %v1411 = vadd.f32 %v1409, %v1410
  %v1412 = vtanh.pop %v1411
  %v1413 = vmul.f32 %v1408, %v1412
  %v1414 = vxor.u32 %v1347, 2147483648
  %v1415 = vmul.f32 %v1414, 1.442695
  %v1416 = vpow.pop %v1415
  %v1417 = vadd.f32 %v1416, 1.0
  %v1418 = vrcp.pop %v1417
  %v1419 = vmul.f32 %v1417, %v1418
  %v1420 = vsub.f32 1.0, %v1419
  %v1421 = vmul.f32 %v1418, %v1420
  %v1422 = vadd.f32 %v1418, %v1421
  %vm1423 = vweird.f32 %v1417
  %vm1424 = vweird.f32 %v1418
  %vm1425 = vmor %vm1423, %vm1424
  %v1426 = vsel %vm1425, %v1418, %v1422
  %v1427 = vand.u32 2147483647, %v1417
  %vm1428 = vcmp.eq.f32.partialorder %v1427, 8.507059e+37
  %v1429 = vand.u32 %v1417, 2147483648
  %v1430 = vor.u32 1.1754944e-38, %v1429
  %v1431 = vsel %vm1428, %v1430, %v1426
  %v1432 = vmul.f32 1.0, %v1431
  %v1433 = vxor.u32 %v1348, 2147483648
  %v1434 = vmul.f32 %v1433, 1.442695
  %v1435 = vpow.pop %v1434
  %v1436 = vadd.f32 %v1435, 1.0
  %v1437 = vrcp.pop %v1436
  %v1438 = vmul.f32 %v1436, %v1437
  %v1439 = vsub.f32 1.0, %v1438
  %v1440 = vmul.f32 %v1437, %v1439
  %v1441 = vadd.f32 %v1437, %v1440
  %vm1442 = vweird.f32 %v1436
  %vm1443 = vweird.f32 %v1437
  %vm1444 = vmor %vm1442, %vm1443
  %v1445 = vsel %vm1444, %v1437, %v1441
  %v1446 = vand.u32 2147483647, %v1436
  %vm1447 = vcmp.eq.f32.partialorder %v1446, 8.507059e+37
  %v1448 = vand.u32 %v1436, 2147483648
  %v1449 = vor.u32 1.1754944e-38, %v1448
  %v1450 = vsel %vm1447, %v1449, %v1445
  %v1451 = vmul.f32 1.0, %v1450
  %v1452 = vtanh.pop %v1349
  %v1453 = vxor.u32 %v1350, 2147483648
  %v1454 = vmul.f32 %v1453, 1.442695
  %v1455 = vpow.pop %v1454
  %v1456 = vadd.f32 %v1455, 1.0
  %v1457 = vrcp.pop %v1456
  %v1458 = vmul.f32 %v1456, %v1457
  %v1459 = vsub.f32 1.0, %v1458
  %v1460 = vmul.f32 %v1457, %v1459
  %v1461 = vadd.f32 %v1457, %v1460
  %vm1462 = vweird.f32 %v1456
  %vm1463 = vweird.f32 %v1457
  %vm1464 = vmor %vm1462, %vm1463
  %v1465 = vsel %vm1464, %v1457, %v1461
  %v1466 = vand.u32 2147483647, %v1456
  %vm1467 = vcmp.eq.f32.partialorder %v1466, 8.507059e+37
  %v1468 = vand.u32 %v1456, 2147483648
  %v1469 = vor.u32 1.1754944e-38, %v1468
  %v1470 = vsel %vm1467, %v1469, %v1465
  %v1471 = vmul.f32 1.0, %v1470
  %v1472 = vmul.f32 %v1451, %v908
  %v1473 = vmul.f32 %v1432, %v1452
  %v1474 = vadd.f32 %v1472, %v1473
  %v1475 = vtanh.pop %v1474
  %v1476 = vmul.f32 %v1471, %v1475
  %1477 = vst [vmem:[%s8] sm:$0xff] %v1413
  %1478 = vst [vmem:[%s66 + $0x38] sm:$0xff] %v1476
  %v1479 = vld [vmem:[#allocation2 + $0x20] sm:$0xff]
  %v1480 = vld [vmem:[#allocation2 + $0x28] sm:$0xff]
  %v1481 = vld [vmem:[#allocation2 + $0x30] sm:$0xff]
  %v1482 = vld [vmem:[#allocation2 + $0x38] sm:$0xff]
  %v1483 = vpack.c.bf16 %v1413, %v1413
  %1484 = vmatpush.bf16.msra.mxu0 %v1038
  %1485 = vmatpush.bf16.msra.mxu0 %v1034
  %1486 = vmatpush.bf16.msra.mxu0 %v1030
  %1487 = vmatpush.bf16.msra.mxu0 %v1026
  %1488 = vmatpush.bf16.msra.mxu0 %v1022
  %1489 = vmatpush.bf16.msra.mxu0 %v1018
  %1490 = vmatpush.bf16.msra.mxu0 %v1014
  %1491 = vmatpush.bf16.msra.mxu0 %v1010
  %1492 = vmatmul.bf16.gmra.mxu0 %v1483
  %v1493 = vpop.f32.mrf.mxu0
  %v1494 = vadd.f32 0.0, %v1493
  %v1495 = vpop.f32.mrf.mxu0
  %1496 = vdwg.mxu0
  %1497 = vmatpush.bf16.msra.mxu0 %v1039
  %1498 = vmatpush.bf16.msra.mxu0 %v1035
  %1499 = vmatpush.bf16.msra.mxu0 %v1031
  %1500 = vmatpush.bf16.msra.mxu0 %v1027
  %1501 = vmatpush.bf16.msra.mxu0 %v1023
  %1502 = vmatpush.bf16.msra.mxu0 %v1019
  %1503 = vmatpush.bf16.msra.mxu0 %v1015
  %1504 = vmatpush.bf16.msra.mxu0 %v1011
  %1505 = vmatmul.bf16.gmra.mxu0 %v1483
  %v1506 = vpop.f32.mrf.mxu0
  %v1507 = vadd.f32 0.0, %v1506
  %v1508 = vpop.f32.mrf.mxu0
  %1509 = vdwg.mxu0
  %1510 = vmatpush.bf16.msra.mxu0 %v1040
  %1511 = vmatpush.bf16.msra.mxu0 %v1036
  %1512 = vmatpush.bf16.msra.mxu0 %v1032
  %1513 = vmatpush.bf16.msra.mxu0 %v1028
  %1514 = vmatpush.bf16.msra.mxu0 %v1024
  %1515 = vmatpush.bf16.msra.mxu0 %v1020
  %1516 = vmatpush.bf16.msra.mxu0 %v1016
  %1517 = vmatpush.bf16.msra.mxu0 %v1012
  %1518 = vmatmul.bf16.gmra.mxu0 %v1483
  %v1519 = vpop.f32.mrf.mxu0
  %v1520 = vadd.f32 0.0, %v1519
  %v1521 = vpop.f32.mrf.mxu0
  %1522 = vdwg.mxu0
  %1523 = vmatpush.bf16.msra.mxu0 %v1041
  %1524 = vmatpush.bf16.msra.mxu0 %v1037
  %1525 = vmatpush.bf16.msra.mxu0 %v1033
  %1526 = vmatpush.bf16.msra.mxu0 %v1029
  %1527 = vmatpush.bf16.msra.mxu0 %v1025
  %1528 = vmatpush.bf16.msra.mxu0 %v1021
  %1529 = vmatpush.bf16.msra.mxu0 %v1017
  %1530 = vmatpush.bf16.msra.mxu0 %v1013
  %1531 = vmatmul.bf16.gmra.mxu0 %v1483
  %v1532 = vpop.f32.mrf.mxu0
  %v1533 = vadd.f32 0.0, %v1532
  %v1534 = vpop.f32.mrf.mxu0
  %1535 = vdwg.mxu0
  %v1536 = vadd.f32 %v1479, %v1494
  %v1537 = vadd.f32 %v1480, %v1507
  %v1538 = vadd.f32 %v1481, %v1520
  %v1539 = vadd.f32 %v1482, %v1533
  %v1540 = vld [vmem:[#allocation3 + $0xc0] sm:$0xff]
  %v1541 = vld [vmem:[#allocation3 + $0xc8] sm:$0xff]
  %v1542 = vld [vmem:[#allocation3 + $0xd0] sm:$0xff]
  %v1543 = vld [vmem:[#allocation3 + $0xd8] sm:$0xff]
  %v1544 = vpack.c.bf16 %v1476, %v1476
  %1545 = vmatpush.bf16.msra.mxu0 %v1259
  %1546 = vmatpush.bf16.msra.mxu0 %v1255
  %1547 = vmatpush.bf16.msra.mxu0 %v1251
  %1548 = vmatpush.bf16.msra.mxu0 %v1247
  %1549 = vmatpush.bf16.msra.mxu0 %v1243
  %1550 = vmatpush.bf16.msra.mxu0 %v1239
  %1551 = vmatpush.bf16.msra.mxu0 %v1235
  %1552 = vmatpush.bf16.msra.mxu0 %v1231
  %1553 = vmatmul.bf16.gmra.mxu0 %v1544
  %v1554 = vpop.f32.mrf.mxu0
  %v1555 = vadd.f32 0.0, %v1554
  %v1556 = vpop.f32.mrf.mxu0
  %1557 = vdwg.mxu0
  %1558 = vmatpush.bf16.msra.mxu0 %v1260
  %1559 = vmatpush.bf16.msra.mxu0 %v1256
  %1560 = vmatpush.bf16.msra.mxu0 %v1252
  %1561 = vmatpush.bf16.msra.mxu0 %v1248
  %1562 = vmatpush.bf16.msra.mxu0 %v1244
  %1563 = vmatpush.bf16.msra.mxu0 %v1240
  %1564 = vmatpush.bf16.msra.mxu0 %v1236
  %1565 = vmatpush.bf16.msra.mxu0 %v1232
  %1566 = vmatmul.bf16.gmra.mxu0 %v1544
  %v1567 = vpop.f32.mrf.mxu0
  %v1568 = vadd.f32 0.0, %v1567
  %v1569 = vpop.f32.mrf.mxu0
  %1570 = vdwg.mxu0
  %1571 = vmatpush.bf16.msra.mxu0 %v1261
  %1572 = vmatpush.bf16.msra.mxu0 %v1257
  %1573 = vmatpush.bf16.msra.mxu0 %v1253
  %1574 = vmatpush.bf16.msra.mxu0 %v1249
  %1575 = vmatpush.bf16.msra.mxu0 %v1245
  %1576 = vmatpush.bf16.msra.mxu0 %v1241
  %1577 = vmatpush.bf16.msra.mxu0 %v1237
  %1578 = vmatpush.bf16.msra.mxu0 %v1233
  %1579 = vmatmul.bf16.gmra.mxu0 %v1544
  %v1580 = vpop.f32.mrf.mxu0
  %v1581 = vadd.f32 0.0, %v1580
  %v1582 = vpop.f32.mrf.mxu0
  %1583 = vdwg.mxu0
  %1584 = vmatpush.bf16.msra.mxu0 %v1262
  %1585 = vmatpush.bf16.msra.mxu0 %v1258
  %1586 = vmatpush.bf16.msra.mxu0 %v1254
  %1587 = vmatpush.bf16.msra.mxu0 %v1250
  %1588 = vmatpush.bf16.msra.mxu0 %v1246
  %1589 = vmatpush.bf16.msra.mxu0 %v1242
  %1590 = vmatpush.bf16.msra.mxu0 %v1238
  %1591 = vmatpush.bf16.msra.mxu0 %v1234
  %1592 = vmatmul.bf16.gmra.mxu0 %v1544
  %v1593 = vpop.f32.mrf.mxu0
  %v1594 = vadd.f32 0.0, %v1593
  %v1595 = vpop.f32.mrf.mxu0
  %1596 = vdwg.mxu0
  %v1597 = vadd.f32 %v1540, %v1555
  %v1598 = vadd.f32 %v1541, %v1568
  %v1599 = vadd.f32 %v1542, %v1581
  %v1600 = vadd.f32 %v1543, %v1594
  %v1601 = vxor.u32 %v1536, 2147483648
  %v1602 = vmul.f32 %v1601, 1.442695
  %v1603 = vpow.pop %v1602
  %v1604 = vadd.f32 %v1603, 1.0
  %v1605 = vrcp.pop %v1604
  %v1606 = vmul.f32 %v1604, %v1605
  %v1607 = vsub.f32 1.0, %v1606
  %v1608 = vmul.f32 %v1605, %v1607
  %v1609 = vadd.f32 %v1605, %v1608
  %vm1610 = vweird.f32 %v1604
  %vm1611 = vweird.f32 %v1605
  %vm1612 = vmor %vm1610, %vm1611
  %v1613 = vsel %vm1612, %v1605, %v1609
  %v1614 = vand.u32 2147483647, %v1604
  %vm1615 = vcmp.eq.f32.partialorder %v1614, 8.507059e+37
  %v1616 = vand.u32 %v1604, 2147483648
  %v1617 = vor.u32 1.1754944e-38, %v1616
  %v1618 = vsel %vm1615, %v1617, %v1613
  %v1619 = vmul.f32 1.0, %v1618
  %v1620 = vxor.u32 %v1537, 2147483648
  %v1621 = vmul.f32 %v1620, 1.442695
  %v1622 = vpow.pop %v1621
  %v1623 = vadd.f32 %v1622, 1.0
  %v1624 = vrcp.pop %v1623
  %v1625 = vmul.f32 %v1623, %v1624
  %v1626 = vsub.f32 1.0, %v1625
  %v1627 = vmul.f32 %v1624, %v1626
  %v1628 = vadd.f32 %v1624, %v1627
  %vm1629 = vweird.f32 %v1623
  %vm1630 = vweird.f32 %v1624
  %vm1631 = vmor %vm1629, %vm1630
  %v1632 = vsel %vm1631, %v1624, %v1628
  %v1633 = vand.u32 2147483647, %v1623
  %vm1634 = vcmp.eq.f32.partialorder %v1633, 8.507059e+37
  %v1635 = vand.u32 %v1623, 2147483648
  %v1636 = vor.u32 1.1754944e-38, %v1635
  %v1637 = vsel %vm1634, %v1636, %v1632
  %v1638 = vmul.f32 1.0, %v1637
  %v1639 = vtanh.pop %v1538
  %v1640 = vxor.u32 %v1539, 2147483648
  %v1641 = vmul.f32 %v1640, 1.442695
  %v1642 = vpow.pop %v1641
  %v1643 = vadd.f32 %v1642, 1.0
  %v1644 = vrcp.pop %v1643
  %v1645 = vmul.f32 %v1643, %v1644
  %v1646 = vsub.f32 1.0, %v1645
  %v1647 = vmul.f32 %v1644, %v1646
  %v1648 = vadd.f32 %v1644, %v1647
  %vm1649 = vweird.f32 %v1643
  %vm1650 = vweird.f32 %v1644
  %vm1651 = vmor %vm1649, %vm1650
  %v1652 = vsel %vm1651, %v1644, %v1648
  %v1653 = vand.u32 2147483647, %v1643
  %vm1654 = vcmp.eq.f32.partialorder %v1653, 8.507059e+37
  %v1655 = vand.u32 %v1643, 2147483648
  %v1656 = vor.u32 1.1754944e-38, %v1655
  %v1657 = vsel %vm1654, %v1656, %v1652
  %v1658 = vmul.f32 1.0, %v1657
  %v1659 = vmul.f32 %v1638, %v1411
  %v1660 = vmul.f32 %v1619, %v1639
  %v1661 = vadd.f32 %v1659, %v1660
  %v1662 = vtanh.pop %v1661
  %v1663 = vmul.f32 %v1658, %v1662
  %v1664 = vxor.u32 %v1597, 2147483648
  %v1665 = vmul.f32 %v1664, 1.442695
  %v1666 = vpow.pop %v1665
  %v1667 = vadd.f32 %v1666, 1.0
  %v1668 = vrcp.pop %v1667
  %v1669 = vmul.f32 %v1667, %v1668
  %v1670 = vsub.f32 1.0, %v1669
  %v1671 = vmul.f32 %v1668, %v1670
  %v1672 = vadd.f32 %v1668, %v1671
  %vm1673 = vweird.f32 %v1667
  %vm1674 = vweird.f32 %v1668
  %vm1675 = vmor %vm1673, %vm1674
  %v1676 = vsel %vm1675, %v1668, %v1672
  %v1677 = vand.u32 2147483647, %v1667
  %vm1678 = vcmp.eq.f32.partialorder %v1677, 8.507059e+37
  %v1679 = vand.u32 %v1667, 2147483648
  %v1680 = vor.u32 1.1754944e-38, %v1679
  %v1681 = vsel %vm1678, %v1680, %v1676
  %v1682 = vmul.f32 1.0, %v1681
  %v1683 = vxor.u32 %v1598, 2147483648
  %v1684 = vmul.f32 %v1683, 1.442695
  %v1685 = vpow.pop %v1684
  %v1686 = vadd.f32 %v1685, 1.0
  %v1687 = vrcp.pop %v1686
  %v1688 = vmul.f32 %v1686, %v1687
  %v1689 = vsub.f32 1.0, %v1688
  %v1690 = vmul.f32 %v1687, %v1689
  %v1691 = vadd.f32 %v1687, %v1690
  %vm1692 = vweird.f32 %v1686
  %vm1693 = vweird.f32 %v1687
  %vm1694 = vmor %vm1692, %vm1693
  %v1695 = vsel %vm1694, %v1687, %v1691
  %v1696 = vand.u32 2147483647, %v1686
  %vm1697 = vcmp.eq.f32.partialorder %v1696, 8.507059e+37
  %v1698 = vand.u32 %v1686, 2147483648
  %v1699 = vor.u32 1.1754944e-38, %v1698
  %v1700 = vsel %vm1697, %v1699, %v1695
  %v1701 = vmul.f32 1.0, %v1700
  %v1702 = vtanh.pop %v1599
  %v1703 = vxor.u32 %v1600, 2147483648
  %v1704 = vmul.f32 %v1703, 1.442695
  %v1705 = vpow.pop %v1704
  %v1706 = vadd.f32 %v1705, 1.0
  %v1707 = vrcp.pop %v1706
  %v1708 = vmul.f32 %v1706, %v1707
  %v1709 = vsub.f32 1.0, %v1708
  %v1710 = vmul.f32 %v1707, %v1709
  %v1711 = vadd.f32 %v1707, %v1710
  %vm1712 = vweird.f32 %v1706
  %vm1713 = vweird.f32 %v1707
  %vm1714 = vmor %vm1712, %vm1713
  %v1715 = vsel %vm1714, %v1707, %v1711
  %v1716 = vand.u32 2147483647, %v1706
  %vm1717 = vcmp.eq.f32.partialorder %v1716, 8.507059e+37
  %v1718 = vand.u32 %v1706, 2147483648
  %v1719 = vor.u32 1.1754944e-38, %v1718
  %v1720 = vsel %vm1717, %v1719, %v1715
  %v1721 = vmul.f32 1.0, %v1720
  %v1722 = vmul.f32 %v1701, %v1474
  %v1723 = vmul.f32 %v1682, %v1702
  %v1724 = vadd.f32 %v1722, %v1723
  %v1725 = vtanh.pop %v1724
  %v1726 = vmul.f32 %v1721, %v1725
  %1727 = vst [vmem:[%s8 + $0x8] sm:$0xff] %v1663
  %1728 = vst [vmem:[%s66 + $0x30] sm:$0xff] %v1726
  %v1729 = vld [vmem:[#allocation2 + $0x40] sm:$0xff]
  %v1730 = vld [vmem:[#allocation2 + $0x48] sm:$0xff]
  %v1731 = vld [vmem:[#allocation2 + $0x50] sm:$0xff]
  %v1732 = vld [vmem:[#allocation2 + $0x58] sm:$0xff]
  %v1733 = vpack.c.bf16 %v1663, %v1663
  %1734 = vmatpush.bf16.msra.mxu0 %v1038
  %1735 = vmatpush.bf16.msra.mxu0 %v1034
  %1736 = vmatpush.bf16.msra.mxu0 %v1030
  %1737 = vmatpush.bf16.msra.mxu0 %v1026
  %1738 = vmatpush.bf16.msra.mxu0 %v1022
  %1739 = vmatpush.bf16.msra.mxu0 %v1018
  %1740 = vmatpush.bf16.msra.mxu0 %v1014
  %1741 = vmatpush.bf16.msra.mxu0 %v1010
  %1742 = vmatmul.bf16.gmra.mxu0 %v1733
  %v1743 = vpop.f32.mrf.mxu0
  %v1744 = vadd.f32 0.0, %v1743
  %v1745 = vpop.f32.mrf.mxu0
  %1746 = vdwg.mxu0
  %1747 = vmatpush.bf16.msra.mxu0 %v1039
  %1748 = vmatpush.bf16.msra.mxu0 %v1035
  %1749 = vmatpush.bf16.msra.mxu0 %v1031
  %1750 = vmatpush.bf16.msra.mxu0 %v1027
  %1751 = vmatpush.bf16.msra.mxu0 %v1023
  %1752 = vmatpush.bf16.msra.mxu0 %v1019
  %1753 = vmatpush.bf16.msra.mxu0 %v1015
  %1754 = vmatpush.bf16.msra.mxu0 %v1011
  %1755 = vmatmul.bf16.gmra.mxu0 %v1733
  %v1756 = vpop.f32.mrf.mxu0
  %v1757 = vadd.f32 0.0, %v1756
  %v1758 = vpop.f32.mrf.mxu0
  %1759 = vdwg.mxu0
  %1760 = vmatpush.bf16.msra.mxu0 %v1040
  %1761 = vmatpush.bf16.msra.mxu0 %v1036
  %1762 = vmatpush.bf16.msra.mxu0 %v1032
  %1763 = vmatpush.bf16.msra.mxu0 %v1028
  %1764 = vmatpush.bf16.msra.mxu0 %v1024
  %1765 = vmatpush.bf16.msra.mxu0 %v1020
  %1766 = vmatpush.bf16.msra.mxu0 %v1016
  %1767 = vmatpush.bf16.msra.mxu0 %v1012
  %1768 = vmatmul.bf16.gmra.mxu0 %v1733
  %v1769 = vpop.f32.mrf.mxu0
  %v1770 = vadd.f32 0.0, %v1769
  %v1771 = vpop.f32.mrf.mxu0
  %1772 = vdwg.mxu0
  %1773 = vmatpush.bf16.msra.mxu0 %v1041
  %1774 = vmatpush.bf16.msra.mxu0 %v1037
  %1775 = vmatpush.bf16.msra.mxu0 %v1033
  %1776 = vmatpush.bf16.msra.mxu0 %v1029
  %1777 = vmatpush.bf16.msra.mxu0 %v1025
  %1778 = vmatpush.bf16.msra.mxu0 %v1021
  %1779 = vmatpush.bf16.msra.mxu0 %v1017
  %1780 = vmatpush.bf16.msra.mxu0 %v1013
  %1781 = vmatmul.bf16.gmra.mxu0 %v1733
  %v1782 = vpop.f32.mrf.mxu0
  %v1783 = vadd.f32 0.0, %v1782
  %v1784 = vpop.f32.mrf.mxu0
  %1785 = vdwg.mxu0
  %v1786 = vadd.f32 %v1729, %v1744
  %v1787 = vadd.f32 %v1730, %v1757
  %v1788 = vadd.f32 %v1731, %v1770
  %v1789 = vadd.f32 %v1732, %v1783
  %v1790 = vld [vmem:[#allocation3 + $0xa0] sm:$0xff]
  %v1791 = vld [vmem:[#allocation3 + $0xa8] sm:$0xff]
  %v1792 = vld [vmem:[#allocation3 + $0xb0] sm:$0xff]
  %v1793 = vld [vmem:[#allocation3 + $0xb8] sm:$0xff]
  %v1794 = vpack.c.bf16 %v1726, %v1726
  %1795 = vmatpush.bf16.msra.mxu0 %v1259
  %1796 = vmatpush.bf16.msra.mxu0 %v1255
  %1797 = vmatpush.bf16.msra.mxu0 %v1251
  %1798 = vmatpush.bf16.msra.mxu0 %v1247
  %1799 = vmatpush.bf16.msra.mxu0 %v1243
  %1800 = vmatpush.bf16.msra.mxu0 %v1239
  %1801 = vmatpush.bf16.msra.mxu0 %v1235
  %1802 = vmatpush.bf16.msra.mxu0 %v1231
  %1803 = vmatmul.bf16.gmra.mxu0 %v1794
  %v1804 = vpop.f32.mrf.mxu0
  %v1805 = vadd.f32 0.0, %v1804
  %v1806 = vpop.f32.mrf.mxu0
  %1807 = vdwg.mxu0
  %1808 = vmatpush.bf16.msra.mxu0 %v1260
  %1809 = vmatpush.bf16.msra.mxu0 %v1256
  %1810 = vmatpush.bf16.msra.mxu0 %v1252
  %1811 = vmatpush.bf16.msra.mxu0 %v1248
  %1812 = vmatpush.bf16.msra.mxu0 %v1244
  %1813 = vmatpush.bf16.msra.mxu0 %v1240
  %1814 = vmatpush.bf16.msra.mxu0 %v1236
  %1815 = vmatpush.bf16.msra.mxu0 %v1232
  %1816 = vmatmul.bf16.gmra.mxu0 %v1794
  %v1817 = vpop.f32.mrf.mxu0
  %v1818 = vadd.f32 0.0, %v1817
  %v1819 = vpop.f32.mrf.mxu0
  %1820 = vdwg.mxu0
  %1821 = vmatpush.bf16.msra.mxu0 %v1261
  %1822 = vmatpush.bf16.msra.mxu0 %v1257
  %1823 = vmatpush.bf16.msra.mxu0 %v1253
  %1824 = vmatpush.bf16.msra.mxu0 %v1249
  %1825 = vmatpush.bf16.msra.mxu0 %v1245
  %1826 = vmatpush.bf16.msra.mxu0 %v1241
  %1827 = vmatpush.bf16.msra.mxu0 %v1237
  %1828 = vmatpush.bf16.msra.mxu0 %v1233
  %1829 = vmatmul.bf16.gmra.mxu0 %v1794
  %v1830 = vpop.f32.mrf.mxu0
  %v1831 = vadd.f32 0.0, %v1830
  %v1832 = vpop.f32.mrf.mxu0
  %1833 = vdwg.mxu0
  %1834 = vmatpush.bf16.msra.mxu0 %v1262
  %1835 = vmatpush.bf16.msra.mxu0 %v1258
  %1836 = vmatpush.bf16.msra.mxu0 %v1254
  %1837 = vmatpush.bf16.msra.mxu0 %v1250
  %1838 = vmatpush.bf16.msra.mxu0 %v1246
  %1839 = vmatpush.bf16.msra.mxu0 %v1242
  %1840 = vmatpush.bf16.msra.mxu0 %v1238
  %1841 = vmatpush.bf16.msra.mxu0 %v1234
  %1842 = vmatmul.bf16.gmra.mxu0 %v1794
  %v1843 = vpop.f32.mrf.mxu0
  %v1844 = vadd.f32 0.0, %v1843
  %v1845 = vpop.f32.mrf.mxu0
  %1846 = vdwg.mxu0
  %v1847 = vadd.f32 %v1790, %v1805
  %v1848 = vadd.f32 %v1791, %v1818
  %v1849 = vadd.f32 %v1792, %v1831
  %v1850 = vadd.f32 %v1793, %v1844
  %v1851 = vxor.u32 %v1786, 2147483648
  %v1852 = vmul.f32 %v1851, 1.442695
  %v1853 = vpow.pop %v1852
  %v1854 = vadd.f32 %v1853, 1.0
  %v1855 = vrcp.pop %v1854
  %v1856 = vmul.f32 %v1854, %v1855
  %v1857 = vsub.f32 1.0, %v1856
  %v1858 = vmul.f32 %v1855, %v1857
  %v1859 = vadd.f32 %v1855, %v1858
  %vm1860 = vweird.f32 %v1854
  %vm1861 = vweird.f32 %v1855
  %vm1862 = vmor %vm1860, %vm1861
  %v1863 = vsel %vm1862, %v1855, %v1859
  %v1864 = vand.u32 2147483647, %v1854
  %vm1865 = vcmp.eq.f32.partialorder %v1864, 8.507059e+37
  %v1866 = vand.u32 %v1854, 2147483648
  %v1867 = vor.u32 1.1754944e-38, %v1866
  %v1868 = vsel %vm1865, %v1867, %v1863
  %v1869 = vmul.f32 1.0, %v1868
  %v1870 = vxor.u32 %v1787, 2147483648
  %v1871 = vmul.f32 %v1870, 1.442695
  %v1872 = vpow.pop %v1871
  %v1873 = vadd.f32 %v1872, 1.0
  %v1874 = vrcp.pop %v1873
  %v1875 = vmul.f32 %v1873, %v1874
  %v1876 = vsub.f32 1.0, %v1875
  %v1877 = vmul.f32 %v1874, %v1876
  %v1878 = vadd.f32 %v1874, %v1877
  %vm1879 = vweird.f32 %v1873
  %vm1880 = vweird.f32 %v1874
  %vm1881 = vmor %vm1879, %vm1880
  %v1882 = vsel %vm1881, %v1874, %v1878
  %v1883 = vand.u32 2147483647, %v1873
  %vm1884 = vcmp.eq.f32.partialorder %v1883, 8.507059e+37
  %v1885 = vand.u32 %v1873, 2147483648
  %v1886 = vor.u32 1.1754944e-38, %v1885
  %v1887 = vsel %vm1884, %v1886, %v1882
  %v1888 = vmul.f32 1.0, %v1887
  %v1889 = vtanh.pop %v1788
  %v1890 = vxor.u32 %v1789, 2147483648
  %v1891 = vmul.f32 %v1890, 1.442695
  %v1892 = vpow.pop %v1891
  %v1893 = vadd.f32 %v1892, 1.0
  %v1894 = vrcp.pop %v1893
  %v1895 = vmul.f32 %v1893, %v1894
  %v1896 = vsub.f32 1.0, %v1895
  %v1897 = vmul.f32 %v1894, %v1896
  %v1898 = vadd.f32 %v1894, %v1897
  %vm1899 = vweird.f32 %v1893
  %vm1900 = vweird.f32 %v1894
  %vm1901 = vmor %vm1899, %vm1900
  %v1902 = vsel %vm1901, %v1894, %v1898
  %v1903 = vand.u32 2147483647, %v1893
  %vm1904 = vcmp.eq.f32.partialorder %v1903, 8.507059e+37
  %v1905 = vand.u32 %v1893, 2147483648
  %v1906 = vor.u32 1.1754944e-38, %v1905
  %v1907 = vsel %vm1904, %v1906, %v1902
  %v1908 = vmul.f32 1.0, %v1907
  %v1909 = vmul.f32 %v1888, %v1661
  %v1910 = vmul.f32 %v1869, %v1889
  %v1911 = vadd.f32 %v1909, %v1910
  %v1912 = vtanh.pop %v1911
  %v1913 = vmul.f32 %v1908, %v1912
  %v1914 = vxor.u32 %v1847, 2147483648
  %v1915 = vmul.f32 %v1914, 1.442695
  %v1916 = vpow.pop %v1915
  %v1917 = vadd.f32 %v1916, 1.0
  %v1918 = vrcp.pop %v1917
  %v1919 = vmul.f32 %v1917, %v1918
  %v1920 = vsub.f32 1.0, %v1919
  %v1921 = vmul.f32 %v1918, %v1920
  %v1922 = vadd.f32 %v1918, %v1921
  %vm1923 = vweird.f32 %v1917
  %vm1924 = vweird.f32 %v1918
  %vm1925 = vmor %vm1923, %vm1924
  %v1926 = vsel %vm1925, %v1918, %v1922
  %v1927 = vand.u32 2147483647, %v1917
  %vm1928 = vcmp.eq.f32.partialorder %v1927, 8.507059e+37
  %v1929 = vand.u32 %v1917, 2147483648
  %v1930 = vor.u32 1.1754944e-38, %v1929
  %v1931 = vsel %vm1928, %v1930, %v1926
  %v1932 = vmul.f32 1.0, %v1931
  %v1933 = vxor.u32 %v1848, 2147483648
  %v1934 = vmul.f32 %v1933, 1.442695
  %v1935 = vpow.pop %v1934
  %v1936 = vadd.f32 %v1935, 1.0
  %v1937 = vrcp.pop %v1936
  %v1938 = vmul.f32 %v1936, %v1937
  %v1939 = vsub.f32 1.0, %v1938
  %v1940 = vmul.f32 %v1937, %v1939
  %v1941 = vadd.f32 %v1937, %v1940
  %vm1942 = vweird.f32 %v1936
  %vm1943 = vweird.f32 %v1937
  %vm1944 = vmor %vm1942, %vm1943
  %v1945 = vsel %vm1944, %v1937, %v1941
  %v1946 = vand.u32 2147483647, %v1936
  %vm1947 = vcmp.eq.f32.partialorder %v1946, 8.507059e+37
  %v1948 = vand.u32 %v1936, 2147483648
  %v1949 = vor.u32 1.1754944e-38, %v1948
  %v1950 = vsel %vm1947, %v1949, %v1945
  %v1951 = vmul.f32 1.0, %v1950
  %v1952 = vtanh.pop %v1849
  %v1953 = vxor.u32 %v1850, 2147483648
  %v1954 = vmul.f32 %v1953, 1.442695
  %v1955 = vpow.pop %v1954
  %v1956 = vadd.f32 %v1955, 1.0
  %v1957 = vrcp.pop %v1956
  %v1958 = vmul.f32 %v1956, %v1957
  %v1959 = vsub.f32 1.0, %v1958
  %v1960 = vmul.f32 %v1957, %v1959
  %v1961 = vadd.f32 %v1957, %v1960
  %vm1962 = vweird.f32 %v1956
  %vm1963 = vweird.f32 %v1957
  %vm1964 = vmor %vm1962, %vm1963
  %v1965 = vsel %vm1964, %v1957, %v1961
  %v1966 = vand.u32 2147483647, %v1956
  %vm1967 = vcmp.eq.f32.partialorder %v1966, 8.507059e+37
  %v1968 = vand.u32 %v1956, 2147483648
  %v1969 = vor.u32 1.1754944e-38, %v1968
  %v1970 = vsel %vm1967, %v1969, %v1965
  %v1971 = vmul.f32 1.0, %v1970
  %v1972 = vmul.f32 %v1951, %v1724
  %v1973 = vmul.f32 %v1932, %v1952
  %v1974 = vadd.f32 %v1972, %v1973
  %v1975 = vtanh.pop %v1974
  %v1976 = vmul.f32 %v1971, %v1975
  %1977 = vst [vmem:[%s8 + $0x10] sm:$0xff] %v1913
  %1978 = vst [vmem:[%s66 + $0x28] sm:$0xff] %v1976
  %v1979 = vld [vmem:[#allocation2 + $0x60] sm:$0xff]
  %v1980 = vld [vmem:[#allocation2 + $0x68] sm:$0xff]
  %v1981 = vld [vmem:[#allocation2 + $0x70] sm:$0xff]
  %v1982 = vld [vmem:[#allocation2 + $0x78] sm:$0xff]
  %v1983 = vpack.c.bf16 %v1913, %v1913
  %1984 = vmatpush.bf16.msra.mxu0 %v1038
  %1985 = vmatpush.bf16.msra.mxu0 %v1034
  %1986 = vmatpush.bf16.msra.mxu0 %v1030
  %1987 = vmatpush.bf16.msra.mxu0 %v1026
  %1988 = vmatpush.bf16.msra.mxu0 %v1022
  %1989 = vmatpush.bf16.msra.mxu0 %v1018
  %1990 = vmatpush.bf16.msra.mxu0 %v1014
  %1991 = vmatpush.bf16.msra.mxu0 %v1010
  %1992 = vmatmul.bf16.gmra.mxu0 %v1983
  %v1993 = vpop.f32.mrf.mxu0
  %v1994 = vadd.f32 0.0, %v1993
  %v1995 = vpop.f32.mrf.mxu0
  %1996 = vdwg.mxu0
  %1997 = vmatpush.bf16.msra.mxu0 %v1039
  %1998 = vmatpush.bf16.msra.mxu0 %v1035
  %1999 = vmatpush.bf16.msra.mxu0 %v1031
  %2000 = vmatpush.bf16.msra.mxu0 %v1027
  %2001 = vmatpush.bf16.msra.mxu0 %v1023
  %2002 = vmatpush.bf16.msra.mxu0 %v1019
  %2003 = vmatpush.bf16.msra.mxu0 %v1015
  %2004 = vmatpush.bf16.msra.mxu0 %v1011
  %2005 = vmatmul.bf16.gmra.mxu0 %v1983
  %v2006 = vpop.f32.mrf.mxu0
  %v2007 = vadd.f32 0.0, %v2006
  %v2008 = vpop.f32.mrf.mxu0
  %2009 = vdwg.mxu0
  %2010 = vmatpush.bf16.msra.mxu0 %v1040
  %2011 = vmatpush.bf16.msra.mxu0 %v1036
  %2012 = vmatpush.bf16.msra.mxu0 %v1032
  %2013 = vmatpush.bf16.msra.mxu0 %v1028
  %2014 = vmatpush.bf16.msra.mxu0 %v1024
  %2015 = vmatpush.bf16.msra.mxu0 %v1020
  %2016 = vmatpush.bf16.msra.mxu0 %v1016
  %2017 = vmatpush.bf16.msra.mxu0 %v1012
  %2018 = vmatmul.bf16.gmra.mxu0 %v1983
  %v2019 = vpop.f32.mrf.mxu0
  %v2020 = vadd.f32 0.0, %v2019
  %v2021 = vpop.f32.mrf.mxu0
  %2022 = vdwg.mxu0
  %2023 = vmatpush.bf16.msra.mxu0 %v1041
  %2024 = vmatpush.bf16.msra.mxu0 %v1037
  %2025 = vmatpush.bf16.msra.mxu0 %v1033
  %2026 = vmatpush.bf16.msra.mxu0 %v1029
  %2027 = vmatpush.bf16.msra.mxu0 %v1025
  %2028 = vmatpush.bf16.msra.mxu0 %v1021
  %2029 = vmatpush.bf16.msra.mxu0 %v1017
  %2030 = vmatpush.bf16.msra.mxu0 %v1013
  %2031 = vmatmul.bf16.gmra.mxu0 %v1983
  %v2032 = vpop.f32.mrf.mxu0
  %v2033 = vadd.f32 0.0, %v2032
  %v2034 = vpop.f32.mrf.mxu0
  %2035 = vdwg.mxu0
  %v2036 = vadd.f32 %v1979, %v1994
  %v2037 = vadd.f32 %v1980, %v2007
  %v2038 = vadd.f32 %v1981, %v2020
  %v2039 = vadd.f32 %v1982, %v2033
  %v2040 = vld [vmem:[#allocation3 + $0x80] sm:$0xff]
  %v2041 = vld [vmem:[#allocation3 + $0x88] sm:$0xff]
  %v2042 = vld [vmem:[#allocation3 + $0x90] sm:$0xff]
  %v2043 = vld [vmem:[#allocation3 + $0x98] sm:$0xff]
  %v2044 = vpack.c.bf16 %v1976, %v1976
  %2045 = vmatpush.bf16.msra.mxu0 %v1259
  %2046 = vmatpush.bf16.msra.mxu0 %v1255
  %2047 = vmatpush.bf16.msra.mxu0 %v1251
  %2048 = vmatpush.bf16.msra.mxu0 %v1247
  %2049 = vmatpush.bf16.msra.mxu0 %v1243
  %2050 = vmatpush.bf16.msra.mxu0 %v1239
  %2051 = vmatpush.bf16.msra.mxu0 %v1235
  %2052 = vmatpush.bf16.msra.mxu0 %v1231
  %2053 = vmatmul.bf16.gmra.mxu0 %v2044
  %v2054 = vpop.f32.mrf.mxu0
  %v2055 = vadd.f32 0.0, %v2054
  %v2056 = vpop.f32.mrf.mxu0
  %2057 = vdwg.mxu0
  %2058 = vmatpush.bf16.msra.mxu0 %v1260
  %2059 = vmatpush.bf16.msra.mxu0 %v1256
  %2060 = vmatpush.bf16.msra.mxu0 %v1252
  %2061 = vmatpush.bf16.msra.mxu0 %v1248
  %2062 = vmatpush.bf16.msra.mxu0 %v1244
  %2063 = vmatpush.bf16.msra.mxu0 %v1240
  %2064 = vmatpush.bf16.msra.mxu0 %v1236
  %2065 = vmatpush.bf16.msra.mxu0 %v1232
  %2066 = vmatmul.bf16.gmra.mxu0 %v2044
  %v2067 = vpop.f32.mrf.mxu0
  %v2068 = vadd.f32 0.0, %v2067
  %v2069 = vpop.f32.mrf.mxu0
  %2070 = vdwg.mxu0
  %2071 = vmatpush.bf16.msra.mxu0 %v1261
  %2072 = vmatpush.bf16.msra.mxu0 %v1257
  %2073 = vmatpush.bf16.msra.mxu0 %v1253
  %2074 = vmatpush.bf16.msra.mxu0 %v1249
  %2075 = vmatpush.bf16.msra.mxu0 %v1245
  %2076 = vmatpush.bf16.msra.mxu0 %v1241
  %2077 = vmatpush.bf16.msra.mxu0 %v1237
  %2078 = vmatpush.bf16.msra.mxu0 %v1233
  %2079 = vmatmul.bf16.gmra.mxu0 %v2044
  %v2080 = vpop.f32.mrf.mxu0
  %v2081 = vadd.f32 0.0, %v2080
  %v2082 = vpop.f32.mrf.mxu0
  %2083 = vdwg.mxu0
  %2084 = vmatpush.bf16.msra.mxu0 %v1262
  %2085 = vmatpush.bf16.msra.mxu0 %v1258
  %2086 = vmatpush.bf16.msra.mxu0 %v1254
  %2087 = vmatpush.bf16.msra.mxu0 %v1250
  %2088 = vmatpush.bf16.msra.mxu0 %v1246
  %2089 = vmatpush.bf16.msra.mxu0 %v1242
  %2090 = vmatpush.bf16.msra.mxu0 %v1238
  %2091 = vmatpush.bf16.msra.mxu0 %v1234
  %2092 = vmatmul.bf16.gmra.mxu0 %v2044
  %v2093 = vpop.f32.mrf.mxu0
  %v2094 = vadd.f32 0.0, %v2093
  %v2095 = vpop.f32.mrf.mxu0
  %2096 = vdwg.mxu0
  %v2097 = vadd.f32 %v2040, %v2055
  %v2098 = vadd.f32 %v2041, %v2068
  %v2099 = vadd.f32 %v2042, %v2081
  %v2100 = vadd.f32 %v2043, %v2094
  %v2101 = vxor.u32 %v2036, 2147483648
  %v2102 = vmul.f32 %v2101, 1.442695
  %v2103 = vpow.pop %v2102
  %v2104 = vadd.f32 %v2103, 1.0
  %v2105 = vrcp.pop %v2104
  %v2106 = vmul.f32 %v2104, %v2105
  %v2107 = vsub.f32 1.0, %v2106
  %v2108 = vmul.f32 %v2105, %v2107
  %v2109 = vadd.f32 %v2105, %v2108
  %vm2110 = vweird.f32 %v2104
  %vm2111 = vweird.f32 %v2105
  %vm2112 = vmor %vm2110, %vm2111
  %v2113 = vsel %vm2112, %v2105, %v2109
  %v2114 = vand.u32 2147483647, %v2104
  %vm2115 = vcmp.eq.f32.partialorder %v2114, 8.507059e+37
  %v2116 = vand.u32 %v2104, 2147483648
  %v2117 = vor.u32 1.1754944e-38, %v2116
  %v2118 = vsel %vm2115, %v2117, %v2113
  %v2119 = vmul.f32 1.0, %v2118
  %v2120 = vxor.u32 %v2037, 2147483648
  %v2121 = vmul.f32 %v2120, 1.442695
  %v2122 = vpow.pop %v2121
  %v2123 = vadd.f32 %v2122, 1.0
  %v2124 = vrcp.pop %v2123
  %v2125 = vmul.f32 %v2123, %v2124
  %v2126 = vsub.f32 1.0, %v2125
  %v2127 = vmul.f32 %v2124, %v2126
  %v2128 = vadd.f32 %v2124, %v2127
  %vm2129 = vweird.f32 %v2123
  %vm2130 = vweird.f32 %v2124
  %vm2131 = vmor %vm2129, %vm2130
  %v2132 = vsel %vm2131, %v2124, %v2128
  %v2133 = vand.u32 2147483647, %v2123
  %vm2134 = vcmp.eq.f32.partialorder %v2133, 8.507059e+37
  %v2135 = vand.u32 %v2123, 2147483648
  %v2136 = vor.u32 1.1754944e-38, %v2135
  %v2137 = vsel %vm2134, %v2136, %v2132
  %v2138 = vmul.f32 1.0, %v2137
  %v2139 = vtanh.pop %v2038
  %v2140 = vxor.u32 %v2039, 2147483648
  %v2141 = vmul.f32 %v2140, 1.442695
  %v2142 = vpow.pop %v2141
  %v2143 = vadd.f32 %v2142, 1.0
  %v2144 = vrcp.pop %v2143
  %v2145 = vmul.f32 %v2143, %v2144
  %v2146 = vsub.f32 1.0, %v2145
  %v2147 = vmul.f32 %v2144, %v2146
  %v2148 = vadd.f32 %v2144, %v2147
  %vm2149 = vweird.f32 %v2143
  %vm2150 = vweird.f32 %v2144
  %vm2151 = vmor %vm2149, %vm2150
  %v2152 = vsel %vm2151, %v2144, %v2148
  %v2153 = vand.u32 2147483647, %v2143
  %vm2154 = vcmp.eq.f32.partialorder %v2153, 8.507059e+37
  %v2155 = vand.u32 %v2143, 2147483648
  %v2156 = vor.u32 1.1754944e-38, %v2155
  %v2157 = vsel %vm2154, %v2156, %v2152
  %v2158 = vmul.f32 1.0, %v2157
  %v2159 = vmul.f32 %v2138, %v1911
  %v2160 = vmul.f32 %v2119, %v2139
  %v2161 = vadd.f32 %v2159, %v2160
  %v2162 = vtanh.pop %v2161
  %v2163 = vmul.f32 %v2158, %v2162
  %v2164 = vxor.u32 %v2097, 2147483648
  %v2165 = vmul.f32 %v2164, 1.442695
  %v2166 = vpow.pop %v2165
  %v2167 = vadd.f32 %v2166, 1.0
  %v2168 = vrcp.pop %v2167
  %v2169 = vmul.f32 %v2167, %v2168
  %v2170 = vsub.f32 1.0, %v2169
  %v2171 = vmul.f32 %v2168, %v2170
  %v2172 = vadd.f32 %v2168, %v2171
  %vm2173 = vweird.f32 %v2167
  %vm2174 = vweird.f32 %v2168
  %vm2175 = vmor %vm2173, %vm2174
  %v2176 = vsel %vm2175, %v2168, %v2172
  %v2177 = vand.u32 2147483647, %v2167
  %vm2178 = vcmp.eq.f32.partialorder %v2177, 8.507059e+37
  %v2179 = vand.u32 %v2167, 2147483648
  %v2180 = vor.u32 1.1754944e-38, %v2179
  %v2181 = vsel %vm2178, %v2180, %v2176
  %v2182 = vmul.f32 1.0, %v2181
  %v2183 = vxor.u32 %v2098, 2147483648
  %v2184 = vmul.f32 %v2183, 1.442695
  %v2185 = vpow.pop %v2184
  %v2186 = vadd.f32 %v2185, 1.0
  %v2187 = vrcp.pop %v2186
  %v2188 = vmul.f32 %v2186, %v2187
  %v2189 = vsub.f32 1.0, %v2188
  %v2190 = vmul.f32 %v2187, %v2189
  %v2191 = vadd.f32 %v2187, %v2190
  %vm2192 = vweird.f32 %v2186
  %vm2193 = vweird.f32 %v2187
  %vm2194 = vmor %vm2192, %vm2193
  %v2195 = vsel %vm2194, %v2187, %v2191
  %v2196 = vand.u32 2147483647, %v2186
  %vm2197 = vcmp.eq.f32.partialorder %v2196, 8.507059e+37
  %v2198 = vand.u32 %v2186, 2147483648
  %v2199 = vor.u32 1.1754944e-38, %v2198
  %v2200 = vsel %vm2197, %v2199, %v2195
  %v2201 = vmul.f32 1.0, %v2200
  %v2202 = vtanh.pop %v2099
  %v2203 = vxor.u32 %v2100, 2147483648
  %v2204 = vmul.f32 %v2203, 1.442695
  %v2205 = vpow.pop %v2204
  %v2206 = vadd.f32 %v2205, 1.0
  %v2207 = vrcp.pop %v2206
  %v2208 = vmul.f32 %v2206, %v2207
  %v2209 = vsub.f32 1.0, %v2208
  %v2210 = vmul.f32 %v2207, %v2209
  %v2211 = vadd.f32 %v2207, %v2210
  %vm2212 = vweird.f32 %v2206
  %vm2213 = vweird.f32 %v2207
  %vm2214 = vmor %vm2212, %vm2213
  %v2215 = vsel %vm2214, %v2207, %v2211
  %v2216 = vand.u32 2147483647, %v2206
  %vm2217 = vcmp.eq.f32.partialorder %v2216, 8.507059e+37
  %v2218 = vand.u32 %v2206, 2147483648
  %v2219 = vor.u32 1.1754944e-38, %v2218
  %v2220 = vsel %vm2217, %v2219, %v2215
  %v2221 = vmul.f32 1.0, %v2220
  %v2222 = vmul.f32 %v2201, %v1974
  %v2223 = vmul.f32 %v2182, %v2202
  %v2224 = vadd.f32 %v2222, %v2223
  %v2225 = vtanh.pop %v2224
  %v2226 = vmul.f32 %v2221, %v2225
  %2227 = vst [vmem:[%s8 + $0x18] sm:$0xff] %v2163
  %2228 = vst [vmem:[%s66 + $0x20] sm:$0xff] %v2226
  %v2229 = vld [vmem:[#allocation2 + $0x80] sm:$0xff]
  %v2230 = vld [vmem:[#allocation2 + $0x88] sm:$0xff]
  %v2231 = vld [vmem:[#allocation2 + $0x90] sm:$0xff]
  %v2232 = vld [vmem:[#allocation2 + $0x98] sm:$0xff]
  %v2233 = vpack.c.bf16 %v2163, %v2163
  %2234 = vmatpush.bf16.msra.mxu0 %v1038
  %2235 = vmatpush.bf16.msra.mxu0 %v1034
  %2236 = vmatpush.bf16.msra.mxu0 %v1030
  %2237 = vmatpush.bf16.msra.mxu0 %v1026
  %2238 = vmatpush.bf16.msra.mxu0 %v1022
  %2239 = vmatpush.bf16.msra.mxu0 %v1018
  %2240 = vmatpush.bf16.msra.mxu0 %v1014
  %2241 = vmatpush.bf16.msra.mxu0 %v1010
  %2242 = vmatmul.bf16.gmra.mxu0 %v2233
  %v2243 = vpop.f32.mrf.mxu0
  %v2244 = vadd.f32 0.0, %v2243
  %v2245 = vpop.f32.mrf.mxu0
  %2246 = vdwg.mxu0
  %2247 = vmatpush.bf16.msra.mxu0 %v1039
  %2248 = vmatpush.bf16.msra.mxu0 %v1035
  %2249 = vmatpush.bf16.msra.mxu0 %v1031
  %2250 = vmatpush.bf16.msra.mxu0 %v1027
  %2251 = vmatpush.bf16.msra.mxu0 %v1023
  %2252 = vmatpush.bf16.msra.mxu0 %v1019
  %2253 = vmatpush.bf16.msra.mxu0 %v1015
  %2254 = vmatpush.bf16.msra.mxu0 %v1011
  %2255 = vmatmul.bf16.gmra.mxu0 %v2233
  %v2256 = vpop.f32.mrf.mxu0
  %v2257 = vadd.f32 0.0, %v2256
  %v2258 = vpop.f32.mrf.mxu0
  %2259 = vdwg.mxu0
  %2260 = vmatpush.bf16.msra.mxu0 %v1040
  %2261 = vmatpush.bf16.msra.mxu0 %v1036
  %2262 = vmatpush.bf16.msra.mxu0 %v1032
  %2263 = vmatpush.bf16.msra.mxu0 %v1028
  %2264 = vmatpush.bf16.msra.mxu0 %v1024
  %2265 = vmatpush.bf16.msra.mxu0 %v1020
  %2266 = vmatpush.bf16.msra.mxu0 %v1016
  %2267 = vmatpush.bf16.msra.mxu0 %v1012
  %2268 = vmatmul.bf16.gmra.mxu0 %v2233
  %v2269 = vpop.f32.mrf.mxu0
  %v2270 = vadd.f32 0.0, %v2269
  %v2271 = vpop.f32.mrf.mxu0
  %2272 = vdwg.mxu0
  %2273 = vmatpush.bf16.msra.mxu0 %v1041
  %2274 = vmatpush.bf16.msra.mxu0 %v1037
  %2275 = vmatpush.bf16.msra.mxu0 %v1033
  %2276 = vmatpush.bf16.msra.mxu0 %v1029
  %2277 = vmatpush.bf16.msra.mxu0 %v1025
  %2278 = vmatpush.bf16.msra.mxu0 %v1021
  %2279 = vmatpush.bf16.msra.mxu0 %v1017
  %2280 = vmatpush.bf16.msra.mxu0 %v1013
  %2281 = vmatmul.bf16.gmra.mxu0 %v2233
  %v2282 = vpop.f32.mrf.mxu0
  %v2283 = vadd.f32 0.0, %v2282
  %v2284 = vpop.f32.mrf.mxu0
  %2285 = vdwg.mxu0
  %v2286 = vadd.f32 %v2229, %v2244
  %v2287 = vadd.f32 %v2230, %v2257
  %v2288 = vadd.f32 %v2231, %v2270
  %v2289 = vadd.f32 %v2232, %v2283
  %v2290 = vld [vmem:[#allocation3 + $0x60] sm:$0xff]
  %v2291 = vld [vmem:[#allocation3 + $0x68] sm:$0xff]
  %v2292 = vld [vmem:[#allocation3 + $0x70] sm:$0xff]
  %v2293 = vld [vmem:[#allocation3 + $0x78] sm:$0xff]
  %v2294 = vpack.c.bf16 %v2226, %v2226
  %2295 = vmatpush.bf16.msra.mxu0 %v1259
  %2296 = vmatpush.bf16.msra.mxu0 %v1255
  %2297 = vmatpush.bf16.msra.mxu0 %v1251
  %2298 = vmatpush.bf16.msra.mxu0 %v1247
  %2299 = vmatpush.bf16.msra.mxu0 %v1243
  %2300 = vmatpush.bf16.msra.mxu0 %v1239
  %2301 = vmatpush.bf16.msra.mxu0 %v1235
  %2302 = vmatpush.bf16.msra.mxu0 %v1231
  %2303 = vmatmul.bf16.gmra.mxu0 %v2294
  %v2304 = vpop.f32.mrf.mxu0
  %v2305 = vadd.f32 0.0, %v2304
  %v2306 = vpop.f32.mrf.mxu0
  %2307 = vdwg.mxu0
  %2308 = vmatpush.bf16.msra.mxu0 %v1260
  %2309 = vmatpush.bf16.msra.mxu0 %v1256
  %2310 = vmatpush.bf16.msra.mxu0 %v1252
  %2311 = vmatpush.bf16.msra.mxu0 %v1248
  %2312 = vmatpush.bf16.msra.mxu0 %v1244
  %2313 = vmatpush.bf16.msra.mxu0 %v1240
  %2314 = vmatpush.bf16.msra.mxu0 %v1236
  %2315 = vmatpush.bf16.msra.mxu0 %v1232
  %2316 = vmatmul.bf16.gmra.mxu0 %v2294
  %v2317 = vpop.f32.mrf.mxu0
  %v2318 = vadd.f32 0.0, %v2317
  %v2319 = vpop.f32.mrf.mxu0
  %2320 = vdwg.mxu0
  %2321 = vmatpush.bf16.msra.mxu0 %v1261
  %2322 = vmatpush.bf16.msra.mxu0 %v1257
  %2323 = vmatpush.bf16.msra.mxu0 %v1253
  %2324 = vmatpush.bf16.msra.mxu0 %v1249
  %2325 = vmatpush.bf16.msra.mxu0 %v1245
  %2326 = vmatpush.bf16.msra.mxu0 %v1241
  %2327 = vmatpush.bf16.msra.mxu0 %v1237
  %2328 = vmatpush.bf16.msra.mxu0 %v1233
  %2329 = vmatmul.bf16.gmra.mxu0 %v2294
  %v2330 = vpop.f32.mrf.mxu0
  %v2331 = vadd.f32 0.0, %v2330
  %v2332 = vpop.f32.mrf.mxu0
  %2333 = vdwg.mxu0
  %2334 = vmatpush.bf16.msra.mxu0 %v1262
  %2335 = vmatpush.bf16.msra.mxu0 %v1258
  %2336 = vmatpush.bf16.msra.mxu0 %v1254
  %2337 = vmatpush.bf16.msra.mxu0 %v1250
  %2338 = vmatpush.bf16.msra.mxu0 %v1246
  %2339 = vmatpush.bf16.msra.mxu0 %v1242
  %2340 = vmatpush.bf16.msra.mxu0 %v1238
  %2341 = vmatpush.bf16.msra.mxu0 %v1234
  %2342 = vmatmul.bf16.gmra.mxu0 %v2294
  %v2343 = vpop.f32.mrf.mxu0
  %v2344 = vadd.f32 0.0, %v2343
  %v2345 = vpop.f32.mrf.mxu0
  %2346 = vdwg.mxu0
  %v2347 = vadd.f32 %v2290, %v2305
  %v2348 = vadd.f32 %v2291, %v2318
  %v2349 = vadd.f32 %v2292, %v2331
  %v2350 = vadd.f32 %v2293, %v2344
  %v2351 = vxor.u32 %v2286, 2147483648
  %v2352 = vmul.f32 %v2351, 1.442695
  %v2353 = vpow.pop %v2352
  %v2354 = vadd.f32 %v2353, 1.0
  %v2355 = vrcp.pop %v2354
  %v2356 = vmul.f32 %v2354, %v2355
  %v2357 = vsub.f32 1.0, %v2356
  %v2358 = vmul.f32 %v2355, %v2357
  %v2359 = vadd.f32 %v2355, %v2358
  %vm2360 = vweird.f32 %v2354
  %vm2361 = vweird.f32 %v2355
  %vm2362 = vmor %vm2360, %vm2361
  %v2363 = vsel %vm2362, %v2355, %v2359
  %v2364 = vand.u32 2147483647, %v2354
  %vm2365 = vcmp.eq.f32.partialorder %v2364, 8.507059e+37
  %v2366 = vand.u32 %v2354, 2147483648
  %v2367 = vor.u32 1.1754944e-38, %v2366
  %v2368 = vsel %vm2365, %v2367, %v2363
  %v2369 = vmul.f32 1.0, %v2368
  %v2370 = vxor.u32 %v2287, 2147483648
  %v2371 = vmul.f32 %v2370, 1.442695
  %v2372 = vpow.pop %v2371
  %v2373 = vadd.f32 %v2372, 1.0
  %v2374 = vrcp.pop %v2373
  %v2375 = vmul.f32 %v2373, %v2374
  %v2376 = vsub.f32 1.0, %v2375
  %v2377 = vmul.f32 %v2374, %v2376
  %v2378 = vadd.f32 %v2374, %v2377
  %vm2379 = vweird.f32 %v2373
  %vm2380 = vweird.f32 %v2374
  %vm2381 = vmor %vm2379, %vm2380
  %v2382 = vsel %vm2381, %v2374, %v2378
  %v2383 = vand.u32 2147483647, %v2373
  %vm2384 = vcmp.eq.f32.partialorder %v2383, 8.507059e+37
  %v2385 = vand.u32 %v2373, 2147483648
  %v2386 = vor.u32 1.1754944e-38, %v2385
  %v2387 = vsel %vm2384, %v2386, %v2382
  %v2388 = vmul.f32 1.0, %v2387
  %v2389 = vtanh.pop %v2288
  %v2390 = vxor.u32 %v2289, 2147483648
  %v2391 = vmul.f32 %v2390, 1.442695
  %v2392 = vpow.pop %v2391
  %v2393 = vadd.f32 %v2392, 1.0
  %v2394 = vrcp.pop %v2393
  %v2395 = vmul.f32 %v2393, %v2394
  %v2396 = vsub.f32 1.0, %v2395
  %v2397 = vmul.f32 %v2394, %v2396
  %v2398 = vadd.f32 %v2394, %v2397
  %vm2399 = vweird.f32 %v2393
  %vm2400 = vweird.f32 %v2394
  %vm2401 = vmor %vm2399, %vm2400
  %v2402 = vsel %vm2401, %v2394, %v2398
  %v2403 = vand.u32 2147483647, %v2393
  %vm2404 = vcmp.eq.f32.partialorder %v2403, 8.507059e+37
  %v2405 = vand.u32 %v2393, 2147483648
  %v2406 = vor.u32 1.1754944e-38, %v2405
  %v2407 = vsel %vm2404, %v2406, %v2402
  %v2408 = vmul.f32 1.0, %v2407
  %v2409 = vmul.f32 %v2388, %v2161
  %v2410 = vmul.f32 %v2369, %v2389
  %v2411 = vadd.f32 %v2409, %v2410
  %v2412 = vtanh.pop %v2411
  %v2413 = vmul.f32 %v2408, %v2412
  %v2414 = vxor.u32 %v2347, 2147483648
  %v2415 = vmul.f32 %v2414, 1.442695
  %v2416 = vpow.pop %v2415
  %v2417 = vadd.f32 %v2416, 1.0
  %v2418 = vrcp.pop %v2417
  %v2419 = vmul.f32 %v2417, %v2418
  %v2420 = vsub.f32 1.0, %v2419
  %v2421 = vmul.f32 %v2418, %v2420
  %v2422 = vadd.f32 %v2418, %v2421
  %vm2423 = vweird.f32 %v2417
  %vm2424 = vweird.f32 %v2418
  %vm2425 = vmor %vm2423, %vm2424
  %v2426 = vsel %vm2425, %v2418, %v2422
  %v2427 = vand.u32 2147483647, %v2417
  %vm2428 = vcmp.eq.f32.partialorder %v2427, 8.507059e+37
  %v2429 = vand.u32 %v2417, 2147483648
  %v2430 = vor.u32 1.1754944e-38, %v2429
  %v2431 = vsel %vm2428, %v2430, %v2426
  %v2432 = vmul.f32 1.0, %v2431
  %v2433 = vxor.u32 %v2348, 2147483648
  %v2434 = vmul.f32 %v2433, 1.442695
  %v2435 = vpow.pop %v2434
  %v2436 = vadd.f32 %v2435, 1.0
  %v2437 = vrcp.pop %v2436
  %v2438 = vmul.f32 %v2436, %v2437
  %v2439 = vsub.f32 1.0, %v2438
  %v2440 = vmul.f32 %v2437, %v2439
  %v2441 = vadd.f32 %v2437, %v2440
  %vm2442 = vweird.f32 %v2436
  %vm2443 = vweird.f32 %v2437
  %vm2444 = vmor %vm2442, %vm2443
  %v2445 = vsel %vm2444, %v2437, %v2441
  %v2446 = vand.u32 2147483647, %v2436
  %vm2447 = vcmp.eq.f32.partialorder %v2446, 8.507059e+37
  %v2448 = vand.u32 %v2436, 2147483648
  %v2449 = vor.u32 1.1754944e-38, %v2448
  %v2450 = vsel %vm2447, %v2449, %v2445
  %v2451 = vmul.f32 1.0, %v2450
  %v2452 = vtanh.pop %v2349
  %v2453 = vxor.u32 %v2350, 2147483648
  %v2454 = vmul.f32 %v2453, 1.442695
  %v2455 = vpow.pop %v2454
  %v2456 = vadd.f32 %v2455, 1.0
  %v2457 = vrcp.pop %v2456
  %v2458 = vmul.f32 %v2456, %v2457
  %v2459 = vsub.f32 1.0, %v2458
  %v2460 = vmul.f32 %v2457, %v2459
  %v2461 = vadd.f32 %v2457, %v2460
  %vm2462 = vweird.f32 %v2456
  %vm2463 = vweird.f32 %v2457
  %vm2464 = vmor %vm2462, %vm2463
  %v2465 = vsel %vm2464, %v2457, %v2461
  %v2466 = vand.u32 2147483647, %v2456
  %vm2467 = vcmp.eq.f32.partialorder %v2466, 8.507059e+37
  %v2468 = vand.u32 %v2456, 2147483648
  %v2469 = vor.u32 1.1754944e-38, %v2468
  %v2470 = vsel %vm2467, %v2469, %v2465
  %v2471 = vmul.f32 1.0, %v2470
  %v2472 = vmul.f32 %v2451, %v2224
  %v2473 = vmul.f32 %v2432, %v2452
  %v2474 = vadd.f32 %v2472, %v2473
  %v2475 = vtanh.pop %v2474
  %v2476 = vmul.f32 %v2471, %v2475
  %2477 = vst [vmem:[%s8 + $0x20] sm:$0xff] %v2413
  %2478 = vst [vmem:[%s66 + $0x18] sm:$0xff] %v2476
  %v2479 = vld [vmem:[#allocation2 + $0xa0] sm:$0xff]
  %v2480 = vld [vmem:[#allocation2 + $0xa8] sm:$0xff]
  %v2481 = vld [vmem:[#allocation2 + $0xb0] sm:$0xff]
  %v2482 = vld [vmem:[#allocation2 + $0xb8] sm:$0xff]
  %v2483 = vpack.c.bf16 %v2413, %v2413
  %2484 = vmatpush.bf16.msra.mxu0 %v1038
  %2485 = vmatpush.bf16.msra.mxu0 %v1034
  %2486 = vmatpush.bf16.msra.mxu0 %v1030
  %2487 = vmatpush.bf16.msra.mxu0 %v1026
  %2488 = vmatpush.bf16.msra.mxu0 %v1022
  %2489 = vmatpush.bf16.msra.mxu0 %v1018
  %2490 = vmatpush.bf16.msra.mxu0 %v1014
  %2491 = vmatpush.bf16.msra.mxu0 %v1010
  %2492 = vmatmul.bf16.gmra.mxu0 %v2483
  %v2493 = vpop.f32.mrf.mxu0
  %v2494 = vadd.f32 0.0, %v2493
  %v2495 = vpop.f32.mrf.mxu0
  %2496 = vdwg.mxu0
  %2497 = vmatpush.bf16.msra.mxu0 %v1039
  %2498 = vmatpush.bf16.msra.mxu0 %v1035
  %2499 = vmatpush.bf16.msra.mxu0 %v1031
  %2500 = vmatpush.bf16.msra.mxu0 %v1027
  %2501 = vmatpush.bf16.msra.mxu0 %v1023
  %2502 = vmatpush.bf16.msra.mxu0 %v1019
  %2503 = vmatpush.bf16.msra.mxu0 %v1015
  %2504 = vmatpush.bf16.msra.mxu0 %v1011
  %2505 = vmatmul.bf16.gmra.mxu0 %v2483
  %v2506 = vpop.f32.mrf.mxu0
  %v2507 = vadd.f32 0.0, %v2506
  %v2508 = vpop.f32.mrf.mxu0
  %2509 = vdwg.mxu0
  %2510 = vmatpush.bf16.msra.mxu0 %v1040
  %2511 = vmatpush.bf16.msra.mxu0 %v1036
  %2512 = vmatpush.bf16.msra.mxu0 %v1032
  %2513 = vmatpush.bf16.msra.mxu0 %v1028
  %2514 = vmatpush.bf16.msra.mxu0 %v1024
  %2515 = vmatpush.bf16.msra.mxu0 %v1020
  %2516 = vmatpush.bf16.msra.mxu0 %v1016
  %2517 = vmatpush.bf16.msra.mxu0 %v1012
  %2518 = vmatmul.bf16.gmra.mxu0 %v2483
  %v2519 = vpop.f32.mrf.mxu0
  %v2520 = vadd.f32 0.0, %v2519
  %v2521 = vpop.f32.mrf.mxu0
  %2522 = vdwg.mxu0
  %2523 = vmatpush.bf16.msra.mxu0 %v1041
  %2524 = vmatpush.bf16.msra.mxu0 %v1037
  %2525 = vmatpush.bf16.msra.mxu0 %v1033
  %2526 = vmatpush.bf16.msra.mxu0 %v1029
  %2527 = vmatpush.bf16.msra.mxu0 %v1025
  %2528 = vmatpush.bf16.msra.mxu0 %v1021
  %2529 = vmatpush.bf16.msra.mxu0 %v1017
  %2530 = vmatpush.bf16.msra.mxu0 %v1013
  %2531 = vmatmul.bf16.gmra.mxu0 %v2483
  %v2532 = vpop.f32.mrf.mxu0
  %v2533 = vadd.f32 0.0, %v2532
  %v2534 = vpop.f32.mrf.mxu0
  %2535 = vdwg.mxu0
  %v2536 = vadd.f32 %v2479, %v2494
  %v2537 = vadd.f32 %v2480, %v2507
  %v2538 = vadd.f32 %v2481, %v2520
  %v2539 = vadd.f32 %v2482, %v2533
  %v2540 = vld [vmem:[#allocation3 + $0x40] sm:$0xff]
  %v2541 = vld [vmem:[#allocation3 + $0x48] sm:$0xff]
  %v2542 = vld [vmem:[#allocation3 + $0x50] sm:$0xff]
  %v2543 = vld [vmem:[#allocation3 + $0x58] sm:$0xff]
  %v2544 = vpack.c.bf16 %v2476, %v2476
  %2545 = vmatpush.bf16.msra.mxu0 %v1259
  %2546 = vmatpush.bf16.msra.mxu0 %v1255
  %2547 = vmatpush.bf16.msra.mxu0 %v1251
  %2548 = vmatpush.bf16.msra.mxu0 %v1247
  %2549 = vmatpush.bf16.msra.mxu0 %v1243
  %2550 = vmatpush.bf16.msra.mxu0 %v1239
  %2551 = vmatpush.bf16.msra.mxu0 %v1235
  %2552 = vmatpush.bf16.msra.mxu0 %v1231
  %2553 = vmatmul.bf16.gmra.mxu0 %v2544
  %v2554 = vpop.f32.mrf.mxu0
  %v2555 = vadd.f32 0.0, %v2554
  %v2556 = vpop.f32.mrf.mxu0
  %2557 = vdwg.mxu0
  %2558 = vmatpush.bf16.msra.mxu0 %v1260
  %2559 = vmatpush.bf16.msra.mxu0 %v1256
  %2560 = vmatpush.bf16.msra.mxu0 %v1252
  %2561 = vmatpush.bf16.msra.mxu0 %v1248
  %2562 = vmatpush.bf16.msra.mxu0 %v1244
  %2563 = vmatpush.bf16.msra.mxu0 %v1240
  %2564 = vmatpush.bf16.msra.mxu0 %v1236
  %2565 = vmatpush.bf16.msra.mxu0 %v1232
  %2566 = vmatmul.bf16.gmra.mxu0 %v2544
  %v2567 = vpop.f32.mrf.mxu0
  %v2568 = vadd.f32 0.0, %v2567
  %v2569 = vpop.f32.mrf.mxu0
  %2570 = vdwg.mxu0
  %2571 = vmatpush.bf16.msra.mxu0 %v1261
  %2572 = vmatpush.bf16.msra.mxu0 %v1257
  %2573 = vmatpush.bf16.msra.mxu0 %v1253
  %2574 = vmatpush.bf16.msra.mxu0 %v1249
  %2575 = vmatpush.bf16.msra.mxu0 %v1245
  %2576 = vmatpush.bf16.msra.mxu0 %v1241
  %2577 = vmatpush.bf16.msra.mxu0 %v1237
  %2578 = vmatpush.bf16.msra.mxu0 %v1233
  %2579 = vmatmul.bf16.gmra.mxu0 %v2544
  %v2580 = vpop.f32.mrf.mxu0
  %v2581 = vadd.f32 0.0, %v2580
  %v2582 = vpop.f32.mrf.mxu0
  %2583 = vdwg.mxu0
  %2584 = vmatpush.bf16.msra.mxu0 %v1262
  %2585 = vmatpush.bf16.msra.mxu0 %v1258
  %2586 = vmatpush.bf16.msra.mxu0 %v1254
  %2587 = vmatpush.bf16.msra.mxu0 %v1250
  %2588 = vmatpush.bf16.msra.mxu0 %v1246
  %2589 = vmatpush.bf16.msra.mxu0 %v1242
  %2590 = vmatpush.bf16.msra.mxu0 %v1238
  %2591 = vmatpush.bf16.msra.mxu0 %v1234
  %2592 = vmatmul.bf16.gmra.mxu0 %v2544
  %v2593 = vpop.f32.mrf.mxu0
  %v2594 = vadd.f32 0.0, %v2593
  %v2595 = vpop.f32.mrf.mxu0
  %2596 = vdwg.mxu0
  %v2597 = vadd.f32 %v2540, %v2555
  %v2598 = vadd.f32 %v2541, %v2568
  %v2599 = vadd.f32 %v2542, %v2581
  %v2600 = vadd.f32 %v2543, %v2594
  %v2601 = vxor.u32 %v2536, 2147483648
  %v2602 = vmul.f32 %v2601, 1.442695
  %v2603 = vpow.pop %v2602
  %v2604 = vadd.f32 %v2603, 1.0
  %v2605 = vrcp.pop %v2604
  %v2606 = vmul.f32 %v2604, %v2605
  %v2607 = vsub.f32 1.0, %v2606
  %v2608 = vmul.f32 %v2605, %v2607
  %v2609 = vadd.f32 %v2605, %v2608
  %vm2610 = vweird.f32 %v2604
  %vm2611 = vweird.f32 %v2605
  %vm2612 = vmor %vm2610, %vm2611
  %v2613 = vsel %vm2612, %v2605, %v2609
  %v2614 = vand.u32 2147483647, %v2604
  %vm2615 = vcmp.eq.f32.partialorder %v2614, 8.507059e+37
  %v2616 = vand.u32 %v2604, 2147483648
  %v2617 = vor.u32 1.1754944e-38, %v2616
  %v2618 = vsel %vm2615, %v2617, %v2613
  %v2619 = vmul.f32 1.0, %v2618
  %v2620 = vxor.u32 %v2537, 2147483648
  %v2621 = vmul.f32 %v2620, 1.442695
  %v2622 = vpow.pop %v2621
  %v2623 = vadd.f32 %v2622, 1.0
  %v2624 = vrcp.pop %v2623
  %v2625 = vmul.f32 %v2623, %v2624
  %v2626 = vsub.f32 1.0, %v2625
  %v2627 = vmul.f32 %v2624, %v2626
  %v2628 = vadd.f32 %v2624, %v2627
  %vm2629 = vweird.f32 %v2623
  %vm2630 = vweird.f32 %v2624
  %vm2631 = vmor %vm2629, %vm2630
  %v2632 = vsel %vm2631, %v2624, %v2628
  %v2633 = vand.u32 2147483647, %v2623
  %vm2634 = vcmp.eq.f32.partialorder %v2633, 8.507059e+37
  %v2635 = vand.u32 %v2623, 2147483648
  %v2636 = vor.u32 1.1754944e-38, %v2635
  %v2637 = vsel %vm2634, %v2636, %v2632
  %v2638 = vmul.f32 1.0, %v2637
  %v2639 = vtanh.pop %v2538
  %v2640 = vxor.u32 %v2539, 2147483648
  %v2641 = vmul.f32 %v2640, 1.442695
  %v2642 = vpow.pop %v2641
  %v2643 = vadd.f32 %v2642, 1.0
  %v2644 = vrcp.pop %v2643
  %v2645 = vmul.f32 %v2643, %v2644
  %v2646 = vsub.f32 1.0, %v2645
  %v2647 = vmul.f32 %v2644, %v2646
  %v2648 = vadd.f32 %v2644, %v2647
  %vm2649 = vweird.f32 %v2643
  %vm2650 = vweird.f32 %v2644
  %vm2651 = vmor %vm2649, %vm2650
  %v2652 = vsel %vm2651, %v2644, %v2648
  %v2653 = vand.u32 2147483647, %v2643
  %vm2654 = vcmp.eq.f32.partialorder %v2653, 8.507059e+37
  %v2655 = vand.u32 %v2643, 2147483648
  %v2656 = vor.u32 1.1754944e-38, %v2655
  %v2657 = vsel %vm2654, %v2656, %v2652
  %v2658 = vmul.f32 1.0, %v2657
  %v2659 = vmul.f32 %v2638, %v2411
  %v2660 = vmul.f32 %v2619, %v2639
  %v2661 = vadd.f32 %v2659, %v2660
  %v2662 = vtanh.pop %v2661
  %v2663 = vmul.f32 %v2658, %v2662
  %v2664 = vxor.u32 %v2597, 2147483648
  %v2665 = vmul.f32 %v2664, 1.442695
  %v2666 = vpow.pop %v2665
  %v2667 = vadd.f32 %v2666, 1.0
  %v2668 = vrcp.pop %v2667
  %v2669 = vmul.f32 %v2667, %v2668
  %v2670 = vsub.f32 1.0, %v2669
  %v2671 = vmul.f32 %v2668, %v2670
  %v2672 = vadd.f32 %v2668, %v2671
  %vm2673 = vweird.f32 %v2667
  %vm2674 = vweird.f32 %v2668
  %vm2675 = vmor %vm2673, %vm2674
  %v2676 = vsel %vm2675, %v2668, %v2672
  %v2677 = vand.u32 2147483647, %v2667
  %vm2678 = vcmp.eq.f32.partialorder %v2677, 8.507059e+37
  %v2679 = vand.u32 %v2667, 2147483648
  %v2680 = vor.u32 1.1754944e-38, %v2679
  %v2681 = vsel %vm2678, %v2680, %v2676
  %v2682 = vmul.f32 1.0, %v2681
  %v2683 = vxor.u32 %v2598, 2147483648
  %v2684 = vmul.f32 %v2683, 1.442695
  %v2685 = vpow.pop %v2684
  %v2686 = vadd.f32 %v2685, 1.0
  %v2687 = vrcp.pop %v2686
  %v2688 = vmul.f32 %v2686, %v2687
  %v2689 = vsub.f32 1.0, %v2688
  %v2690 = vmul.f32 %v2687, %v2689
  %v2691 = vadd.f32 %v2687, %v2690
  %vm2692 = vweird.f32 %v2686
  %vm2693 = vweird.f32 %v2687
  %vm2694 = vmor %vm2692, %vm2693
  %v2695 = vsel %vm2694, %v2687, %v2691
  %v2696 = vand.u32 2147483647, %v2686
  %vm2697 = vcmp.eq.f32.partialorder %v2696, 8.507059e+37
  %v2698 = vand.u32 %v2686, 2147483648
  %v2699 = vor.u32 1.1754944e-38, %v2698
  %v2700 = vsel %vm2697, %v2699, %v2695
  %v2701 = vmul.f32 1.0, %v2700
  %v2702 = vtanh.pop %v2599
  %v2703 = vxor.u32 %v2600, 2147483648
  %v2704 = vmul.f32 %v2703, 1.442695
  %v2705 = vpow.pop %v2704
  %v2706 = vadd.f32 %v2705, 1.0
  %v2707 = vrcp.pop %v2706
  %v2708 = vmul.f32 %v2706, %v2707
  %v2709 = vsub.f32 1.0, %v2708
  %v2710 = vmul.f32 %v2707, %v2709
  %v2711 = vadd.f32 %v2707, %v2710
  %vm2712 = vweird.f32 %v2706
  %vm2713 = vweird.f32 %v2707
  %vm2714 = vmor %vm2712, %vm2713
  %v2715 = vsel %vm2714, %v2707, %v2711
  %v2716 = vand.u32 2147483647, %v2706
  %vm2717 = vcmp.eq.f32.partialorder %v2716, 8.507059e+37
  %v2718 = vand.u32 %v2706, 2147483648
  %v2719 = vor.u32 1.1754944e-38, %v2718
  %v2720 = vsel %vm2717, %v2719, %v2715
  %v2721 = vmul.f32 1.0, %v2720
  %v2722 = vmul.f32 %v2701, %v2474
  %v2723 = vmul.f32 %v2682, %v2702
  %v2724 = vadd.f32 %v2722, %v2723
  %v2725 = vtanh.pop %v2724
  %v2726 = vmul.f32 %v2721, %v2725
  %2727 = vst [vmem:[%s8 + $0x28] sm:$0xff] %v2663
  %2728 = vst [vmem:[%s66 + $0x10] sm:$0xff] %v2726
  %v2729 = vld [vmem:[#allocation2 + $0xc0] sm:$0xff]
  %v2730 = vld [vmem:[#allocation2 + $0xc8] sm:$0xff]
  %v2731 = vld [vmem:[#allocation2 + $0xd0] sm:$0xff]
  %v2732 = vld [vmem:[#allocation2 + $0xd8] sm:$0xff]
  %v2733 = vpack.c.bf16 %v2663, %v2663
  %2734 = vmatpush.bf16.msra.mxu0 %v1038
  %2735 = vmatpush.bf16.msra.mxu0 %v1034
  %2736 = vmatpush.bf16.msra.mxu0 %v1030
  %2737 = vmatpush.bf16.msra.mxu0 %v1026
  %2738 = vmatpush.bf16.msra.mxu0 %v1022
  %2739 = vmatpush.bf16.msra.mxu0 %v1018
  %2740 = vmatpush.bf16.msra.mxu0 %v1014
  %2741 = vmatpush.bf16.msra.mxu0 %v1010
  %2742 = vmatmul.bf16.gmra.mxu0 %v2733
  %v2743 = vpop.f32.mrf.mxu0
  %v2744 = vadd.f32 0.0, %v2743
  %v2745 = vpop.f32.mrf.mxu0
  %2746 = vdwg.mxu0
  %2747 = vmatpush.bf16.msra.mxu0 %v1039
  %2748 = vmatpush.bf16.msra.mxu0 %v1035
  %2749 = vmatpush.bf16.msra.mxu0 %v1031
  %2750 = vmatpush.bf16.msra.mxu0 %v1027
  %2751 = vmatpush.bf16.msra.mxu0 %v1023
  %2752 = vmatpush.bf16.msra.mxu0 %v1019
  %2753 = vmatpush.bf16.msra.mxu0 %v1015
  %2754 = vmatpush.bf16.msra.mxu0 %v1011
  %2755 = vmatmul.bf16.gmra.mxu0 %v2733
  %v2756 = vpop.f32.mrf.mxu0
  %v2757 = vadd.f32 0.0, %v2756
  %v2758 = vpop.f32.mrf.mxu0
  %2759 = vdwg.mxu0
  %2760 = vmatpush.bf16.msra.mxu0 %v1040
  %2761 = vmatpush.bf16.msra.mxu0 %v1036
  %2762 = vmatpush.bf16.msra.mxu0 %v1032
  %2763 = vmatpush.bf16.msra.mxu0 %v1028
  %2764 = vmatpush.bf16.msra.mxu0 %v1024
  %2765 = vmatpush.bf16.msra.mxu0 %v1020
  %2766 = vmatpush.bf16.msra.mxu0 %v1016
  %2767 = vmatpush.bf16.msra.mxu0 %v1012
  %2768 = vmatmul.bf16.gmra.mxu0 %v2733
  %v2769 = vpop.f32.mrf.mxu0
  %v2770 = vadd.f32 0.0, %v2769
  %v2771 = vpop.f32.mrf.mxu0
  %2772 = vdwg.mxu0
  %2773 = vmatpush.bf16.msra.mxu0 %v1041
  %2774 = vmatpush.bf16.msra.mxu0 %v1037
  %2775 = vmatpush.bf16.msra.mxu0 %v1033
  %2776 = vmatpush.bf16.msra.mxu0 %v1029
  %2777 = vmatpush.bf16.msra.mxu0 %v1025
  %2778 = vmatpush.bf16.msra.mxu0 %v1021
  %2779 = vmatpush.bf16.msra.mxu0 %v1017
  %2780 = vmatpush.bf16.msra.mxu0 %v1013
  %2781 = vmatmul.bf16.gmra.mxu0 %v2733
  %v2782 = vpop.f32.mrf.mxu0
  %v2783 = vadd.f32 0.0, %v2782
  %v2784 = vpop.f32.mrf.mxu0
  %2785 = vdwg.mxu0
  %v2786 = vadd.f32 %v2729, %v2744
  %v2787 = vadd.f32 %v2730, %v2757
  %v2788 = vadd.f32 %v2731, %v2770
  %v2789 = vadd.f32 %v2732, %v2783
  %v2790 = vld [vmem:[#allocation3 + $0x20] sm:$0xff]
  %v2791 = vld [vmem:[#allocation3 + $0x28] sm:$0xff]
  %v2792 = vld [vmem:[#allocation3 + $0x30] sm:$0xff]
  %v2793 = vld [vmem:[#allocation3 + $0x38] sm:$0xff]
  %v2794 = vpack.c.bf16 %v2726, %v2726
  %2795 = vmatpush.bf16.msra.mxu0 %v1259
  %2796 = vmatpush.bf16.msra.mxu0 %v1255
  %2797 = vmatpush.bf16.msra.mxu0 %v1251
  %2798 = vmatpush.bf16.msra.mxu0 %v1247
  %2799 = vmatpush.bf16.msra.mxu0 %v1243
  %2800 = vmatpush.bf16.msra.mxu0 %v1239
  %2801 = vmatpush.bf16.msra.mxu0 %v1235
  %2802 = vmatpush.bf16.msra.mxu0 %v1231
  %2803 = vmatmul.bf16.gmra.mxu0 %v2794
  %v2804 = vpop.f32.mrf.mxu0
  %v2805 = vadd.f32 0.0, %v2804
  %v2806 = vpop.f32.mrf.mxu0
  %2807 = vdwg.mxu0
  %2808 = vmatpush.bf16.msra.mxu0 %v1260
  %2809 = vmatpush.bf16.msra.mxu0 %v1256
  %2810 = vmatpush.bf16.msra.mxu0 %v1252
  %2811 = vmatpush.bf16.msra.mxu0 %v1248
  %2812 = vmatpush.bf16.msra.mxu0 %v1244
  %2813 = vmatpush.bf16.msra.mxu0 %v1240
  %2814 = vmatpush.bf16.msra.mxu0 %v1236
  %2815 = vmatpush.bf16.msra.mxu0 %v1232
  %2816 = vmatmul.bf16.gmra.mxu0 %v2794
  %v2817 = vpop.f32.mrf.mxu0
  %v2818 = vadd.f32 0.0, %v2817
  %v2819 = vpop.f32.mrf.mxu0
  %2820 = vdwg.mxu0
  %2821 = vmatpush.bf16.msra.mxu0 %v1261
  %2822 = vmatpush.bf16.msra.mxu0 %v1257
  %2823 = vmatpush.bf16.msra.mxu0 %v1253
  %2824 = vmatpush.bf16.msra.mxu0 %v1249
  %2825 = vmatpush.bf16.msra.mxu0 %v1245
  %2826 = vmatpush.bf16.msra.mxu0 %v1241
  %2827 = vmatpush.bf16.msra.mxu0 %v1237
  %2828 = vmatpush.bf16.msra.mxu0 %v1233
  %2829 = vmatmul.bf16.gmra.mxu0 %v2794
  %v2830 = vpop.f32.mrf.mxu0
  %v2831 = vadd.f32 0.0, %v2830
  %v2832 = vpop.f32.mrf.mxu0
  %2833 = vdwg.mxu0
  %2834 = vmatpush.bf16.msra.mxu0 %v1262
  %2835 = vmatpush.bf16.msra.mxu0 %v1258
  %2836 = vmatpush.bf16.msra.mxu0 %v1254
  %2837 = vmatpush.bf16.msra.mxu0 %v1250
  %2838 = vmatpush.bf16.msra.mxu0 %v1246
  %2839 = vmatpush.bf16.msra.mxu0 %v1242
  %2840 = vmatpush.bf16.msra.mxu0 %v1238
  %2841 = vmatpush.bf16.msra.mxu0 %v1234
  %2842 = vmatmul.bf16.gmra.mxu0 %v2794
  %v2843 = vpop.f32.mrf.mxu0
  %v2844 = vadd.f32 0.0, %v2843
  %v2845 = vpop.f32.mrf.mxu0
  %2846 = vdwg.mxu0
  %v2847 = vadd.f32 %v2790, %v2805
  %v2848 = vadd.f32 %v2791, %v2818
  %v2849 = vadd.f32 %v2792, %v2831
  %v2850 = vadd.f32 %v2793, %v2844
  %v2851 = vxor.u32 %v2786, 2147483648
  %v2852 = vmul.f32 %v2851, 1.442695
  %v2853 = vpow.pop %v2852
  %v2854 = vadd.f32 %v2853, 1.0
  %v2855 = vrcp.pop %v2854
  %v2856 = vmul.f32 %v2854, %v2855
  %v2857 = vsub.f32 1.0, %v2856
  %v2858 = vmul.f32 %v2855, %v2857
  %v2859 = vadd.f32 %v2855, %v2858
  %vm2860 = vweird.f32 %v2854
  %vm2861 = vweird.f32 %v2855
  %vm2862 = vmor %vm2860, %vm2861
  %v2863 = vsel %vm2862, %v2855, %v2859
  %v2864 = vand.u32 2147483647, %v2854
  %vm2865 = vcmp.eq.f32.partialorder %v2864, 8.507059e+37
  %v2866 = vand.u32 %v2854, 2147483648
  %v2867 = vor.u32 1.1754944e-38, %v2866
  %v2868 = vsel %vm2865, %v2867, %v2863
  %v2869 = vmul.f32 1.0, %v2868
  %v2870 = vxor.u32 %v2787, 2147483648
  %v2871 = vmul.f32 %v2870, 1.442695
  %v2872 = vpow.pop %v2871
  %v2873 = vadd.f32 %v2872, 1.0
  %v2874 = vrcp.pop %v2873
  %v2875 = vmul.f32 %v2873, %v2874
  %v2876 = vsub.f32 1.0, %v2875
  %v2877 = vmul.f32 %v2874, %v2876
  %v2878 = vadd.f32 %v2874, %v2877
  %vm2879 = vweird.f32 %v2873
  %vm2880 = vweird.f32 %v2874
  %vm2881 = vmor %vm2879, %vm2880
  %v2882 = vsel %vm2881, %v2874, %v2878
  %v2883 = vand.u32 2147483647, %v2873
  %vm2884 = vcmp.eq.f32.partialorder %v2883, 8.507059e+37
  %v2885 = vand.u32 %v2873, 2147483648
  %v2886 = vor.u32 1.1754944e-38, %v2885
  %v2887 = vsel %vm2884, %v2886, %v2882
  %v2888 = vmul.f32 1.0, %v2887
  %v2889 = vtanh.pop %v2788
  %v2890 = vxor.u32 %v2789, 2147483648
  %v2891 = vmul.f32 %v2890, 1.442695
  %v2892 = vpow.pop %v2891
  %v2893 = vadd.f32 %v2892, 1.0
  %v2894 = vrcp.pop %v2893
  %v2895 = vmul.f32 %v2893, %v2894
  %v2896 = vsub.f32 1.0, %v2895
  %v2897 = vmul.f32 %v2894, %v2896
  %v2898 = vadd.f32 %v2894, %v2897
  %vm2899 = vweird.f32 %v2893
  %vm2900 = vweird.f32 %v2894
  %vm2901 = vmor %vm2899, %vm2900
  %v2902 = vsel %vm2901, %v2894, %v2898
  %v2903 = vand.u32 2147483647, %v2893
  %vm2904 = vcmp.eq.f32.partialorder %v2903, 8.507059e+37
  %v2905 = vand.u32 %v2893, 2147483648
  %v2906 = vor.u32 1.1754944e-38, %v2905
  %v2907 = vsel %vm2904, %v2906, %v2902
  %v2908 = vmul.f32 1.0, %v2907
  %v2909 = vmul.f32 %v2888, %v2661
  %v2910 = vmul.f32 %v2869, %v2889
  %v2911 = vadd.f32 %v2909, %v2910
  %v2912 = vtanh.pop %v2911
  %v2913 = vmul.f32 %v2908, %v2912
  %v2914 = vxor.u32 %v2847, 2147483648
  %v2915 = vmul.f32 %v2914, 1.442695
  %v2916 = vpow.pop %v2915
  %v2917 = vadd.f32 %v2916, 1.0
  %v2918 = vrcp.pop %v2917
  %v2919 = vmul.f32 %v2917, %v2918
  %v2920 = vsub.f32 1.0, %v2919
  %v2921 = vmul.f32 %v2918, %v2920
  %v2922 = vadd.f32 %v2918, %v2921
  %vm2923 = vweird.f32 %v2917
  %vm2924 = vweird.f32 %v2918
  %vm2925 = vmor %vm2923, %vm2924
  %v2926 = vsel %vm2925, %v2918, %v2922
  %v2927 = vand.u32 2147483647, %v2917
  %vm2928 = vcmp.eq.f32.partialorder %v2927, 8.507059e+37
  %v2929 = vand.u32 %v2917, 2147483648
  %v2930 = vor.u32 1.1754944e-38, %v2929
  %v2931 = vsel %vm2928, %v2930, %v2926
  %v2932 = vmul.f32 1.0, %v2931
  %v2933 = vxor.u32 %v2848, 2147483648
  %v2934 = vmul.f32 %v2933, 1.442695
  %v2935 = vpow.pop %v2934
  %v2936 = vadd.f32 %v2935, 1.0
  %v2937 = vrcp.pop %v2936
  %v2938 = vmul.f32 %v2936, %v2937
  %v2939 = vsub.f32 1.0, %v2938
  %v2940 = vmul.f32 %v2937, %v2939
  %v2941 = vadd.f32 %v2937, %v2940
  %vm2942 = vweird.f32 %v2936
  %vm2943 = vweird.f32 %v2937
  %vm2944 = vmor %vm2942, %vm2943
  %v2945 = vsel %vm2944, %v2937, %v2941
  %v2946 = vand.u32 2147483647, %v2936
  %vm2947 = vcmp.eq.f32.partialorder %v2946, 8.507059e+37
  %v2948 = vand.u32 %v2936, 2147483648
  %v2949 = vor.u32 1.1754944e-38, %v2948
  %v2950 = vsel %vm2947, %v2949, %v2945
  %v2951 = vmul.f32 1.0, %v2950
  %v2952 = vtanh.pop %v2849
  %v2953 = vxor.u32 %v2850, 2147483648
  %v2954 = vmul.f32 %v2953, 1.442695
  %v2955 = vpow.pop %v2954
  %v2956 = vadd.f32 %v2955, 1.0
  %v2957 = vrcp.pop %v2956
  %v2958 = vmul.f32 %v2956, %v2957
  %v2959 = vsub.f32 1.0, %v2958
  %v2960 = vmul.f32 %v2957, %v2959
  %v2961 = vadd.f32 %v2957, %v2960
  %vm2962 = vweird.f32 %v2956
  %vm2963 = vweird.f32 %v2957
  %vm2964 = vmor %vm2962, %vm2963
  %v2965 = vsel %vm2964, %v2957, %v2961
  %v2966 = vand.u32 2147483647, %v2956
  %vm2967 = vcmp.eq.f32.partialorder %v2966, 8.507059e+37
  %v2968 = vand.u32 %v2956, 2147483648
  %v2969 = vor.u32 1.1754944e-38, %v2968
  %v2970 = vsel %vm2967, %v2969, %v2965
  %v2971 = vmul.f32 1.0, %v2970
  %v2972 = vmul.f32 %v2951, %v2724
  %v2973 = vmul.f32 %v2932, %v2952
  %v2974 = vadd.f32 %v2972, %v2973
  %v2975 = vtanh.pop %v2974
  %v2976 = vmul.f32 %v2971, %v2975
  %2977 = vst [vmem:[%s8 + $0x30] sm:$0xff] %v2913
  %2978 = vst [vmem:[%s66 + $0x8] sm:$0xff] %v2976
  %v2979 = vld [vmem:[#allocation2 + $0xe0] sm:$0xff]
  %v2980 = vld [vmem:[#allocation2 + $0xe8] sm:$0xff]
  %v2981 = vld [vmem:[#allocation2 + $0xf0] sm:$0xff]
  %v2982 = vld [vmem:[#allocation2 + $0xf8] sm:$0xff]
  %v2983 = vpack.c.bf16 %v2913, %v2913
  %2984 = vmatpush.bf16.msra.mxu0 %v1038
  %2985 = vmatpush.bf16.msra.mxu0 %v1034
  %2986 = vmatpush.bf16.msra.mxu0 %v1030
  %2987 = vmatpush.bf16.msra.mxu0 %v1026
  %2988 = vmatpush.bf16.msra.mxu0 %v1022
  %2989 = vmatpush.bf16.msra.mxu0 %v1018
  %2990 = vmatpush.bf16.msra.mxu0 %v1014
  %2991 = vmatpush.bf16.msra.mxu0 %v1010
  %2992 = vmatmul.bf16.gmra.mxu0 %v2983
  %v2993 = vpop.f32.mrf.mxu0
  %v2994 = vadd.f32 0.0, %v2993
  %v2995 = vpop.f32.mrf.mxu0
  %2996 = vdwg.mxu0
  %2997 = vmatpush.bf16.msra.mxu0 %v1039
  %2998 = vmatpush.bf16.msra.mxu0 %v1035
  %2999 = vmatpush.bf16.msra.mxu0 %v1031
  %3000 = vmatpush.bf16.msra.mxu0 %v1027
  %3001 = vmatpush.bf16.msra.mxu0 %v1023
  %3002 = vmatpush.bf16.msra.mxu0 %v1019
  %3003 = vmatpush.bf16.msra.mxu0 %v1015
  %3004 = vmatpush.bf16.msra.mxu0 %v1011
  %3005 = vmatmul.bf16.gmra.mxu0 %v2983
  %v3006 = vpop.f32.mrf.mxu0
  %v3007 = vadd.f32 0.0, %v3006
  %v3008 = vpop.f32.mrf.mxu0
  %3009 = vdwg.mxu0
  %3010 = vmatpush.bf16.msra.mxu0 %v1040
  %3011 = vmatpush.bf16.msra.mxu0 %v1036
  %3012 = vmatpush.bf16.msra.mxu0 %v1032
  %3013 = vmatpush.bf16.msra.mxu0 %v1028
  %3014 = vmatpush.bf16.msra.mxu0 %v1024
  %3015 = vmatpush.bf16.msra.mxu0 %v1020
  %3016 = vmatpush.bf16.msra.mxu0 %v1016
  %3017 = vmatpush.bf16.msra.mxu0 %v1012
  %3018 = vmatmul.bf16.gmra.mxu0 %v2983
  %v3019 = vpop.f32.mrf.mxu0
  %v3020 = vadd.f32 0.0, %v3019
  %v3021 = vpop.f32.mrf.mxu0
  %3022 = vdwg.mxu0
  %3023 = vmatpush.bf16.msra.mxu0 %v1041
  %3024 = vmatpush.bf16.msra.mxu0 %v1037
  %3025 = vmatpush.bf16.msra.mxu0 %v1033
  %3026 = vmatpush.bf16.msra.mxu0 %v1029
  %3027 = vmatpush.bf16.msra.mxu0 %v1025
  %3028 = vmatpush.bf16.msra.mxu0 %v1021
  %3029 = vmatpush.bf16.msra.mxu0 %v1017
  %3030 = vmatpush.bf16.msra.mxu0 %v1013
  %3031 = vmatmul.bf16.gmra.mxu0 %v2983
  %v3032 = vpop.f32.mrf.mxu0
  %v3033 = vadd.f32 0.0, %v3032
  %v3034 = vpop.f32.mrf.mxu0
  %3035 = vdwg.mxu0
  %v3036 = vadd.f32 %v2979, %v2994
  %v3037 = vadd.f32 %v2980, %v3007
  %v3038 = vadd.f32 %v2981, %v3020
  %v3039 = vadd.f32 %v2982, %v3033
  %v3040 = vld [vmem:[#allocation3] sm:$0xff]
  %v3041 = vld [vmem:[#allocation3 + $0x8] sm:$0xff]
  %v3042 = vld [vmem:[#allocation3 + $0x10] sm:$0xff]
  %v3043 = vld [vmem:[#allocation3 + $0x18] sm:$0xff]
  %v3044 = vpack.c.bf16 %v2976, %v2976
  %3045 = vmatpush.bf16.msra.mxu0 %v1259
  %3046 = vmatpush.bf16.msra.mxu0 %v1255
  %3047 = vmatpush.bf16.msra.mxu0 %v1251
  %3048 = vmatpush.bf16.msra.mxu0 %v1247
  %3049 = vmatpush.bf16.msra.mxu0 %v1243
  %3050 = vmatpush.bf16.msra.mxu0 %v1239
  %3051 = vmatpush.bf16.msra.mxu0 %v1235
  %3052 = vmatpush.bf16.msra.mxu0 %v1231
  %3053 = vmatmul.bf16.gmra.mxu0 %v3044
  %v3054 = vpop.f32.mrf.mxu0
  %v3055 = vadd.f32 0.0, %v3054
  %v3056 = vpop.f32.mrf.mxu0
  %3057 = vdwg.mxu0
  %3058 = vmatpush.bf16.msra.mxu0 %v1260
  %3059 = vmatpush.bf16.msra.mxu0 %v1256
  %3060 = vmatpush.bf16.msra.mxu0 %v1252
  %3061 = vmatpush.bf16.msra.mxu0 %v1248
  %3062 = vmatpush.bf16.msra.mxu0 %v1244
  %3063 = vmatpush.bf16.msra.mxu0 %v1240
  %3064 = vmatpush.bf16.msra.mxu0 %v1236
  %3065 = vmatpush.bf16.msra.mxu0 %v1232
  %3066 = vmatmul.bf16.gmra.mxu0 %v3044
  %v3067 = vpop.f32.mrf.mxu0
  %v3068 = vadd.f32 0.0, %v3067
  %v3069 = vpop.f32.mrf.mxu0
  %3070 = vdwg.mxu0
  %3071 = vmatpush.bf16.msra.mxu0 %v1261
  %3072 = vmatpush.bf16.msra.mxu0 %v1257
  %3073 = vmatpush.bf16.msra.mxu0 %v1253
  %3074 = vmatpush.bf16.msra.mxu0 %v1249
  %3075 = vmatpush.bf16.msra.mxu0 %v1245
  %3076 = vmatpush.bf16.msra.mxu0 %v1241
  %3077 = vmatpush.bf16.msra.mxu0 %v1237
  %3078 = vmatpush.bf16.msra.mxu0 %v1233
  %3079 = vmatmul.bf16.gmra.mxu0 %v3044
  %v3080 = vpop.f32.mrf.mxu0
  %v3081 = vadd.f32 0.0, %v3080
  %v3082 = vpop.f32.mrf.mxu0
  %3083 = vdwg.mxu0
  %3084 = vmatpush.bf16.msra.mxu0 %v1262
  %3085 = vmatpush.bf16.msra.mxu0 %v1258
  %3086 = vmatpush.bf16.msra.mxu0 %v1254
  %3087 = vmatpush.bf16.msra.mxu0 %v1250
  %3088 = vmatpush.bf16.msra.mxu0 %v1246
  %3089 = vmatpush.bf16.msra.mxu0 %v1242
  %3090 = vmatpush.bf16.msra.mxu0 %v1238
  %3091 = vmatpush.bf16.msra.mxu0 %v1234
  %3092 = vmatmul.bf16.gmra.mxu0 %v3044
  %v3093 = vpop.f32.mrf.mxu0
  %v3094 = vadd.f32 0.0, %v3093
  %v3095 = vpop.f32.mrf.mxu0
  %3096 = vdwg.mxu0
  %v3097 = vadd.f32 %v3040, %v3055
  %v3098 = vadd.f32 %v3041, %v3068
  %v3099 = vadd.f32 %v3042, %v3081
  %v3100 = vadd.f32 %v3043, %v3094
  %v3101 = vxor.u32 %v3036, 2147483648
  %v3102 = vmul.f32 %v3101, 1.442695
  %v3103 = vpow.pop %v3102
  %v3104 = vadd.f32 %v3103, 1.0
  %v3105 = vrcp.pop %v3104
  %v3106 = vmul.f32 %v3104, %v3105
  %v3107 = vsub.f32 1.0, %v3106
  %v3108 = vmul.f32 %v3105, %v3107
  %v3109 = vadd.f32 %v3105, %v3108
  %vm3110 = vweird.f32 %v3104
  %vm3111 = vweird.f32 %v3105
  %vm3112 = vmor %vm3110, %vm3111
  %v3113 = vsel %vm3112, %v3105, %v3109
  %v3114 = vand.u32 2147483647, %v3104
  %vm3115 = vcmp.eq.f32.partialorder %v3114, 8.507059e+37
  %v3116 = vand.u32 %v3104, 2147483648
  %v3117 = vor.u32 1.1754944e-38, %v3116
  %v3118 = vsel %vm3115, %v3117, %v3113
  %v3119 = vmul.f32 1.0, %v3118
  %v3120 = vxor.u32 %v3037, 2147483648
  %v3121 = vmul.f32 %v3120, 1.442695
  %v3122 = vpow.pop %v3121
  %v3123 = vadd.f32 %v3122, 1.0
  %v3124 = vrcp.pop %v3123
  %v3125 = vmul.f32 %v3123, %v3124
  %v3126 = vsub.f32 1.0, %v3125
  %v3127 = vmul.f32 %v3124, %v3126
  %v3128 = vadd.f32 %v3124, %v3127
  %vm3129 = vweird.f32 %v3123
  %vm3130 = vweird.f32 %v3124
  %vm3131 = vmor %vm3129, %vm3130
  %v3132 = vsel %vm3131, %v3124, %v3128
  %v3133 = vand.u32 2147483647, %v3123
  %vm3134 = vcmp.eq.f32.partialorder %v3133, 8.507059e+37
  %v3135 = vand.u32 %v3123, 2147483648
  %v3136 = vor.u32 1.1754944e-38, %v3135
  %v3137 = vsel %vm3134, %v3136, %v3132
  %v3138 = vmul.f32 1.0, %v3137
  %v3139 = vtanh.pop %v3038
  %v3140 = vxor.u32 %v3039, 2147483648
  %v3141 = vmul.f32 %v3140, 1.442695
  %v3142 = vpow.pop %v3141
  %v3143 = vadd.f32 %v3142, 1.0
  %v3144 = vrcp.pop %v3143
  %v3145 = vmul.f32 %v3143, %v3144
  %v3146 = vsub.f32 1.0, %v3145
  %v3147 = vmul.f32 %v3144, %v3146
  %v3148 = vadd.f32 %v3144, %v3147
  %vm3149 = vweird.f32 %v3143
  %vm3150 = vweird.f32 %v3144
  %vm3151 = vmor %vm3149, %vm3150
  %v3152 = vsel %vm3151, %v3144, %v3148
  %v3153 = vand.u32 2147483647, %v3143
  %vm3154 = vcmp.eq.f32.partialorder %v3153, 8.507059e+37
  %v3155 = vand.u32 %v3143, 2147483648
  %v3156 = vor.u32 1.1754944e-38, %v3155
  %v3157 = vsel %vm3154, %v3156, %v3152
  %v3158 = vmul.f32 1.0, %v3157
  %v3159 = vmul.f32 %v3138, %v2911
  %v3160 = vmul.f32 %v3119, %v3139
  %v3161 = vadd.f32 %v3159, %v3160
  %v3162 = vtanh.pop %v3161
  %v3163 = vmul.f32 %v3158, %v3162
  %v3164 = vxor.u32 %v3097, 2147483648
  %v3165 = vmul.f32 %v3164, 1.442695
  %v3166 = vpow.pop %v3165
  %v3167 = vadd.f32 %v3166, 1.0
  %v3168 = vrcp.pop %v3167
  %v3169 = vmul.f32 %v3167, %v3168
  %v3170 = vsub.f32 1.0, %v3169
  %v3171 = vmul.f32 %v3168, %v3170
  %v3172 = vadd.f32 %v3168, %v3171
  %vm3173 = vweird.f32 %v3167
  %vm3174 = vweird.f32 %v3168
  %vm3175 = vmor %vm3173, %vm3174
  %v3176 = vsel %vm3175, %v3168, %v3172
  %v3177 = vand.u32 2147483647, %v3167
  %vm3178 = vcmp.eq.f32.partialorder %v3177, 8.507059e+37
  %v3179 = vand.u32 %v3167, 2147483648
  %v3180 = vor.u32 1.1754944e-38, %v3179
  %v3181 = vsel %vm3178, %v3180, %v3176
  %v3182 = vmul.f32 1.0, %v3181
  %v3183 = vxor.u32 %v3098, 2147483648
  %v3184 = vmul.f32 %v3183, 1.442695
  %v3185 = vpow.pop %v3184
  %v3186 = vadd.f32 %v3185, 1.0
  %v3187 = vrcp.pop %v3186
  %v3188 = vmul.f32 %v3186, %v3187
  %v3189 = vsub.f32 1.0, %v3188
  %v3190 = vmul.f32 %v3187, %v3189
  %v3191 = vadd.f32 %v3187, %v3190
  %vm3192 = vweird.f32 %v3186
  %vm3193 = vweird.f32 %v3187
  %vm3194 = vmor %vm3192, %vm3193
  %v3195 = vsel %vm3194, %v3187, %v3191
  %v3196 = vand.u32 2147483647, %v3186
  %vm3197 = vcmp.eq.f32.partialorder %v3196, 8.507059e+37
  %v3198 = vand.u32 %v3186, 2147483648
  %v3199 = vor.u32 1.1754944e-38, %v3198
  %v3200 = vsel %vm3197, %v3199, %v3195
  %v3201 = vmul.f32 1.0, %v3200
  %v3202 = vtanh.pop %v3099
  %v3203 = vxor.u32 %v3100, 2147483648
  %v3204 = vmul.f32 %v3203, 1.442695
  %v3205 = vpow.pop %v3204
  %v3206 = vadd.f32 %v3205, 1.0
  %v3207 = vrcp.pop %v3206
  %v3208 = vmul.f32 %v3206, %v3207
  %v3209 = vsub.f32 1.0, %v3208
  %v3210 = vmul.f32 %v3207, %v3209
  %v3211 = vadd.f32 %v3207, %v3210
  %vm3212 = vweird.f32 %v3206
  %vm3213 = vweird.f32 %v3207
  %vm3214 = vmor %vm3212, %vm3213
  %v3215 = vsel %vm3214, %v3207, %v3211
  %v3216 = vand.u32 2147483647, %v3206
  %vm3217 = vcmp.eq.f32.partialorder %v3216, 8.507059e+37
  %v3218 = vand.u32 %v3206, 2147483648
  %v3219 = vor.u32 1.1754944e-38, %v3218
  %v3220 = vsel %vm3217, %v3219, %v3215
  %v3221 = vmul.f32 1.0, %v3220
  %v3222 = vmul.f32 %v3201, %v2974
  %v3223 = vmul.f32 %v3182, %v3202
  %v3224 = vadd.f32 %v3222, %v3223
  %v3225 = vtanh.pop %v3224
  %v3226 = vmul.f32 %v3221, %v3225
  %3227 = vst [vmem:[%s8 + $0x38] sm:$0xff] %v3163
  %3228 = vst [vmem:[%s66] sm:$0xff] %v3226
  %3229 = vst [vmem:[#allocation4] sm:$0xff] %v3163
  %3230 = vst [vmem:[#allocation5] sm:$0xff] %v3161
  %3231 = vst [vmem:[#allocation6] sm:$0xff] %v3226
  %3232 = vst [vmem:[#allocation7] sm:$0xff] %v3224
  // Predicated region
  $region38: #{_encoder_forward_impl.1} parent=0 // pred_check
    %p3233 = pneg %p69
  $region39: #{_encoder_forward_impl.1} parent=0 // pred_check_branch
    %3235 = sbr.rel (%p3233) target = $region41
  $region40: #{_encoder_forward_impl.1} parent=0 // pred_region
    %3236 = vst [vmem:[%s10] sm:$0xff] %v3163
    %3237 = vst [vmem:[%s10 + $0x8] sm:$0xff] %v3226
    %3238 = vst [vmem:[%s11] sm:$0xff] %v3161
    %3239 = vst [vmem:[%s11 + $0x8] sm:$0xff] %v3224
  $region41: #{_encoder_forward_impl.1} parent=0 // pred_fallthru
    _
  %s3240 = ssub.s32 0, 0
  %s3241 = smul.u32 8, %s3240
  %p3242 = scmp.lt.s32.totalorder %s3241, 7
  %s3243 = scalar_select %p3242, %s3241, 7
  %s3244 = smul.addr %s3243, 8
  %s3245 = scalar_lea.vmem %s9, %s3244
  // Predicated region
  $region42: #{_encoder_forward_impl.1} parent=0 // pred_check
    _
  $region43: #{_encoder_forward_impl.1} parent=0 // pred_check_branch
    %3247 = sbr.rel (0) target = $region45
  $region44: #{_encoder_forward_impl.1} parent=0 // pred_region
    _
  $region45: #{_encoder_forward_impl.1} parent=0 // pred_fallthru
    _
  // Predicated region
  $region46: #{_encoder_forward_impl.1} parent=0 // pred_check
    _
  $region47: #{_encoder_forward_impl.1} parent=0 // pred_check_branch
    %3249 = sbr.rel (0) target = $region49
  $region48: #{_encoder_forward_impl.1} parent=0 // pred_region
    %s3250 = ssub.s32 0, 0
    %s3251 = smul.u32 8, %s3250
  $region49: #{_encoder_forward_impl.1} parent=0 // pred_fallthru
    _
  // Predicated region
  $region50: #{_encoder_forward_impl.1} parent=0 // pred_check
    _
  $region51: #{_encoder_forward_impl.1} parent=0 // pred_check_branch
    %3253 = sbr.rel (0) target = $region53
  $region52: #{_encoder_forward_impl.1} parent=0 // pred_region
    _
  $region53: #{_encoder_forward_impl.1} parent=0 // pred_fallthru
    _
  // Predicated region
  $region54: #{_encoder_forward_impl.1} parent=0 // pred_check
    _
  $region55: #{_encoder_forward_impl.1} parent=0 // pred_check_branch
    %3255 = sbr.rel (0) target = $region57
  $region56: #{_encoder_forward_impl.1} parent=0 // pred_region
    _
  $region57: #{_encoder_forward_impl.1} parent=0 // pred_fallthru
    _
  // Predicated region
  $region58: #{_encoder_forward_impl.1} parent=0 // pred_check
    _
  $region59: #{_encoder_forward_impl.1} parent=0 // pred_check_branch
    %3257 = sbr.rel (0) target = $region61
  $region60: #{_encoder_forward_impl.1} parent=0 // pred_region
    _
  $region61: #{_encoder_forward_impl.1} parent=0 // pred_fallthru
    _
  // Predicated region
  $region62: #{_encoder_forward_impl.1} parent=0 // pred_check
    _
  $region63: #{_encoder_forward_impl.1} parent=0 // pred_check_branch
    %3259 = sbr.rel (0) target = $region65
  $region64: #{_encoder_forward_impl.1} parent=0 // pred_region
    %s3260 = ssub.s32 0, 0
    %s3261 = smul.u32 8, %s3260
    %p3262 = scmp.lt.s32.totalorder %s3261, 7
    %s3263 = scalar_select %p3262, %s3261, 7
    %s3264 = smul.addr %s3263, 8
    %s3265 = scalar_lea.vmem %s9, %s3264
  $region65: #{_encoder_forward_impl.1} parent=0 // pred_fallthru
    _
  // Predicated region
  $region66: #{_encoder_forward_impl.1} parent=0 // pred_check
    _
  $region67: #{_encoder_forward_impl.1} parent=0 // pred_check_branch
    %3267 = sbr.rel (0) target = $region69
  $region68: #{_encoder_forward_impl.1} parent=0 // pred_region
    _
  $region69: #{_encoder_forward_impl.1} parent=0 // pred_fallthru
    _
  // Predicated region
  $region70: #{_encoder_forward_impl.1} parent=0 // pred_check
    _
  $region71: #{_encoder_forward_impl.1} parent=0 // pred_check_branch
    %3269 = sbr.rel (0) target = $region73
  $region72: #{_encoder_forward_impl.1} parent=0 // pred_region
    _
  $region73: #{_encoder_forward_impl.1} parent=0 // pred_fallthru
    _

</llo_original>
